<compile_context>
chip_gen: v7x
topology: tpu7x:2x2x1
jax: 0.10.0
libtpu: 0.0.40
codegen_flags: <defaults>
</compile_context>

<pallas_src>
import functools
import math

import jax
import jax.numpy as jnp
from jax.experimental import pallas as pl
from jax.experimental.pallas import tpu as pltpu


VMEM_LIMIT = 32 * 1024 * 1024  # safe on v5e/v6e/v7x


def _round_up(x, m):
    return ((x + m - 1) // m) * m


def _pick_block(dim, target, align):
    """Largest useful block: `target` if dim is big, else dim rounded to align."""
    return target if dim >= target else _round_up(dim, align)


# --------------------------------------------------------------------------
# Pallas kernels
# --------------------------------------------------------------------------
def _matmul_kernel(*refs, activation, has_residual):
    if has_residual:
        a_ref, b_ref, bias_ref, res_ref, o_ref, acc_ref = refs
    else:
        a_ref, b_ref, bias_ref, o_ref, acc_ref = refs
        res_ref = None
    k = pl.program_id(2)

    @pl.when(k == 0)
    def _():
        acc_ref[...] = jnp.zeros_like(acc_ref)

    # bf16 x bf16 -> f32 accumulate on the MXU
    acc_ref[...] += jnp.dot(a_ref[...], b_ref[...],
                            preferred_element_type=jnp.float32)

    @pl.when(k == pl.num_programs(2) - 1)
    def _():
        out = acc_ref[...] + bias_ref[...]          # f32 epilogue
        if activation == "gelu":
            out = jax.nn.gelu(out, approximate=True)
        if has_residual:
            out = out + res_ref[...].astype(jnp.float32)
        o_ref[...] = out.astype(o_ref.dtype)


def _attn_kernel(q_ref, k_ref, v_ref, o_ref, m_sc, l_sc, acc_sc,
                 *, kv_len, blk_k, mask_kv):
    # q/k/v blocks: (H, t, Dh_p) bf16; softmax scale already folded into q.
    ki = pl.program_id(2)

    @pl.when(ki == 0)
    def _():
        m_sc[...] = jnp.full_like(m_sc, -1e30)
        l_sc[...] = jnp.zeros_like(l_sc)
        acc_sc[...] = jnp.zeros_like(acc_sc)

    q = q_ref[...]                                   # (H, t, Dh_p)
    k = k_ref[...]
    v = v_ref[...]

    s = jnp.einsum("hqd,hkd->hqk", q, k,
                   preferred_element_type=jnp.float32)           # (H, t, tk)
    if mask_kv:
        col = ki * blk_k + jax.lax.broadcasted_iota(jnp.int32, s.shape, 2)
        s = jnp.where(col < kv_len, s, -1e30)

    m_prev = m_sc[...]
    m_new = jnp.maximum(m_prev, jnp.max(s, axis=-1, keepdims=True))
    alpha = jnp.exp(m_prev - m_new)
    p = jnp.exp(s - m_new)
    l_sc[...] = alpha * l_sc[...] + jnp.sum(p, axis=-1, keepdims=True)
    acc_sc[...] = alpha * acc_sc[...] + jnp.einsum(
        "hqk,hkd->hqd", p.astype(v.dtype), v,
        preferred_element_type=jnp.float32)
    m_sc[...] = m_new

    @pl.when(ki == pl.num_programs(2) - 1)
    def _():
        o = acc_sc[...] * pl.reciprocal(l_sc[...], approx=True)  # (H, t, Dh_p)
        o_ref[0] = o.astype(o_ref.dtype)


def _ln_kernel(x_ref, g_ref, b_ref, o_ref, *, eps):
    x = x_ref[...].astype(jnp.float32)
    mu = jnp.mean(x, axis=-1, keepdims=True)
    var = jnp.mean((x - mu) ** 2, axis=-1, keepdims=True)
    y = (x - mu) * jax.lax.rsqrt(var + eps)
    o_ref[...] = (y * g_ref[...] + b_ref[...]).astype(o_ref.dtype)


def _quant_kernel(x_ref, cb_ref, q_ref, idx_ref, err_ref):
    x = x_ref[...].astype(jnp.float32)        # (bn, D)
    cb = cb_ref[...].astype(jnp.float32)      # (K, D), resident
    n, _ = x.shape
    kk = cb.shape[0]

    # torch.nn.functional.normalize(dim=-1), eps=1e-12
    xn = x / jnp.maximum(jnp.sqrt(jnp.sum(x * x, -1, keepdims=True)), 1e-12)
    en = cb / jnp.maximum(jnp.sqrt(jnp.sum(cb * cb, -1, keepdims=True)), 1e-12)

    # cdist(xn, en).argmin(-1): unit-norm rows -> argmin(dist) == argmin(-dot),
    # first-index tie-break like torch.
    neg = -jnp.dot(xn, en.T, preferred_element_type=jnp.float32)   # (bn, K)
    mn = jnp.min(neg, axis=-1, keepdims=True)
    iota = jax.lax.broadcasted_iota(jnp.int32, (n, kk), 1)
    cand = jnp.where(neg <= mn, iota, kk)
    idx = jnp.min(cand, axis=-1, keepdims=True)                    # (bn, 1)

    # quantized = codebook[idx] (RAW rows, as in reference) via one-hot matmul
    onehot = (iota == idx).astype(jnp.float32)
    q = jnp.dot(onehot, cb, preferred_element_type=jnp.float32)    # (bn, D)

    diff = q - xn                                                  # raw q vs normed x
    err = jnp.sum(diff * diff, axis=-1, keepdims=True)             # per-row sq error

    q_ref[...] = q.astype(q_ref.dtype)
    idx_ref[...] = idx.astype(jnp.int32)   # torch uses int64; int32 here
    err_ref[...] = err


# --------------------------------------------------------------------------
# Pallas wrappers
# --------------------------------------------------------------------------
def pallas_matmul(a, w, bias, activation=None, residual=None,
                  out_dtype=jnp.bfloat16):
    """(M, K) @ (K, N) + bias, optional fused gelu and fused residual add."""
    M, K = a.shape
    _, N = w.shape

    bm = _pick_block(M, 256, 8)
    bn = _pick_block(N, 256, 128)
    bk = _pick_block(K, 512, 128)
    Mp, Np, Kp = _round_up(M, bm), _round_up(N, bn), _round_up(K, bk)

    a_p = jnp.pad(a.astype(jnp.bfloat16), ((0, Mp - M), (0, Kp - K)))
    w_p = jnp.pad(w.astype(jnp.bfloat16), ((0, Kp - K), (0, Np - N)))
    b_p = jnp.pad(bias.reshape(1, N).astype(jnp.float32), ((0, 0), (0, Np - N)))

    inputs = [a_p, w_p, b_p]
    in_specs = [
        pl.BlockSpec((bm, bk), lambda i, j, k: (i, k)),
        pl.BlockSpec((bk, bn), lambda i, j, k: (k, j)),
        pl.BlockSpec((1, bn), lambda i, j, k: (0, j)),
    ]
    has_res = residual is not None
    if has_res:
        r_p = jnp.pad(residual.astype(jnp.bfloat16), ((0, Mp - M), (0, Np - N)))
        inputs.append(r_p)
        in_specs.append(pl.BlockSpec((bm, bn), lambda i, j, k: (i, j)))

    out = pl.pallas_call(
        functools.partial(_matmul_kernel, activation=activation,
                          has_residual=has_res),
        out_shape=jax.ShapeDtypeStruct((Mp, Np), out_dtype),
        grid_spec=pltpu.PrefetchScalarGridSpec(
            num_scalar_prefetch=0,
            grid=(Mp // bm, Np // bn, Kp // bk),
            in_specs=in_specs,
            out_specs=pl.BlockSpec((bm, bn), lambda i, j, k: (i, j)),
            scratch_shapes=[pltpu.VMEM((bm, bn), jnp.float32)]),
        compiler_params=pltpu.CompilerParams(
            dimension_semantics=("parallel", "parallel", "arbitrary"),
            vmem_limit_bytes=VMEM_LIMIT),
    )(*inputs)
    if Mp != M or Np != N:
        out = out[:M, :N]
    return out


def pallas_attention(qkv, B, T, n_head, Dh):
    """qkv: (B*T, 3*n_head*Dh) packed projection -> (B*T, n_head*Dh)."""
    H = n_head
    scale = 1.0 / math.sqrt(Dh)
    Dh_p = _round_up(Dh, 128)                 # lane-dense head dim
    t = _pick_block(T, 128, 8)                # q / kv tile along tokens
    Tp = _round_up(T, t)

    x = qkv.reshape(B, T, 3, H, Dh)
    # fold the softmax scale into q (fuses with the pad/transpose copy)
    scale_vec = jnp.array([scale, 1.0, 1.0], jnp.float32).reshape(1, 1, 3, 1, 1)
    x = (x.astype(jnp.float32) * scale_vec).astype(jnp.bfloat16)
    x = jnp.pad(x, ((0, 0), (0, Tp - T), (0, 0), (0, 0), (0, Dh_p - Dh)))
    # (B, 3, H, Tp, Dh_p) flattened so q/k/v are H-row blocks of one 3-D array
    x = x.transpose(0, 2, 3, 1, 4).reshape(B * 3 * H, Tp, Dh_p)

    nq = Tp // t
    nk = Tp // t
    out = pl.pallas_call(
        functools.partial(_attn_kernel, kv_len=T, blk_k=t, mask_kv=(Tp > T)),
        out_shape=jax.ShapeDtypeStruct((B, H, Tp, Dh_p), jnp.bfloat16),
        grid=(B, nq, nk),
        in_specs=[
            pl.BlockSpec((H, t, Dh_p), lambda b, qi, ki: (3 * b + 0, qi, 0)),
            pl.BlockSpec((H, t, Dh_p), lambda b, qi, ki: (3 * b + 1, ki, 0)),
            pl.BlockSpec((H, t, Dh_p), lambda b, qi, ki: (3 * b + 2, ki, 0)),
        ],
        out_specs=pl.BlockSpec((1, H, t, Dh_p), lambda b, qi, ki: (b, 0, qi, 0)),
        scratch_shapes=[pltpu.VMEM((H, t, 1), jnp.float32),
                        pltpu.VMEM((H, t, 1), jnp.float32),
                        pltpu.VMEM((H, t, Dh_p), jnp.float32)],
        compiler_params=pltpu.CompilerParams(
            dimension_semantics=("parallel", "parallel", "arbitrary"),
            vmem_limit_bytes=VMEM_LIMIT),
    )(x, x, x)

    # head merge: small bf16 transpose, fuses with the next matmul's pad/cast
    out = out[:, :, :T, :Dh]                          # (B, H, T, Dh)
    return out.transpose(0, 2, 1, 3).reshape(B * T, H * Dh)


def pallas_layernorm(x, gamma, beta, eps=1e-5, out_dtype=jnp.bfloat16):
    Nn, C = x.shape
    bm = _pick_block(Nn, 256, 8)
    Np = _round_up(Nn, bm)
    x_p = jnp.pad(x, ((0, Np - Nn), (0, 0)))
    g = gamma.reshape(1, C).astype(jnp.float32)
    b = beta.reshape(1, C).astype(jnp.float32)
    out = pl.pallas_call(
        functools.partial(_ln_kernel, eps=eps),
        out_shape=jax.ShapeDtypeStruct((Np, C), out_dtype),
        grid=(Np // bm,),
        in_specs=[
            pl.BlockSpec((bm, C), lambda i: (i, 0)),
            pl.BlockSpec((1, C), lambda i: (0, 0)),
            pl.BlockSpec((1, C), lambda i: (0, 0)),
        ],
        out_specs=pl.BlockSpec((bm, C), lambda i: (i, 0)),
        compiler_params=pltpu.CompilerParams(
            dimension_semantics=("parallel",), vmem_limit_bytes=VMEM_LIMIT),
    )(x_p, g, b)
    return out[:Nn] if Np != Nn else out


def pallas_quantize(x, codebook):
    """x: (N, D) f32 latents, codebook: (K, D). Returns (quantized, idx, loss)."""
    N, D = x.shape
    K = codebook.shape[0]
    bn = _pick_block(N, 256, 8)
    Np = _round_up(N, bn)
    x_p = jnp.pad(x.astype(jnp.float32), ((0, Np - N), (0, 0)))

    q, idx, err = pl.pallas_call(
        _quant_kernel,
        out_shape=(
            jax.ShapeDtypeStruct((Np, D), jnp.float32),
            jax.ShapeDtypeStruct((Np, 1), jnp.int32),
            jax.ShapeDtypeStruct((Np, 1), jnp.float32),
        ),
        grid=(Np // bn,),
        in_specs=[
            pl.BlockSpec((bn, D), lambda i: (i, 0)),
            pl.BlockSpec((K, D), lambda i: (0, 0)),     # codebook stays resident
        ],
        out_specs=(
            pl.BlockSpec((bn, D), lambda i: (i, 0)),
            pl.BlockSpec((bn, 1), lambda i: (i, 0)),
            pl.BlockSpec((bn, 1), lambda i: (i, 0)),
        ),
        compiler_params=pltpu.CompilerParams(
            dimension_semantics=("parallel",), vmem_limit_bytes=VMEM_LIMIT),
    )(x_p, codebook.astype(jnp.float32))

    q = q[:N]
    idx = idx[:N, 0]
    err = err[:N, 0]
    # codebook_loss + 0.25 * commitment_loss (forward value) = 1.25 * mse
    loss = 1.25 * jnp.sum(err) / (N * D)
    return q, idx, loss


# --------------------------------------------------------------------------
# Model glue (plain JAX reshapes around the Pallas kernels)
# --------------------------------------------------------------------------
def transformer_block(x, p, n_head):
    B, T, E = x.shape
    Dh = E // n_head
    x2 = x.reshape(B * T, E)

    h = pallas_layernorm(x2, p["ln1_g"], p["ln1_b"])
    qkv = pallas_matmul(h, p["qkv_w"], p["qkv_b"])                  # (B*T, 3E)
    attn = pallas_attention(qkv, B, T, n_head, Dh)                  # (B*T, E)
    x2 = pallas_matmul(attn, p["proj_w"], p["proj_b"], residual=x2)  # fused residual

    h2 = pallas_layernorm(x2, p["ln2_g"], p["ln2_b"])
    m = pallas_matmul(h2, p["fc1_w"], p["fc1_b"], activation="gelu")
    x2 = pallas_matmul(m, p["fc2_w"], p["fc2_b"], residual=x2)       # fused residual
    return x2.reshape(B, T, E)


def vit_tokens(tok_flat, vp, B, T, n_head):
    """tok_flat: (B*T, in_dim) -> (B, T, E) after patch-embed + blocks + final LN."""
    tok = pallas_matmul(tok_flat, vp["patch_w"], vp["patch_b"])     # (B*T, E) bf16
    E = tok.shape[-1]
    tok = (tok.reshape(B, T, E).astype(jnp.float32) + vp["pos_emb"]
           ).astype(jnp.bfloat16)
    for blk in vp["blocks"]:
        tok = transformer_block(tok, blk, n_head)
    tok = pallas_layernorm(tok.reshape(B * T, E), vp["lnf_g"], vp["lnf_b"])
    return tok.reshape(B, T, E)


def image_to_patches(x_nchw, P):
    B, C, H, W = x_nchw.shape
    h, w = H // P, W // P
    return (x_nchw.reshape(B, C, h, P, w, P)
            .transpose(0, 2, 4, 1, 3, 5)
            .reshape(B * h * w, C * P * P))


def vitvqgan_forward(x, params, cfg):
    B = x.shape[0]
    E = cfg["n_embd"]
    P = cfg["patch_size"]
    pd = cfg["patch_dim"]
    n_head = cfg["n_head"]
    T = cfg["n_patches"]

    # ---- encoder -----------------------------------------------------
    patches = image_to_patches(x, P)                                   # (B*T, 3P^2)
    enc_tok = vit_tokens(patches, params["enc_vit"], B, T, n_head)     # (B, T, E)
    latent = pallas_matmul(enc_tok.reshape(B * T, E),
                           params["enc_proj_w"], params["enc_proj_b"],
                           out_dtype=jnp.float32)                      # (B*T, D) f32

    # ---- quantizer ---------------------------------------------------
    quantized, idx, quantize_loss = pallas_quantize(latent, params["codebook"])
    indices = idx.reshape(B, T)

    # ---- decoder -----------------------------------------------------
    # decoder ViT has patch_size=1 over (B, E, T, 1) -> identical to a per-token
    # linear; feed tokens directly to avoid the pointless NCHW round-trip.
    z = pallas_matmul(quantized, params["dec_quant_proj_w"],
                      params["dec_quant_proj_b"])                      # (B*T, E)
    dec_tok = vit_tokens(z, params["dec_vit"], B, T, n_head)           # (B, T, E)

    out = pallas_matmul(dec_tok.reshape(B * T, E),
                        params["embd_proj_w"], params["embd_proj_b"],
                        out_dtype=jnp.float32)                         # 1x1 conv
    # rearrange 'b (p1 p2 c) h w -> b c (h p1) (w p2)'
    out = out.reshape(B, pd, pd, P, P, 3)
    img = out.transpose(0, 5, 1, 3, 2, 4).reshape(B, 3, pd * P, pd * P)
    return img, indices, quantize_loss


# --------------------------------------------------------------------------
# Deterministic parameter init
# --------------------------------------------------------------------------
def init_params(key, cfg):
    E = cfg["n_embd"]
    P = cfg["patch_size"]
    D = cfg["latent_dim"]
    keys = iter(jax.random.split(key, 256))

    def lin(k_in, k_out):
        w = 0.02 * jax.random.normal(next(keys), (k_in, k_out), jnp.float32)
        return w, jnp.zeros((k_out,), jnp.float32)

    def make_vit(in_dim, n_tok):
        pw, pb = lin(in_dim, E)
        blocks = []
        for _ in range(cfg["n_layer"]):
            qkv_w, qkv_b = lin(E, 3 * E)
            proj_w, proj_b = lin(E, E)
            fc1_w, fc1_b = lin(E, 4 * E)
            fc2_w, fc2_b = lin(4 * E, E)
            blocks.append(dict(
                ln1_g=jnp.ones((E,), jnp.float32), ln1_b=jnp.zeros((E,), jnp.float32),
                qkv_w=qkv_w, qkv_b=qkv_b, proj_w=proj_w, proj_b=proj_b,
                ln2_g=jnp.ones((E,), jnp.float32), ln2_b=jnp.zeros((E,), jnp.float32),
                fc1_w=fc1_w, fc1_b=fc1_b, fc2_w=fc2_w, fc2_b=fc2_b))
        return dict(
            patch_w=pw, patch_b=pb,
            pos_emb=0.02 * jax.random.normal(next(keys), (1, n_tok, E), jnp.float32),
            blocks=blocks,
            lnf_g=jnp.ones((E,), jnp.float32), lnf_b=jnp.zeros((E,), jnp.float32))

    enc_vit = make_vit(3 * P * P, cfg["n_patches"])
    dec_vit = make_vit(E, cfg["latent_tokens"])
    enc_proj_w, enc_proj_b = lin(E, D)
    dec_qp_w, dec_qp_b = lin(D, E)
    embd_w, embd_b = lin(E, 3 * P * P)
    codebook = jax.random.uniform(
        next(keys), (cfg["codebook_size"], D), jnp.float32,
        minval=-1.0 / cfg["codebook_size"], maxval=1.0 / cfg["codebook_size"])
    return dict(enc_vit=enc_vit, dec_vit=dec_vit,
                enc_proj_w=enc_proj_w, enc_proj_b=enc_proj_b,
                dec_quant_proj_w=dec_qp_w, dec_quant_proj_b=dec_qp_b,
                embd_proj_w=embd_w, embd_proj_b=embd_b,
                codebook=codebook)


def make_config(image_size, patch_size, codebook_size, latent_dim,
                n_embd, n_head, n_layer):
    patch_dim = image_size // patch_size
    n_patches = patch_dim ** 2
    return dict(image_size=image_size, patch_size=patch_size,
                codebook_size=codebook_size, latent_dim=latent_dim,
                patch_dim=patch_dim, n_patches=n_patches,
                latent_tokens=n_patches,
                n_embd=n_embd, n_head=n_head, n_layer=n_layer)


# --------------------------------------------------------------------------
if __name__ == "__main__":
    cfg = make_config(image_size=16, patch_size=4, codebook_size=64,
                      latent_dim=32, n_embd=64, n_head=4, n_layer=2)

    key = jax.random.PRNGKey(0)
    kp, kx = jax.random.split(key)
    params = init_params(kp, cfg)
    x = jax.random.normal(kx, (2, 3, cfg["image_size"], cfg["image_size"]),
                          jnp.float32)

    fwd = jax.jit(functools.partial(vitvqgan_forward, cfg=cfg))
    img, indices, qloss = fwd(x, params)
    jax.block_until_ready((img, indices, qloss))

    assert img.shape == (2, 3, 16, 16), img.shape
    assert indices.shape == (2, cfg["n_patches"]), indices.shape
    assert qloss.shape == (), qloss.shape
    assert bool(jnp.all(jnp.isfinite(img)))
    print("KERNEL_OK")
</pallas_src>

<mosaic_0001>
module attributes {stable_mosaic.version = 11 : i64} {
  func.func @_matmul_kernel(%arg0: i32, %arg1: i32, %arg2: i32, %arg3: memref<32x128xbf16, #tpu.memory_space<vmem>>, %arg4: memref<128x128xbf16, #tpu.memory_space<vmem>>, %arg5: memref<1x128xf32, #tpu.memory_space<vmem>>, %arg6: memref<32x128xbf16, #tpu.memory_space<vmem>>, %arg7: memref<32x128xf32, #tpu.memory_space<vmem>>) attributes {dimension_semantics = [#tpu.dimension_semantics<parallel>, #tpu.dimension_semantics<parallel>, #tpu.dimension_semantics<arbitrary>], iteration_bounds = array<i64: 1, 1, 1>, scalar_prefetch = 0 : i64, scratch_operands = 1 : i64, tpu.core_type = #tpu.core_type<tc>, window_params = [{transform_indices = @transform_0, window_bounds = array<i64: 32, 128>}, {transform_indices = @transform_1, window_bounds = array<i64: 128, 128>}, {transform_indices = @transform_2, window_bounds = array<i64: 1, 128>}, {transform_indices = @transform_3, window_bounds = array<i64: 32, 128>}]} {
    %c0_i32 = arith.constant 0 : i32
    %0 = arith.cmpi eq, %arg2, %c0_i32 : i32
    %1 = arith.extui %0 : i1 to i32
    %c0_i32_0 = arith.constant 0 : i32
    %2 = arith.cmpi ne, %1, %c0_i32_0 : i32
    scf.if %2 {
      %cst_10 = arith.constant 0.000000e+00 : f32
      %12 = vector.broadcast %cst_10 : f32 to vector<32x128xf32>
      %c0_11 = arith.constant 0 : index
      %c0_12 = arith.constant 0 : index
      %13 = vector.load %arg7[%c0_11, %c0_12] : memref<32x128xf32, #tpu.memory_space<vmem>>, vector<32x128xf32>
      tpu.vector_store %arg7[%c0_11, %c0_12], %12 {strides = array<i32>} : memref<32x128xf32, #tpu.memory_space<vmem>>, vector<32x128xf32>,
    } else {
    }
    %c0 = arith.constant 0 : index
    %c0_1 = arith.constant 0 : index
    %3 = vector.load %arg7[%c0, %c0_1] : memref<32x128xf32, #tpu.memory_space<vmem>>, vector<32x128xf32>
    %c0_2 = arith.constant 0 : index
    %c0_3 = arith.constant 0 : index
    %4 = vector.load %arg3[%c0_2, %c0_3] : memref<32x128xbf16, #tpu.memory_space<vmem>>, vector<32x128xbf16>
    %c0_4 = arith.constant 0 : index
    %c0_5 = arith.constant 0 : index
    %5 = vector.load %arg4[%c0_4, %c0_5] : memref<128x128xbf16, #tpu.memory_space<vmem>>, vector<128x128xbf16>
    %cst = arith.constant dense<0.000000e+00> : vector<32x128xf32>
    %6 = tpu.matmul %4, %5, %cst {dimension_numbers = #tpu.dot_dimension_numbers<[1], [0], [0], [1], [0, 0, 1, 1], [], []>} : vector<32x128xbf16>, vector<128x128xbf16>, vector<32x128xf32> -> vector<32x128xf32>
    %7 = arith.addf %3, %6 : vector<32x128xf32>
    %c0_6 = arith.constant 0 : index
    %c0_7 = arith.constant 0 : index
    %8 = vector.load %arg7[%c0_6, %c0_7] : memref<32x128xf32, #tpu.memory_space<vmem>>, vector<32x128xf32>
    tpu.vector_store %arg7[%c0_6, %c0_7], %7 {strides = array<i32>} : memref<32x128xf32, #tpu.memory_space<vmem>>, vector<32x128xf32>,
    %c0_i32_8 = arith.constant 0 : i32
    %9 = arith.cmpi eq, %arg2, %c0_i32_8 : i32
    %10 = arith.extui %9 : i1 to i32
    %c0_i32_9 = arith.constant 0 : i32
    %11 = arith.cmpi ne, %10, %c0_i32_9 : i32
    scf.if %11 {
      %c0_10 = arith.constant 0 : index
      %c0_11 = arith.constant 0 : index
      %12 = vector.load %arg7[%c0_10, %c0_11] : memref<32x128xf32, #tpu.memory_space<vmem>>, vector<32x128xf32>
      %c0_12 = arith.constant 0 : index
      %c0_13 = arith.constant 0 : index
      %13 = vector.load %arg5[%c0_12, %c0_13] : memref<1x128xf32, #tpu.memory_space<vmem>>, vector<1x128xf32>
      %14 = vector.broadcast %13 : vector<1x128xf32> to vector<32x128xf32>
      %15 = arith.addf %12, %14 : vector<32x128xf32>
      %16 = arith.truncf %15 : vector<32x128xf32> to vector<32x128xbf16>
      %c0_14 = arith.constant 0 : index
      %c0_15 = arith.constant 0 : index
      %17 = vector.load %arg6[%c0_14, %c0_15] : memref<32x128xbf16, #tpu.memory_space<vmem>>, vector<32x128xbf16>
      tpu.vector_store %arg6[%c0_14, %c0_15], %16 {strides = array<i32>} : memref<32x128xbf16, #tpu.memory_space<vmem>>, vector<32x128xbf16>,
    } else {
    }
    return
  }
  func.func @transform_0(%arg0: i32, %arg1: i32, %arg2: i32) -> (i32, i32) {
    %c0_i32 = arith.constant 0 : i32
    return %arg0, %arg2 : i32, i32
  }
  func.func @transform_1(%arg0: i32, %arg1: i32, %arg2: i32) -> (i32, i32) {
    %c0_i32 = arith.constant 0 : i32
    return %arg2, %arg1 : i32, i32
  }
  func.func @transform_2(%arg0: i32, %arg1: i32, %arg2: i32) -> (i32, i32) {
    %c0_i32 = arith.constant 0 : i32
    %c0_i32_0 = arith.constant 0 : i32
    return %c0_i32, %arg1 : i32, i32
  }
  func.func @transform_3(%arg0: i32, %arg1: i32, %arg2: i32) -> (i32, i32) {
    %c0_i32 = arith.constant 0 : i32
    return %arg0, %arg1 : i32, i32
  }
}

module attributes {stable_mosaic.version = 11 : i64} {
  func.func @_ln_kernel(%arg0: i32, %arg1: memref<32x64xbf16, #tpu.memory_space<vmem>>, %arg2: memref<1x64xf32, #tpu.memory_space<vmem>>, %arg3: memref<1x64xf32, #tpu.memory_space<vmem>>, %arg4: memref<32x64xbf16, #tpu.memory_space<vmem>>) attributes {dimension_semantics = [#tpu.dimension_semantics<parallel>], iteration_bounds = array<i64: 1>, scalar_prefetch = 0 : i64, scratch_operands = 0 : i64, tpu.core_type = #tpu.core_type<tc>, window_params = [{transform_indices = @transform_0, window_bounds = array<i64: 32, 64>}, {pipeline_mode = #tpu.pipeline_mode<synchronous>, transform_indices = @transform_1, window_bounds = array<i64: 1, 64>}, {pipeline_mode = #tpu.pipeline_mode<synchronous>, transform_indices = @transform_2, window_bounds = array<i64: 1, 64>}, {transform_indices = @transform_3, window_bounds = array<i64: 32, 64>}]} {
    %c0 = arith.constant 0 : index
    %c0_0 = arith.constant 0 : index
    %0 = vector.load %arg1[%c0, %c0_0] : memref<32x64xbf16, #tpu.memory_space<vmem>>, vector<32x64xbf16>
    %1 = arith.extf %0 : vector<32x64xbf16> to vector<32x64xf32>
    %cst = arith.constant dense<0.000000e+00> : vector<32xf32>
    %2 = vector.multi_reduction <add>, %1, %cst [1] : vector<32x64xf32> to vector<32xf32>
    %3 = vector.shape_cast %2 : vector<32xf32> to vector<32x1xf32>
    %cst_1 = arith.constant 6.400000e+01 : f32
    %4 = vector.broadcast %cst_1 : f32 to vector<32x1xf32>
    %5 = arith.divf %3, %4 : vector<32x1xf32>
    %6 = vector.broadcast %5 : vector<32x1xf32> to vector<32x64xf32>
    %7 = arith.subf %1, %6 : vector<32x64xf32>
    %8 = arith.mulf %7, %7 : vector<32x64xf32>
    %cst_2 = arith.constant dense<0.000000e+00> : vector<32xf32>
    %9 = vector.multi_reduction <add>, %8, %cst_2 [1] : vector<32x64xf32> to vector<32xf32>
    %10 = vector.shape_cast %9 : vector<32xf32> to vector<32x1xf32>
    %cst_3 = arith.constant 6.400000e+01 : f32
    %11 = vector.broadcast %cst_3 : f32 to vector<32x1xf32>
    %12 = arith.divf %10, %11 : vector<32x1xf32>
    %13 = vector.broadcast %5 : vector<32x1xf32> to vector<32x64xf32>
    %14 = arith.subf %1, %13 : vector<32x64xf32>
    %cst_4 = arith.constant 9.99999974E-6 : f32
    %15 = vector.broadcast %cst_4 : f32 to vector<32x1xf32>
    %16 = arith.addf %12, %15 : vector<32x1xf32>
    %17 = math.rsqrt %16 : vector<32x1xf32>
    %18 = vector.broadcast %17 : vector<32x1xf32> to vector<32x64xf32>
    %19 = arith.mulf %14, %18 : vector<32x64xf32>
    %c0_5 = arith.constant 0 : index
    %c0_6 = arith.constant 0 : index
    %20 = vector.load %arg2[%c0_5, %c0_6] : memref<1x64xf32, #tpu.memory_space<vmem>>, vector<1x64xf32>
    %21 = vector.broadcast %20 : vector<1x64xf32> to vector<32x64xf32>
    %22 = arith.mulf %19, %21 : vector<32x64xf32>
    %c0_7 = arith.constant 0 : index
    %c0_8 = arith.constant 0 : index
    %23 = vector.load %arg3[%c0_7, %c0_8] : memref<1x64xf32, #tpu.memory_space<vmem>>, vector<1x64xf32>
    %24 = vector.broadcast %23 : vector<1x64xf32> to vector<32x64xf32>
    %25 = arith.addf %22, %24 : vector<32x64xf32>
    %26 = arith.truncf %25 : vector<32x64xf32> to vector<32x64xbf16>
    %c0_9 = arith.constant 0 : index
    %c0_10 = arith.constant 0 : index
    %27 = vector.load %arg4[%c0_9, %c0_10] : memref<32x64xbf16, #tpu.memory_space<vmem>>, vector<32x64xbf16>
    tpu.vector_store %arg4[%c0_9, %c0_10], %26 {strides = array<i32>} : memref<32x64xbf16, #tpu.memory_space<vmem>>, vector<32x64xbf16>,
    return
  }
  func.func @transform_0(%arg0: i32) -> (i32, i32) {
    %c0_i32 = arith.constant 0 : i32
    %c0_i32_0 = arith.constant 0 : i32
    return %arg0, %c0_i32 : i32, i32
  }
  func.func @transform_1(%arg0: i32) -> (i32, i32) {
    %c0_i32 = arith.constant 0 : i32
    %c0_i32_0 = arith.constant 0 : i32
    %c0_i32_1 = arith.constant 0 : i32
    return %c0_i32, %c0_i32_0 : i32, i32
  }
  func.func @transform_2(%arg0: i32) -> (i32, i32) {
    %c0_i32 = arith.constant 0 : i32
    %c0_i32_0 = arith.constant 0 : i32
    %c0_i32_1 = arith.constant 0 : i32
    return %c0_i32, %c0_i32_0 : i32, i32
  }
  func.func @transform_3(%arg0: i32) -> (i32, i32) {
    %c0_i32 = arith.constant 0 : i32
    %c0_i32_0 = arith.constant 0 : i32
    return %arg0, %c0_i32 : i32, i32
  }
}

module attributes {stable_mosaic.version = 11 : i64} {
  func.func @_matmul_kernel(%arg0: i32, %arg1: i32, %arg2: i32, %arg3: memref<32x128xbf16, #tpu.memory_space<vmem>>, %arg4: memref<128x256xbf16, #tpu.memory_space<vmem>>, %arg5: memref<1x256xf32, #tpu.memory_space<vmem>>, %arg6: memref<32x256xbf16, #tpu.memory_space<vmem>>, %arg7: memref<32x256xf32, #tpu.memory_space<vmem>>) attributes {dimension_semantics = [#tpu.dimension_semantics<parallel>, #tpu.dimension_semantics<parallel>, #tpu.dimension_semantics<arbitrary>], iteration_bounds = array<i64: 1, 1, 1>, scalar_prefetch = 0 : i64, scratch_operands = 1 : i64, tpu.core_type = #tpu.core_type<tc>, window_params = [{transform_indices = @transform_0, window_bounds = array<i64: 32, 128>}, {transform_indices = @transform_1, window_bounds = array<i64: 128, 256>}, {transform_indices = @transform_2, window_bounds = array<i64: 1, 256>}, {transform_indices = @transform_3, window_bounds = array<i64: 32, 256>}]} {
    %c0_i32 = arith.constant 0 : i32
    %0 = arith.cmpi eq, %arg2, %c0_i32 : i32
    %1 = arith.extui %0 : i1 to i32
    %c0_i32_0 = arith.constant 0 : i32
    %2 = arith.cmpi ne, %1, %c0_i32_0 : i32
    scf.if %2 {
      %cst_10 = arith.constant 0.000000e+00 : f32
      %12 = vector.broadcast %cst_10 : f32 to vector<32x256xf32>
      %c0_11 = arith.constant 0 : index
      %c0_12 = arith.constant 0 : index
      %13 = vector.load %arg7[%c0_11, %c0_12] : memref<32x256xf32, #tpu.memory_space<vmem>>, vector<32x256xf32>
      tpu.vector_store %arg7[%c0_11, %c0_12], %12 {strides = array<i32>} : memref<32x256xf32, #tpu.memory_space<vmem>>, vector<32x256xf32>,
    } else {
    }
    %c0 = arith.constant 0 : index
    %c0_1 = arith.constant 0 : index
    %3 = vector.load %arg7[%c0, %c0_1] : memref<32x256xf32, #tpu.memory_space<vmem>>, vector<32x256xf32>
    %c0_2 = arith.constant 0 : index
    %c0_3 = arith.constant 0 : index
    %4 = vector.load %arg3[%c0_2, %c0_3] : memref<32x128xbf16, #tpu.memory_space<vmem>>, vector<32x128xbf16>
    %c0_4 = arith.constant 0 : index
    %c0_5 = arith.constant 0 : index
    %5 = vector.load %arg4[%c0_4, %c0_5] : memref<128x256xbf16, #tpu.memory_space<vmem>>, vector<128x256xbf16>
    %cst = arith.constant dense<0.000000e+00> : vector<32x256xf32>
    %6 = tpu.matmul %4, %5, %cst {dimension_numbers = #tpu.dot_dimension_numbers<[1], [0], [0], [1], [0, 0, 1, 1], [], []>} : vector<32x128xbf16>, vector<128x256xbf16>, vector<32x256xf32> -> vector<32x256xf32>
    %7 = arith.addf %3, %6 : vector<32x256xf32>
    %c0_6 = arith.constant 0 : index
    %c0_7 = arith.constant 0 : index
    %8 = vector.load %arg7[%c0_6, %c0_7] : memref<32x256xf32, #tpu.memory_space<vmem>>, vector<32x256xf32>
    tpu.vector_store %arg7[%c0_6, %c0_7], %7 {strides = array<i32>} : memref<32x256xf32, #tpu.memory_space<vmem>>, vector<32x256xf32>,
    %c0_i32_8 = arith.constant 0 : i32
    %9 = arith.cmpi eq, %arg2, %c0_i32_8 : i32
    %10 = arith.extui %9 : i1 to i32
    %c0_i32_9 = arith.constant 0 : i32
    %11 = arith.cmpi ne, %10, %c0_i32_9 : i32
    scf.if %11 {
      %c0_10 = arith.constant 0 : index
      %c0_11 = arith.constant 0 : index
      %12 = vector.load %arg7[%c0_10, %c0_11] : memref<32x256xf32, #tpu.memory_space<vmem>>, vector<32x256xf32>
      %c0_12 = arith.constant 0 : index
      %c0_13 = arith.constant 0 : index
      %13 = vector.load %arg5[%c0_12, %c0_13] : memref<1x256xf32, #tpu.memory_space<vmem>>, vector<1x256xf32>
      %14 = vector.broadcast %13 : vector<1x256xf32> to vector<32x256xf32>
      %15 = arith.addf %12, %14 : vector<32x256xf32>
      %16 = arith.truncf %15 : vector<32x256xf32> to vector<32x256xbf16>
      %c0_14 = arith.constant 0 : index
      %c0_15 = arith.constant 0 : index
      %17 = vector.load %arg6[%c0_14, %c0_15] : memref<32x256xbf16, #tpu.memory_space<vmem>>, vector<32x256xbf16>
      tpu.vector_store %arg6[%c0_14, %c0_15], %16 {strides = array<i32>} : memref<32x256xbf16, #tpu.memory_space<vmem>>, vector<32x256xbf16>,
    } else {
    }
    return
  }
  func.func @transform_0(%arg0: i32, %arg1: i32, %arg2: i32) -> (i32, i32) {
    %c0_i32 = arith.constant 0 : i32
    return %arg0, %arg2 : i32, i32
  }
  func.func @transform_1(%arg0: i32, %arg1: i32, %arg2: i32) -> (i32, i32) {
    %c0_i32 = arith.constant 0 : i32
    return %arg2, %arg1 : i32, i32
  }
  func.func @transform_2(%arg0: i32, %arg1: i32, %arg2: i32) -> (i32, i32) {
    %c0_i32 = arith.constant 0 : i32
    %c0_i32_0 = arith.constant 0 : i32
    return %c0_i32, %arg1 : i32, i32
  }
  func.func @transform_3(%arg0: i32, %arg1: i32, %arg2: i32) -> (i32, i32) {
    %c0_i32 = arith.constant 0 : i32
    return %arg0, %arg1 : i32, i32
  }
}

module attributes {stable_mosaic.version = 11 : i64} {
  func.func @_attn_kernel(%arg0: i32, %arg1: i32, %arg2: i32, %arg3: memref<4x16x128xbf16, #tpu.memory_space<vmem>>, %arg4: memref<4x16x128xbf16, #tpu.memory_space<vmem>>, %arg5: memref<4x16x128xbf16, #tpu.memory_space<vmem>>, %arg6: memref<1x4x16x128xbf16, #tpu.memory_space<vmem>>, %arg7: memref<4x16x1xf32, #tpu.memory_space<vmem>>, %arg8: memref<4x16x1xf32, #tpu.memory_space<vmem>>, %arg9: memref<4x16x128xf32, #tpu.memory_space<vmem>>) attributes {dimension_semantics = [#tpu.dimension_semantics<parallel>, #tpu.dimension_semantics<parallel>, #tpu.dimension_semantics<arbitrary>], iteration_bounds = array<i64: 2, 1, 1>, scalar_prefetch = 0 : i64, scratch_operands = 3 : i64, tpu.core_type = #tpu.core_type<tc>, window_params = [{transform_indices = @transform_0, window_bounds = array<i64: 4, 16, 128>}, {transform_indices = @transform_1, window_bounds = array<i64: 4, 16, 128>}, {transform_indices = @transform_2, window_bounds = array<i64: 4, 16, 128>}, {transform_indices = @transform_3, window_bounds = array<i64: 1, 4, 16, 128>}]} {
    %c0_i32 = arith.constant 0 : i32
    %0 = arith.cmpi eq, %arg2, %c0_i32 : i32
    %1 = arith.extui %0 : i1 to i32
    %c0_i32_0 = arith.constant 0 : i32
    %2 = arith.cmpi ne, %1, %c0_i32_0 : i32
    scf.if %2 {
      %cst_32 = arith.constant -1.000000e+30 : f32
      %33 = vector.broadcast %cst_32 : f32 to vector<4x16x1xf32>
      %c0_33 = arith.constant 0 : index
      %c0_34 = arith.constant 0 : index
      %c0_35 = arith.constant 0 : index
      %34 = vector.load %arg7[%c0_33, %c0_34, %c0_35] : memref<4x16x1xf32, #tpu.memory_space<vmem>>, vector<4x16x1xf32>
      tpu.vector_store %arg7[%c0_33, %c0_34, %c0_35], %33 {strides = array<i32>} : memref<4x16x1xf32, #tpu.memory_space<vmem>>, vector<4x16x1xf32>,
      %cst_36 = arith.constant 0.000000e+00 : f32
      %35 = vector.broadcast %cst_36 : f32 to vector<4x16x1xf32>
      %c0_37 = arith.constant 0 : index
      %c0_38 = arith.constant 0 : index
      %c0_39 = arith.constant 0 : index
      %36 = vector.load %arg8[%c0_37, %c0_38, %c0_39] : memref<4x16x1xf32, #tpu.memory_space<vmem>>, vector<4x16x1xf32>
      tpu.vector_store %arg8[%c0_37, %c0_38, %c0_39], %35 {strides = array<i32>} : memref<4x16x1xf32, #tpu.memory_space<vmem>>, vector<4x16x1xf32>,
      %cst_40 = arith.constant 0.000000e+00 : f32
      %37 = vector.broadcast %cst_40 : f32 to vector<4x16x128xf32>
      %c0_41 = arith.constant 0 : index
      %c0_42 = arith.constant 0 : index
      %c0_43 = arith.constant 0 : index
      %38 = vector.load %arg9[%c0_41, %c0_42, %c0_43] : memref<4x16x128xf32, #tpu.memory_space<vmem>>, vector<4x16x128xf32>
      tpu.vector_store %arg9[%c0_41, %c0_42, %c0_43], %37 {strides = array<i32>} : memref<4x16x128xf32, #tpu.memory_space<vmem>>, vector<4x16x128xf32>,
    } else {
    }
    %c0 = arith.constant 0 : index
    %c0_1 = arith.constant 0 : index
    %c0_2 = arith.constant 0 : index
    %3 = vector.load %arg3[%c0, %c0_1, %c0_2] : memref<4x16x128xbf16, #tpu.memory_space<vmem>>, vector<4x16x128xbf16>
    %c0_3 = arith.constant 0 : index
    %c0_4 = arith.constant 0 : index
    %c0_5 = arith.constant 0 : index
    %4 = vector.load %arg4[%c0_3, %c0_4, %c0_5] : memref<4x16x128xbf16, #tpu.memory_space<vmem>>, vector<4x16x128xbf16>
    %c0_6 = arith.constant 0 : index
    %c0_7 = arith.constant 0 : index
    %c0_8 = arith.constant 0 : index
    %5 = vector.load %arg5[%c0_6, %c0_7, %c0_8] : memref<4x16x128xbf16, #tpu.memory_space<vmem>>, vector<4x16x128xbf16>
    "tpu.trace_start"() <{level = 10 : i32, message = "hqd,hkd->hqk"}> : () -> ()
    %cst = arith.constant dense<0.000000e+00> : vector<4x16x16xf32>
    %6 = tpu.matmul %3, %4, %cst {dimension_numbers = #tpu.dot_dimension_numbers<[2], [2], [1], [1], [0, 0, 0, 1, 1, 1], [0], [0]>} : vector<4x16x128xbf16>, vector<4x16x128xbf16>, vector<4x16x16xf32> -> vector<4x16x16xf32>
    "tpu.trace_stop"() : () -> ()
    %c0_9 = arith.constant 0 : index
    %c0_10 = arith.constant 0 : index
    %c0_11 = arith.constant 0 : index
    %7 = vector.load %arg7[%c0_9, %c0_10, %c0_11] : memref<4x16x1xf32, #tpu.memory_space<vmem>>, vector<4x16x1xf32>
    %cst_12 = arith.constant dense<0xFF800000> : vector<4x16xf32>
    %8 = vector.multi_reduction <maximumf>, %6, %cst_12 [2] : vector<4x16x16xf32> to vector<4x16xf32>
    %9 = vector.shape_cast %8 : vector<4x16xf32> to vector<4x16x1xf32>
    %10 = arith.maximumf %7, %9 : vector<4x16x1xf32>
    %11 = arith.subf %7, %10 : vector<4x16x1xf32>
    %12 = math.exp %11 : vector<4x16x1xf32>
    %13 = vector.broadcast %10 : vector<4x16x1xf32> to vector<4x16x16xf32>
    %14 = arith.subf %6, %13 : vector<4x16x16xf32>
    %15 = math.exp %14 : vector<4x16x16xf32>
    %c0_13 = arith.constant 0 : index
    %c0_14 = arith.constant 0 : index
    %c0_15 = arith.constant 0 : index
    %16 = vector.load %arg8[%c0_13, %c0_14, %c0_15] : memref<4x16x1xf32, #tpu.memory_space<vmem>>, vector<4x16x1xf32>
    %17 = arith.mulf %12, %16 : vector<4x16x1xf32>
    %cst_16 = arith.constant dense<0.000000e+00> : vector<4x16xf32>
    %18 = vector.multi_reduction <add>, %15, %cst_16 [2] : vector<4x16x16xf32> to vector<4x16xf32>
    %19 = vector.shape_cast %18 : vector<4x16xf32> to vector<4x16x1xf32>
    %20 = arith.addf %17, %19 : vector<4x16x1xf32>
    %c0_17 = arith.constant 0 : index
    %c0_18 = arith.constant 0 : index
    %c0_19 = arith.constant 0 : index
    %21 = vector.load %arg8[%c0_17, %c0_18, %c0_19] : memref<4x16x1xf32, #tpu.memory_space<vmem>>, vector<4x16x1xf32>
    tpu.vector_store %arg8[%c0_17, %c0_18, %c0_19], %20 {strides = array<i32>} : memref<4x16x1xf32, #tpu.memory_space<vmem>>, vector<4x16x1xf32>,
    %c0_20 = arith.constant 0 : index
    %c0_21 = arith.constant 0 : index
    %c0_22 = arith.constant 0 : index
    %22 = vector.load %arg9[%c0_20, %c0_21, %c0_22] : memref<4x16x128xf32, #tpu.memory_space<vmem>>, vector<4x16x128xf32>
    %23 = vector.broadcast %12 : vector<4x16x1xf32> to vector<4x16x128xf32>
    %24 = arith.mulf %23, %22 : vector<4x16x128xf32>
    %25 = arith.truncf %15 : vector<4x16x16xf32> to vector<4x16x16xbf16>
    "tpu.trace_start"() <{level = 10 : i32, message = "hqk,hkd->hqd"}> : () -> ()
    %cst_23 = arith.constant dense<0.000000e+00> : vector<4x16x128xf32>
    %26 = tpu.matmul %25, %5, %cst_23 {dimension_numbers = #tpu.dot_dimension_numbers<[2], [1], [1], [2], [0, 0, 0, 1, 1, 2], [0], [0]>} : vector<4x16x16xbf16>, vector<4x16x128xbf16>, vector<4x16x128xf32> -> vector<4x16x128xf32>
    "tpu.trace_stop"() : () -> ()
    %27 = arith.addf %24, %26 : vector<4x16x128xf32>
    %c0_24 = arith.constant 0 : index
    %c0_25 = arith.constant 0 : index
    %c0_26 = arith.constant 0 : index
    %28 = vector.load %arg9[%c0_24, %c0_25, %c0_26] : memref<4x16x128xf32, #tpu.memory_space<vmem>>, vector<4x16x128xf32>
    tpu.vector_store %arg9[%c0_24, %c0_25, %c0_26], %27 {strides = array<i32>} : memref<4x16x128xf32, #tpu.memory_space<vmem>>, vector<4x16x128xf32>,
    %c0_27 = arith.constant 0 : index
    %c0_28 = arith.constant 0 : index
    %c0_29 = arith.constant 0 : index
    %29 = vector.load %arg7[%c0_27, %c0_28, %c0_29] : memref<4x16x1xf32, #tpu.memory_space<vmem>>, vector<4x16x1xf32>
    tpu.vector_store %arg7[%c0_27, %c0_28, %c0_29], %10 {strides = array<i32>} : memref<4x16x1xf32, #tpu.memory_space<vmem>>, vector<4x16x1xf32>,
    %c0_i32_30 = arith.constant 0 : i32
    %30 = arith.cmpi eq, %arg2, %c0_i32_30 : i32
    %31 = arith.extui %30 : i1 to i32
    %c0_i32_31 = arith.constant 0 : i32
    %32 = arith.cmpi ne, %31, %c0_i32_31 : i32
    scf.if %32 {
      %c0_32 = arith.constant 0 : index
      %c0_33 = arith.constant 0 : index
      %c0_34 = arith.constant 0 : index
      %33 = vector.load %arg9[%c0_32, %c0_33, %c0_34] : memref<4x16x128xf32, #tpu.memory_space<vmem>>, vector<4x16x128xf32>
      %c0_35 = arith.constant 0 : index
      %c0_36 = arith.constant 0 : index
      %c0_37 = arith.constant 0 : index
      %34 = vector.load %arg8[%c0_35, %c0_36, %c0_37] : memref<4x16x1xf32, #tpu.memory_space<vmem>>, vector<4x16x1xf32>
      %35 = tpu.reciprocal %34 {approx = true} : vector<4x16x1xf32> -> vector<4x16x1xf32>
      %36 = vector.broadcast %35 : vector<4x16x1xf32> to vector<4x16x128xf32>
      %37 = arith.mulf %33, %36 : vector<4x16x128xf32>
      %38 = arith.truncf %37 : vector<4x16x128xf32> to vector<4x16x128xbf16>
      %c0_38 = arith.constant 0 : index
      %c0_39 = arith.constant 0 : index
      %c0_40 = arith.constant 0 : index
      %c0_41 = arith.constant 0 : index
      %39 = vector.load %arg6[%c0_38, %c0_39, %c0_40, %c0_41] : memref<1x4x16x128xbf16, #tpu.memory_space<vmem>>, vector<1x4x16x128xbf16>
      %40 = vector.shape_cast %39 : vector<1x4x16x128xbf16> to vector<4x16x128xbf16>
      %41 = vector.shape_cast %38 : vector<4x16x128xbf16> to vector<1x4x16x128xbf16>
      tpu.vector_store %arg6[%c0_38, %c0_39, %c0_40, %c0_41], %41 {strides = array<i32>} : memref<1x4x16x128xbf16, #tpu.memory_space<vmem>>, vector<1x4x16x128xbf16>,
    } else {
    }
    return
  }
  func.func @transform_0(%arg0: i32, %arg1: i32, %arg2: i32) -> (i32, i32, i32) {
    %c3_i32 = arith.constant 3 : i32
    %0 = arith.muli %c3_i32, %arg0 : i32
    %c0_i32 = arith.constant 0 : i32
    %1 = arith.addi %0, %c0_i32 : i32
    %c0_i32_0 = arith.constant 0 : i32
    %c0_i32_1 = arith.constant 0 : i32
    return %1, %arg1, %c0_i32_0 : i32, i32, i32
  }
  func.func @transform_1(%arg0: i32, %arg1: i32, %arg2: i32) -> (i32, i32, i32) {
    %c3_i32 = arith.constant 3 : i32
    %0 = arith.muli %c3_i32, %arg0 : i32
    %c1_i32 = arith.constant 1 : i32
    %1 = arith.addi %0, %c1_i32 : i32
    %c0_i32 = arith.constant 0 : i32
    %c0_i32_0 = arith.constant 0 : i32
    return %1, %arg2, %c0_i32 : i32, i32, i32
  }
  func.func @transform_2(%arg0: i32, %arg1: i32, %arg2: i32) -> (i32, i32, i32) {
    %c3_i32 = arith.constant 3 : i32
    %0 = arith.muli %c3_i32, %arg0 : i32
    %c2_i32 = arith.constant 2 : i32
    %1 = arith.addi %0, %c2_i32 : i32
    %c0_i32 = arith.constant 0 : i32
    %c0_i32_0 = arith.constant 0 : i32
    return %1, %arg2, %c0_i32 : i32, i32, i32
  }
  func.func @transform_3(%arg0: i32, %arg1: i32, %arg2: i32) -> (i32, i32, i32, i32) {
    %c0_i32 = arith.constant 0 : i32
    %c0_i32_0 = arith.constant 0 : i32
    %c0_i32_1 = arith.constant 0 : i32
    return %arg0, %c0_i32, %arg1, %c0_i32_0 : i32, i32, i32, i32
  }
}

module attributes {stable_mosaic.version = 11 : i64} {
  func.func @_matmul_kernel(%arg0: i32, %arg1: i32, %arg2: i32, %arg3: memref<32x128xbf16, #tpu.memory_space<vmem>>, %arg4: memref<128x128xbf16, #tpu.memory_space<vmem>>, %arg5: memref<1x128xf32, #tpu.memory_space<vmem>>, %arg6: memref<32x128xbf16, #tpu.memory_space<vmem>>, %arg7: memref<32x128xbf16, #tpu.memory_space<vmem>>, %arg8: memref<32x128xf32, #tpu.memory_space<vmem>>) attributes {dimension_semantics = [#tpu.dimension_semantics<parallel>, #tpu.dimension_semantics<parallel>, #tpu.dimension_semantics<arbitrary>], iteration_bounds = array<i64: 1, 1, 1>, scalar_prefetch = 0 : i64, scratch_operands = 1 : i64, tpu.core_type = #tpu.core_type<tc>, window_params = [{transform_indices = @transform_0, window_bounds = array<i64: 32, 128>}, {transform_indices = @transform_1, window_bounds = array<i64: 128, 128>}, {transform_indices = @transform_2, window_bounds = array<i64: 1, 128>}, {transform_indices = @transform_3, window_bounds = array<i64: 32, 128>}, {transform_indices = @transform_4, window_bounds = array<i64: 32, 128>}]} {
    %c0_i32 = arith.constant 0 : i32
    %0 = arith.cmpi eq, %arg2, %c0_i32 : i32
    %1 = arith.extui %0 : i1 to i32
    %c0_i32_0 = arith.constant 0 : i32
    %2 = arith.cmpi ne, %1, %c0_i32_0 : i32
    scf.if %2 {
      %cst_10 = arith.constant 0.000000e+00 : f32
      %12 = vector.broadcast %cst_10 : f32 to vector<32x128xf32>
      %c0_11 = arith.constant 0 : index
      %c0_12 = arith.constant 0 : index
      %13 = vector.load %arg8[%c0_11, %c0_12] : memref<32x128xf32, #tpu.memory_space<vmem>>, vector<32x128xf32>
      tpu.vector_store %arg8[%c0_11, %c0_12], %12 {strides = array<i32>} : memref<32x128xf32, #tpu.memory_space<vmem>>, vector<32x128xf32>,
    } else {
    }
    %c0 = arith.constant 0 : index
    %c0_1 = arith.constant 0 : index
    %3 = vector.load %arg8[%c0, %c0_1] : memref<32x128xf32, #tpu.memory_space<vmem>>, vector<32x128xf32>
    %c0_2 = arith.constant 0 : index
    %c0_3 = arith.constant 0 : index
    %4 = vector.load %arg3[%c0_2, %c0_3] : memref<32x128xbf16, #tpu.memory_space<vmem>>, vector<32x128xbf16>
    %c0_4 = arith.constant 0 : index
    %c0_5 = arith.constant 0 : index
    %5 = vector.load %arg4[%c0_4, %c0_5] : memref<128x128xbf16, #tpu.memory_space<vmem>>, vector<128x128xbf16>
    %cst = arith.constant dense<0.000000e+00> : vector<32x128xf32>
    %6 = tpu.matmul %4, %5, %cst {dimension_numbers = #tpu.dot_dimension_numbers<[1], [0], [0], [1], [0, 0, 1, 1], [], []>} : vector<32x128xbf16>, vector<128x128xbf16>, vector<32x128xf32> -> vector<32x128xf32>
    %7 = arith.addf %3, %6 : vector<32x128xf32>
    %c0_6 = arith.constant 0 : index
    %c0_7 = arith.constant 0 : index
    %8 = vector.load %arg8[%c0_6, %c0_7] : memref<32x128xf32, #tpu.memory_space<vmem>>, vector<32x128xf32>
    tpu.vector_store %arg8[%c0_6, %c0_7], %7 {strides = array<i32>} : memref<32x128xf32, #tpu.memory_space<vmem>>, vector<32x128xf32>,
    %c0_i32_8 = arith.constant 0 : i32
    %9 = arith.cmpi eq, %arg2, %c0_i32_8 : i32
    %10 = arith.extui %9 : i1 to i32
    %c0_i32_9 = arith.constant 0 : i32
    %11 = arith.cmpi ne, %10, %c0_i32_9 : i32
    scf.if %11 {
      %c0_10 = arith.constant 0 : index
      %c0_11 = arith.constant 0 : index
      %12 = vector.load %arg8[%c0_10, %c0_11] : memref<32x128xf32, #tpu.memory_space<vmem>>, vector<32x128xf32>
      %c0_12 = arith.constant 0 : index
      %c0_13 = arith.constant 0 : index
      %13 = vector.load %arg5[%c0_12, %c0_13] : memref<1x128xf32, #tpu.memory_space<vmem>>, vector<1x128xf32>
      %14 = vector.broadcast %13 : vector<1x128xf32> to vector<32x128xf32>
      %15 = arith.addf %12, %14 : vector<32x128xf32>
      %c0_14 = arith.constant 0 : index
      %c0_15 = arith.constant 0 : index
      %16 = vector.load %arg6[%c0_14, %c0_15] : memref<32x128xbf16, #tpu.memory_space<vmem>>, vector<32x128xbf16>
      %17 = arith.extf %16 : vector<32x128xbf16> to vector<32x128xf32>
      %18 = arith.addf %15, %17 : vector<32x128xf32>
      %19 = arith.truncf %18 : vector<32x128xf32> to vector<32x128xbf16>
      %c0_16 = arith.constant 0 : index
      %c0_17 = arith.constant 0 : index
      %20 = vector.load %arg7[%c0_16, %c0_17] : memref<32x128xbf16, #tpu.memory_space<vmem>>, vector<32x128xbf16>
      tpu.vector_store %arg7[%c0_16, %c0_17], %19 {strides = array<i32>} : memref<32x128xbf16, #tpu.memory_space<vmem>>, vector<32x128xbf16>,
    } else {
    }
    return
  }
  func.func @transform_0(%arg0: i32, %arg1: i32, %arg2: i32) -> (i32, i32) {
    %c0_i32 = arith.constant 0 : i32
    return %arg0, %arg2 : i32, i32
  }
  func.func @transform_1(%arg0: i32, %arg1: i32, %arg2: i32) -> (i32, i32) {
    %c0_i32 = arith.constant 0 : i32
    return %arg2, %arg1 : i32, i32
  }
  func.func @transform_2(%arg0: i32, %arg1: i32, %arg2: i32) -> (i32, i32) {
    %c0_i32 = arith.constant 0 : i32
    %c0_i32_0 = arith.constant 0 : i32
    return %c0_i32, %arg1 : i32, i32
  }
  func.func @transform_3(%arg0: i32, %arg1: i32, %arg2: i32) -> (i32, i32) {
    %c0_i32 = arith.constant 0 : i32
    return %arg0, %arg1 : i32, i32
  }
  func.func @transform_4(%arg0: i32, %arg1: i32, %arg2: i32) -> (i32, i32) {
    %c0_i32 = arith.constant 0 : i32
    return %arg0, %arg1 : i32, i32
  }
}

module attributes {stable_mosaic.version = 11 : i64} {
  func.func @_matmul_kernel(%arg0: i32, %arg1: i32, %arg2: i32, %arg3: memref<32x128xbf16, #tpu.memory_space<vmem>>, %arg4: memref<128x256xbf16, #tpu.memory_space<vmem>>, %arg5: memref<1x256xf32, #tpu.memory_space<vmem>>, %arg6: memref<32x256xbf16, #tpu.memory_space<vmem>>, %arg7: memref<32x256xf32, #tpu.memory_space<vmem>>) attributes {dimension_semantics = [#tpu.dimension_semantics<parallel>, #tpu.dimension_semantics<parallel>, #tpu.dimension_semantics<arbitrary>], iteration_bounds = array<i64: 1, 1, 1>, scalar_prefetch = 0 : i64, scratch_operands = 1 : i64, tpu.core_type = #tpu.core_type<tc>, window_params = [{transform_indices = @transform_0, window_bounds = array<i64: 32, 128>}, {transform_indices = @transform_1, window_bounds = array<i64: 128, 256>}, {transform_indices = @transform_2, window_bounds = array<i64: 1, 256>}, {transform_indices = @transform_3, window_bounds = array<i64: 32, 256>}]} {
    %c0_i32 = arith.constant 0 : i32
    %0 = arith.cmpi eq, %arg2, %c0_i32 : i32
    %1 = arith.extui %0 : i1 to i32
    %c0_i32_0 = arith.constant 0 : i32
    %2 = arith.cmpi ne, %1, %c0_i32_0 : i32
    scf.if %2 {
      %cst_10 = arith.constant 0.000000e+00 : f32
      %12 = vector.broadcast %cst_10 : f32 to vector<32x256xf32>
      %c0_11 = arith.constant 0 : index
      %c0_12 = arith.constant 0 : index
      %13 = vector.load %arg7[%c0_11, %c0_12] : memref<32x256xf32, #tpu.memory_space<vmem>>, vector<32x256xf32>
      tpu.vector_store %arg7[%c0_11, %c0_12], %12 {strides = array<i32>} : memref<32x256xf32, #tpu.memory_space<vmem>>, vector<32x256xf32>,
    } else {
    }
    %c0 = arith.constant 0 : index
    %c0_1 = arith.constant 0 : index
    %3 = vector.load %arg7[%c0, %c0_1] : memref<32x256xf32, #tpu.memory_space<vmem>>, vector<32x256xf32>
    %c0_2 = arith.constant 0 : index
    %c0_3 = arith.constant 0 : index
    %4 = vector.load %arg3[%c0_2, %c0_3] : memref<32x128xbf16, #tpu.memory_space<vmem>>, vector<32x128xbf16>
    %c0_4 = arith.constant 0 : index
    %c0_5 = arith.constant 0 : index
    %5 = vector.load %arg4[%c0_4, %c0_5] : memref<128x256xbf16, #tpu.memory_space<vmem>>, vector<128x256xbf16>
    %cst = arith.constant dense<0.000000e+00> : vector<32x256xf32>
    %6 = tpu.matmul %4, %5, %cst {dimension_numbers = #tpu.dot_dimension_numbers<[1], [0], [0], [1], [0, 0, 1, 1], [], []>} : vector<32x128xbf16>, vector<128x256xbf16>, vector<32x256xf32> -> vector<32x256xf32>
    %7 = arith.addf %3, %6 : vector<32x256xf32>
    %c0_6 = arith.constant 0 : index
    %c0_7 = arith.constant 0 : index
    %8 = vector.load %arg7[%c0_6, %c0_7] : memref<32x256xf32, #tpu.memory_space<vmem>>, vector<32x256xf32>
    tpu.vector_store %arg7[%c0_6, %c0_7], %7 {strides = array<i32>} : memref<32x256xf32, #tpu.memory_space<vmem>>, vector<32x256xf32>,
    %c0_i32_8 = arith.constant 0 : i32
    %9 = arith.cmpi eq, %arg2, %c0_i32_8 : i32
    %10 = arith.extui %9 : i1 to i32
    %c0_i32_9 = arith.constant 0 : i32
    %11 = arith.cmpi ne, %10, %c0_i32_9 : i32
    scf.if %11 {
      %c0_10 = arith.constant 0 : index
      %c0_11 = arith.constant 0 : index
      %12 = vector.load %arg7[%c0_10, %c0_11] : memref<32x256xf32, #tpu.memory_space<vmem>>, vector<32x256xf32>
      %c0_12 = arith.constant 0 : index
      %c0_13 = arith.constant 0 : index
      %13 = vector.load %arg5[%c0_12, %c0_13] : memref<1x256xf32, #tpu.memory_space<vmem>>, vector<1x256xf32>
      %14 = vector.broadcast %13 : vector<1x256xf32> to vector<32x256xf32>
      %15 = arith.addf %12, %14 : vector<32x256xf32>
      %16 = arith.mulf %15, %15 : vector<32x256xf32>
      %17 = arith.mulf %15, %16 : vector<32x256xf32>
      %cst_14 = arith.constant 4.471500e-02 : f32
      %18 = vector.broadcast %cst_14 : f32 to vector<32x256xf32>
      %19 = arith.mulf %18, %17 : vector<32x256xf32>
      %20 = arith.addf %15, %19 : vector<32x256xf32>
      %cst_15 = arith.constant 0.797884583 : f32
      %21 = vector.broadcast %cst_15 : f32 to vector<32x256xf32>
      %22 = arith.mulf %21, %20 : vector<32x256xf32>
      %23 = math.tanh %22 : vector<32x256xf32>
      %cst_16 = arith.constant 1.000000e+00 : f32
      %24 = vector.broadcast %cst_16 : f32 to vector<32x256xf32>
      %25 = arith.addf %24, %23 : vector<32x256xf32>
      %cst_17 = arith.constant 5.000000e-01 : f32
      %26 = vector.broadcast %cst_17 : f32 to vector<32x256xf32>
      %27 = arith.mulf %26, %25 : vector<32x256xf32>
      %28 = arith.mulf %15, %27 : vector<32x256xf32>
      %29 = arith.truncf %28 : vector<32x256xf32> to vector<32x256xbf16>
      %c0_18 = arith.constant 0 : index
      %c0_19 = arith.constant 0 : index
      %30 = vector.load %arg6[%c0_18, %c0_19] : memref<32x256xbf16, #tpu.memory_space<vmem>>, vector<32x256xbf16>
      tpu.vector_store %arg6[%c0_18, %c0_19], %29 {strides = array<i32>} : memref<32x256xbf16, #tpu.memory_space<vmem>>, vector<32x256xbf16>,
    } else {
    }
    return
  }
  func.func @transform_0(%arg0: i32, %arg1: i32, %arg2: i32) -> (i32, i32) {
    %c0_i32 = arith.constant 0 : i32
    return %arg0, %arg2 : i32, i32
  }
  func.func @transform_1(%arg0: i32, %arg1: i32, %arg2: i32) -> (i32, i32) {
    %c0_i32 = arith.constant 0 : i32
    return %arg2, %arg1 : i32, i32
  }
  func.func @transform_2(%arg0: i32, %arg1: i32, %arg2: i32) -> (i32, i32) {
    %c0_i32 = arith.constant 0 : i32
    %c0_i32_0 = arith.constant 0 : i32
    return %c0_i32, %arg1 : i32, i32
  }
  func.func @transform_3(%arg0: i32, %arg1: i32, %arg2: i32) -> (i32, i32) {
    %c0_i32 = arith.constant 0 : i32
    return %arg0, %arg1 : i32, i32
  }
}

module attributes {stable_mosaic.version = 11 : i64} {
  func.func @_matmul_kernel(%arg0: i32, %arg1: i32, %arg2: i32, %arg3: memref<32x256xbf16, #tpu.memory_space<vmem>>, %arg4: memref<256x128xbf16, #tpu.memory_space<vmem>>, %arg5: memref<1x128xf32, #tpu.memory_space<vmem>>, %arg6: memref<32x128xbf16, #tpu.memory_space<vmem>>, %arg7: memref<32x128xbf16, #tpu.memory_space<vmem>>, %arg8: memref<32x128xf32, #tpu.memory_space<vmem>>) attributes {dimension_semantics = [#tpu.dimension_semantics<parallel>, #tpu.dimension_semantics<parallel>, #tpu.dimension_semantics<arbitrary>], iteration_bounds = array<i64: 1, 1, 1>, scalar_prefetch = 0 : i64, scratch_operands = 1 : i64, tpu.core_type = #tpu.core_type<tc>, window_params = [{transform_indices = @transform_0, window_bounds = array<i64: 32, 256>}, {transform_indices = @transform_1, window_bounds = array<i64: 256, 128>}, {transform_indices = @transform_2, window_bounds = array<i64: 1, 128>}, {transform_indices = @transform_3, window_bounds = array<i64: 32, 128>}, {transform_indices = @transform_4, window_bounds = array<i64: 32, 128>}]} {
    %c0_i32 = arith.constant 0 : i32
    %0 = arith.cmpi eq, %arg2, %c0_i32 : i32
    %1 = arith.extui %0 : i1 to i32
    %c0_i32_0 = arith.constant 0 : i32
    %2 = arith.cmpi ne, %1, %c0_i32_0 : i32
    scf.if %2 {
      %cst_10 = arith.constant 0.000000e+00 : f32
      %12 = vector.broadcast %cst_10 : f32 to vector<32x128xf32>
      %c0_11 = arith.constant 0 : index
      %c0_12 = arith.constant 0 : index
      %13 = vector.load %arg8[%c0_11, %c0_12] : memref<32x128xf32, #tpu.memory_space<vmem>>, vector<32x128xf32>
      tpu.vector_store %arg8[%c0_11, %c0_12], %12 {strides = array<i32>} : memref<32x128xf32, #tpu.memory_space<vmem>>, vector<32x128xf32>,
    } else {
    }
    %c0 = arith.constant 0 : index
    %c0_1 = arith.constant 0 : index
    %3 = vector.load %arg8[%c0, %c0_1] : memref<32x128xf32, #tpu.memory_space<vmem>>, vector<32x128xf32>
    %c0_2 = arith.constant 0 : index
    %c0_3 = arith.constant 0 : index
    %4 = vector.load %arg3[%c0_2, %c0_3] : memref<32x256xbf16, #tpu.memory_space<vmem>>, vector<32x256xbf16>
    %c0_4 = arith.constant 0 : index
    %c0_5 = arith.constant 0 : index
    %5 = vector.load %arg4[%c0_4, %c0_5] : memref<256x128xbf16, #tpu.memory_space<vmem>>, vector<256x128xbf16>
    %cst = arith.constant dense<0.000000e+00> : vector<32x128xf32>
    %6 = tpu.matmul %4, %5, %cst {dimension_numbers = #tpu.dot_dimension_numbers<[1], [0], [0], [1], [0, 0, 1, 1], [], []>} : vector<32x256xbf16>, vector<256x128xbf16>, vector<32x128xf32> -> vector<32x128xf32>
    %7 = arith.addf %3, %6 : vector<32x128xf32>
    %c0_6 = arith.constant 0 : index
    %c0_7 = arith.constant 0 : index
    %8 = vector.load %arg8[%c0_6, %c0_7] : memref<32x128xf32, #tpu.memory_space<vmem>>, vector<32x128xf32>
    tpu.vector_store %arg8[%c0_6, %c0_7], %7 {strides = array<i32>} : memref<32x128xf32, #tpu.memory_space<vmem>>, vector<32x128xf32>,
    %c0_i32_8 = arith.constant 0 : i32
    %9 = arith.cmpi eq, %arg2, %c0_i32_8 : i32
    %10 = arith.extui %9 : i1 to i32
    %c0_i32_9 = arith.constant 0 : i32
    %11 = arith.cmpi ne, %10, %c0_i32_9 : i32
    scf.if %11 {
      %c0_10 = arith.constant 0 : index
      %c0_11 = arith.constant 0 : index
      %12 = vector.load %arg8[%c0_10, %c0_11] : memref<32x128xf32, #tpu.memory_space<vmem>>, vector<32x128xf32>
      %c0_12 = arith.constant 0 : index
      %c0_13 = arith.constant 0 : index
      %13 = vector.load %arg5[%c0_12, %c0_13] : memref<1x128xf32, #tpu.memory_space<vmem>>, vector<1x128xf32>
      %14 = vector.broadcast %13 : vector<1x128xf32> to vector<32x128xf32>
      %15 = arith.addf %12, %14 : vector<32x128xf32>
      %c0_14 = arith.constant 0 : index
      %c0_15 = arith.constant 0 : index
      %16 = vector.load %arg6[%c0_14, %c0_15] : memref<32x128xbf16, #tpu.memory_space<vmem>>, vector<32x128xbf16>
      %17 = arith.extf %16 : vector<32x128xbf16> to vector<32x128xf32>
      %18 = arith.addf %15, %17 : vector<32x128xf32>
      %19 = arith.truncf %18 : vector<32x128xf32> to vector<32x128xbf16>
      %c0_16 = arith.constant 0 : index
      %c0_17 = arith.constant 0 : index
      %20 = vector.load %arg7[%c0_16, %c0_17] : memref<32x128xbf16, #tpu.memory_space<vmem>>, vector<32x128xbf16>
      tpu.vector_store %arg7[%c0_16, %c0_17], %19 {strides = array<i32>} : memref<32x128xbf16, #tpu.memory_space<vmem>>, vector<32x128xbf16>,
    } else {
    }
    return
  }
  func.func @transform_0(%arg0: i32, %arg1: i32, %arg2: i32) -> (i32, i32) {
    %c0_i32 = arith.constant 0 : i32
    return %arg0, %arg2 : i32, i32
  }
  func.func @transform_1(%arg0: i32, %arg1: i32, %arg2: i32) -> (i32, i32) {
    %c0_i32 = arith.constant 0 : i32
    return %arg2, %arg1 : i32, i32
  }
  func.func @transform_2(%arg0: i32, %arg1: i32, %arg2: i32) -> (i32, i32) {
    %c0_i32 = arith.constant 0 : i32
    %c0_i32_0 = arith.constant 0 : i32
    return %c0_i32, %arg1 : i32, i32
  }
  func.func @transform_3(%arg0: i32, %arg1: i32, %arg2: i32) -> (i32, i32) {
    %c0_i32 = arith.constant 0 : i32
    return %arg0, %arg1 : i32, i32
  }
  func.func @transform_4(%arg0: i32, %arg1: i32, %arg2: i32) -> (i32, i32) {
    %c0_i32 = arith.constant 0 : i32
    return %arg0, %arg1 : i32, i32
  }
}

module attributes {stable_mosaic.version = 11 : i64} {
  func.func @_matmul_kernel(%arg0: i32, %arg1: i32, %arg2: i32, %arg3: memref<32x128xbf16, #tpu.memory_space<vmem>>, %arg4: memref<128x128xbf16, #tpu.memory_space<vmem>>, %arg5: memref<1x128xf32, #tpu.memory_space<vmem>>, %arg6: memref<32x128xf32, #tpu.memory_space<vmem>>, %arg7: memref<32x128xf32, #tpu.memory_space<vmem>>) attributes {dimension_semantics = [#tpu.dimension_semantics<parallel>, #tpu.dimension_semantics<parallel>, #tpu.dimension_semantics<arbitrary>], iteration_bounds = array<i64: 1, 1, 1>, scalar_prefetch = 0 : i64, scratch_operands = 1 : i64, tpu.core_type = #tpu.core_type<tc>, window_params = [{transform_indices = @transform_0, window_bounds = array<i64: 32, 128>}, {transform_indices = @transform_1, window_bounds = array<i64: 128, 128>}, {transform_indices = @transform_2, window_bounds = array<i64: 1, 128>}, {transform_indices = @transform_3, window_bounds = array<i64: 32, 128>}]} {
    %c0_i32 = arith.constant 0 : i32
    %0 = arith.cmpi eq, %arg2, %c0_i32 : i32
    %1 = arith.extui %0 : i1 to i32
    %c0_i32_0 = arith.constant 0 : i32
    %2 = arith.cmpi ne, %1, %c0_i32_0 : i32
    scf.if %2 {
      %cst_10 = arith.constant 0.000000e+00 : f32
      %12 = vector.broadcast %cst_10 : f32 to vector<32x128xf32>
      %c0_11 = arith.constant 0 : index
      %c0_12 = arith.constant 0 : index
      %13 = vector.load %arg7[%c0_11, %c0_12] : memref<32x128xf32, #tpu.memory_space<vmem>>, vector<32x128xf32>
      tpu.vector_store %arg7[%c0_11, %c0_12], %12 {strides = array<i32>} : memref<32x128xf32, #tpu.memory_space<vmem>>, vector<32x128xf32>,
    } else {
    }
    %c0 = arith.constant 0 : index
    %c0_1 = arith.constant 0 : index
    %3 = vector.load %arg7[%c0, %c0_1] : memref<32x128xf32, #tpu.memory_space<vmem>>, vector<32x128xf32>
    %c0_2 = arith.constant 0 : index
    %c0_3 = arith.constant 0 : index
    %4 = vector.load %arg3[%c0_2, %c0_3] : memref<32x128xbf16, #tpu.memory_space<vmem>>, vector<32x128xbf16>
    %c0_4 = arith.constant 0 : index
    %c0_5 = arith.constant 0 : index
    %5 = vector.load %arg4[%c0_4, %c0_5] : memref<128x128xbf16, #tpu.memory_space<vmem>>, vector<128x128xbf16>
    %cst = arith.constant dense<0.000000e+00> : vector<32x128xf32>
    %6 = tpu.matmul %4, %5, %cst {dimension_numbers = #tpu.dot_dimension_numbers<[1], [0], [0], [1], [0, 0, 1, 1], [], []>} : vector<32x128xbf16>, vector<128x128xbf16>, vector<32x128xf32> -> vector<32x128xf32>
    %7 = arith.addf %3, %6 : vector<32x128xf32>
    %c0_6 = arith.constant 0 : index
    %c0_7 = arith.constant 0 : index
    %8 = vector.load %arg7[%c0_6, %c0_7] : memref<32x128xf32, #tpu.memory_space<vmem>>, vector<32x128xf32>
    tpu.vector_store %arg7[%c0_6, %c0_7], %7 {strides = array<i32>} : memref<32x128xf32, #tpu.memory_space<vmem>>, vector<32x128xf32>,
    %c0_i32_8 = arith.constant 0 : i32
    %9 = arith.cmpi eq, %arg2, %c0_i32_8 : i32
    %10 = arith.extui %9 : i1 to i32
    %c0_i32_9 = arith.constant 0 : i32
    %11 = arith.cmpi ne, %10, %c0_i32_9 : i32
    scf.if %11 {
      %c0_10 = arith.constant 0 : index
      %c0_11 = arith.constant 0 : index
      %12 = vector.load %arg7[%c0_10, %c0_11] : memref<32x128xf32, #tpu.memory_space<vmem>>, vector<32x128xf32>
      %c0_12 = arith.constant 0 : index
      %c0_13 = arith.constant 0 : index
      %13 = vector.load %arg5[%c0_12, %c0_13] : memref<1x128xf32, #tpu.memory_space<vmem>>, vector<1x128xf32>
      %14 = vector.broadcast %13 : vector<1x128xf32> to vector<32x128xf32>
      %15 = arith.addf %12, %14 : vector<32x128xf32>
      %c0_14 = arith.constant 0 : index
      %c0_15 = arith.constant 0 : index
      %16 = vector.load %arg6[%c0_14, %c0_15] : memref<32x128xf32, #tpu.memory_space<vmem>>, vector<32x128xf32>
      tpu.vector_store %arg6[%c0_14, %c0_15], %15 {strides = array<i32>} : memref<32x128xf32, #tpu.memory_space<vmem>>, vector<32x128xf32>,
    } else {
    }
    return
  }
  func.func @transform_0(%arg0: i32, %arg1: i32, %arg2: i32) -> (i32, i32) {
    %c0_i32 = arith.constant 0 : i32
    return %arg0, %arg2 : i32, i32
  }
  func.func @transform_1(%arg0: i32, %arg1: i32, %arg2: i32) -> (i32, i32) {
    %c0_i32 = arith.constant 0 : i32
    return %arg2, %arg1 : i32, i32
  }
  func.func @transform_2(%arg0: i32, %arg1: i32, %arg2: i32) -> (i32, i32) {
    %c0_i32 = arith.constant 0 : i32
    %c0_i32_0 = arith.constant 0 : i32
    return %c0_i32, %arg1 : i32, i32
  }
  func.func @transform_3(%arg0: i32, %arg1: i32, %arg2: i32) -> (i32, i32) {
    %c0_i32 = arith.constant 0 : i32
    return %arg0, %arg1 : i32, i32
  }
}

module attributes {stable_mosaic.version = 11 : i64} {
  func.func @_quant_kernel(%arg0: i32, %arg1: memref<32x32xf32, #tpu.memory_space<vmem>>, %arg2: memref<64x32xf32, #tpu.memory_space<vmem>>, %arg3: memref<32x32xf32, #tpu.memory_space<vmem>>, %arg4: memref<32x1xi32, #tpu.memory_space<vmem>>, %arg5: memref<32x1xf32, #tpu.memory_space<vmem>>) attributes {dimension_semantics = [#tpu.dimension_semantics<parallel>], iteration_bounds = array<i64: 1>, scalar_prefetch = 0 : i64, scratch_operands = 0 : i64, tpu.core_type = #tpu.core_type<tc>, window_params = [{transform_indices = @transform_0, window_bounds = array<i64: 32, 32>}, {pipeline_mode = #tpu.pipeline_mode<synchronous>, transform_indices = @transform_1, window_bounds = array<i64: 64, 32>}, {transform_indices = @transform_2, window_bounds = array<i64: 32, 32>}, {transform_indices = @transform_3, window_bounds = array<i64: 32, 1>}, {transform_indices = @transform_4, window_bounds = array<i64: 32, 1>}]} {
    %c0 = arith.constant 0 : index
    %c0_0 = arith.constant 0 : index
    %0 = vector.load %arg1[%c0, %c0_0] : memref<32x32xf32, #tpu.memory_space<vmem>>, vector<32x32xf32>
    %c0_1 = arith.constant 0 : index
    %c0_2 = arith.constant 0 : index
    %1 = vector.load %arg2[%c0_1, %c0_2] : memref<64x32xf32, #tpu.memory_space<vmem>>, vector<64x32xf32>
    %2 = arith.mulf %0, %0 : vector<32x32xf32>
    %cst = arith.constant dense<0.000000e+00> : vector<32xf32>
    %3 = vector.multi_reduction <add>, %2, %cst [1] : vector<32x32xf32> to vector<32xf32>
    %4 = vector.shape_cast %3 : vector<32xf32> to vector<32x1xf32>
    %5 = math.sqrt %4 : vector<32x1xf32>
    %cst_3 = arith.constant 9.99999996E-13 : f32
    %6 = vector.broadcast %cst_3 : f32 to vector<32x1xf32>
    %7 = arith.maximumf %5, %6 : vector<32x1xf32>
    %8 = vector.broadcast %7 : vector<32x1xf32> to vector<32x32xf32>
    %9 = arith.divf %0, %8 : vector<32x32xf32>
    %10 = arith.mulf %1, %1 : vector<64x32xf32>
    %cst_4 = arith.constant dense<0.000000e+00> : vector<64xf32>
    %11 = vector.multi_reduction <add>, %10, %cst_4 [1] : vector<64x32xf32> to vector<64xf32>
    %12 = vector.shape_cast %11 : vector<64xf32> to vector<64x1xf32>
    %13 = math.sqrt %12 : vector<64x1xf32>
    %cst_5 = arith.constant 9.99999996E-13 : f32
    %14 = vector.broadcast %cst_5 : f32 to vector<64x1xf32>
    %15 = arith.maximumf %13, %14 : vector<64x1xf32>
    %16 = vector.broadcast %15 : vector<64x1xf32> to vector<64x32xf32>
    %17 = arith.divf %1, %16 : vector<64x32xf32>
    %18 = tpu.transpose %17, [1, 0] : vector<64x32xf32> -> vector<32x64xf32>
    %cst_6 = arith.constant dense<0.000000e+00> : vector<32x64xf32>
    %19 = tpu.matmul %9, %18, %cst_6 {dimension_numbers = #tpu.dot_dimension_numbers<[1], [0], [0], [1], [0, 0, 1, 1], [], []>} : vector<32x32xf32>, vector<32x64xf32>, vector<32x64xf32> -> vector<32x64xf32>
    %cst_7 = arith.constant 0.000000e+00 : f32
    %20 = vector.broadcast %cst_7 : f32 to vector<32x64xf32>
    %21 = arith.subf %20, %19 : vector<32x64xf32>
    %cst_8 = arith.constant dense<0x7F800000> : vector<32xf32>
    %22 = vector.multi_reduction <minimumf>, %21, %cst_8 [1] : vector<32x64xf32> to vector<32xf32>
    %23 = vector.shape_cast %22 : vector<32xf32> to vector<32x1xf32>
    %24 = tpu.iota {dimensions = array<i32: 1>} : vector<32x64xi32>
    %25 = vector.broadcast %23 : vector<32x1xf32> to vector<32x64xf32>
    %26 = arith.cmpf ole, %21, %25 : vector<32x64xf32>
    %c64_i32 = arith.constant 64 : i32
    %27 = vector.broadcast %c64_i32 : i32 to vector<32x64xi32>
    %28 = arith.select %26, %24, %27 : vector<32x64xi1>, vector<32x64xi32>
    %cst_9 = arith.constant dense<2147483647> : vector<32xi32>
    %29 = vector.multi_reduction <minsi>, %28, %cst_9 [1] : vector<32x64xi32> to vector<32xi32>
    %30 = vector.shape_cast %29 : vector<32xi32> to vector<32x1xi32>
    %31 = vector.broadcast %30 : vector<32x1xi32> to vector<32x64xi32>
    %32 = arith.cmpi eq, %24, %31 : vector<32x64xi32>
    %33 = arith.extui %32 : vector<32x64xi1> to vector<32x64xi32>
    %34 = arith.sitofp %33 : vector<32x64xi32> to vector<32x64xf32>
    %cst_10 = arith.constant dense<0.000000e+00> : vector<32x32xf32>
    %35 = tpu.matmul %34, %1, %cst_10 {dimension_numbers = #tpu.dot_dimension_numbers<[1], [0], [0], [1], [0, 0, 1, 1], [], []>} : vector<32x64xf32>, vector<64x32xf32>, vector<32x32xf32> -> vector<32x32xf32>
    %36 = arith.subf %35, %9 : vector<32x32xf32>
    %37 = arith.mulf %36, %36 : vector<32x32xf32>
    %cst_11 = arith.constant dense<0.000000e+00> : vector<32xf32>
    %38 = vector.multi_reduction <add>, %37, %cst_11 [1] : vector<32x32xf32> to vector<32xf32>
    %39 = vector.shape_cast %38 : vector<32xf32> to vector<32x1xf32>
    %c0_12 = arith.constant 0 : index
    %c0_13 = arith.constant 0 : index
    %40 = vector.load %arg3[%c0_12, %c0_13] : memref<32x32xf32, #tpu.memory_space<vmem>>, vector<32x32xf32>
    tpu.vector_store %arg3[%c0_12, %c0_13], %35 {strides = array<i32>} : memref<32x32xf32, #tpu.memory_space<vmem>>, vector<32x32xf32>,
    %c0_14 = arith.constant 0 : index
    %c0_15 = arith.constant 0 : index
    %41 = vector.load %arg4[%c0_14, %c0_15] : memref<32x1xi32, #tpu.memory_space<vmem>>, vector<32x1xi32>
    tpu.vector_store %arg4[%c0_14, %c0_15], %30 {strides = array<i32>} : memref<32x1xi32, #tpu.memory_space<vmem>>, vector<32x1xi32>,
    %c0_16 = arith.constant 0 : index
    %c0_17 = arith.constant 0 : index
    %42 = vector.load %arg5[%c0_16, %c0_17] : memref<32x1xf32, #tpu.memory_space<vmem>>, vector<32x1xf32>
    tpu.vector_store %arg5[%c0_16, %c0_17], %39 {strides = array<i32>} : memref<32x1xf32, #tpu.memory_space<vmem>>, vector<32x1xf32>,
    return
  }
  func.func @transform_0(%arg0: i32) -> (i32, i32) {
    %c0_i32 = arith.constant 0 : i32
    %c0_i32_0 = arith.constant 0 : i32
    return %arg0, %c0_i32 : i32, i32
  }
  func.func @transform_1(%arg0: i32) -> (i32, i32) {
    %c0_i32 = arith.constant 0 : i32
    %c0_i32_0 = arith.constant 0 : i32
    %c0_i32_1 = arith.constant 0 : i32
    return %c0_i32, %c0_i32_0 : i32, i32
  }
  func.func @transform_2(%arg0: i32) -> (i32, i32) {
    %c0_i32 = arith.constant 0 : i32
    %c0_i32_0 = arith.constant 0 : i32
    return %arg0, %c0_i32 : i32, i32
  }
  func.func @transform_3(%arg0: i32) -> (i32, i32) {
    %c0_i32 = arith.constant 0 : i32
    %c0_i32_0 = arith.constant 0 : i32
    return %arg0, %c0_i32 : i32, i32
  }
  func.func @transform_4(%arg0: i32) -> (i32, i32) {
    %c0_i32 = arith.constant 0 : i32
    %c0_i32_0 = arith.constant 0 : i32
    return %arg0, %c0_i32 : i32, i32
  }
}

</mosaic_0001>

<llo_original>
// kernel: vitvqgan_forward.37
$region0: #{vitvqgan_forward.37}
  #allocation0 [shape = 'u32[]', space=smem, size = 0x4, offset = 0x4, fixed_abs, tag = 'smem constant byte address 0x4 - core index']
  #allocation1 [shape = 'u32[144,128]{1,0:T(1,128)}', space=vmem, size = 0x12000, scoped, tag = 'internal scratch']
  %s0 = inlined_call_operand.vmem [shape: bf16[32,64], index: 0, kind: input, shape index: {}]
  %s1 = inlined_call_operand.vmem [shape: f32[1,64], index: 1, kind: input, shape index: {}]
  %s2 = inlined_call_operand.vmem [shape: f32[1,64], index: 2, kind: input, shape index: {}]
  %s3 = inlined_call_operand.vmem [shape: bf16[32,64], index: 3, kind: output, shape index: {}]
  %s4 = sld [smem:[#allocation0]]
  $region22: #{vitvqgan_forward.37} parent=0
    _
  %s6 = ssub.s32 1, %s4
  %s7 = scalar_select 0, %s6, %s4
  // Predicated region
  $region2: #{vitvqgan_forward.37} parent=0 // pred_check
    _
  $region3: #{vitvqgan_forward.37} parent=0 // pred_check_branch
    %9 = sbr.rel (0) target = $region5
  $region4: #{vitvqgan_forward.37} parent=0 // pred_region
    _
  $region5: #{vitvqgan_forward.37} parent=0 // pred_fallthru
    _
  // Predicated region
  $region6: #{vitvqgan_forward.37} parent=0 // pred_check
    _
  $region7: #{vitvqgan_forward.37} parent=0 // pred_check_branch
    %11 = sbr.rel (0) target = $region9
  $region8: #{vitvqgan_forward.37} parent=0 // pred_region
    _
  $region9: #{vitvqgan_forward.37} parent=0 // pred_fallthru
    _
  // Predicated region
  $region10: #{vitvqgan_forward.37} parent=0 // pred_check
    _
  $region11: #{vitvqgan_forward.37} parent=0 // pred_check_branch
    %13 = sbr.rel (0) target = $region13
  $region12: #{vitvqgan_forward.37} parent=0 // pred_region
    _
  $region13: #{vitvqgan_forward.37} parent=0 // pred_fallthru
    _
  %v14 = vld [vmem:[%s0] sm:$0xf]
  %v15 = vld [vmem:[%s0 + $0x4] sm:$0xf]
  %v16 = vld [vmem:[%s0 + $0x8] sm:$0xf]
  %v17 = vld [vmem:[%s0 + $0xc] sm:$0xf]
  %v18 = vunpack.c.l.bf16 %v14
  %v19 = vunpack.c.l.bf16 %v15
  %v20 = vunpack.c.l.bf16 %v16
  %v21 = vunpack.c.l.bf16 %v17
  %vm22 = vcmask 523264
  %v23 = vsel %vm22, %v18, 0.0
  %24 = vadd.xlane.f32.xlu0 %v23
  %v25 = vpop.xlane.xlu0 %24
  %v26 = vsel %vm22, %v19, 0.0
  %27 = vadd.xlane.f32.xlu0 %v26
  %v28 = vpop.xlane.xlu0 %27
  %v29 = vsel %vm22, %v20, 0.0
  %30 = vadd.xlane.f32.xlu0 %v29
  %v31 = vpop.xlane.xlu0 %30
  %v32 = vsel %vm22, %v21, 0.0
  %33 = vadd.xlane.f32.xlu0 %v32
  %v34 = vpop.xlane.xlu0 %33
  %v35 = vrcp.pop 64.0
  %v36 = vmul.f32 %v25, %v35
  %v37 = vmul.f32 %v28, %v35
  %v38 = vmul.f32 %v31, %v35
  %v39 = vmul.f32 %v34, %v35
  %v40 = vsub.f32 %v18, %v36
  %v41 = vsub.f32 %v19, %v37
  %v42 = vsub.f32 %v20, %v38
  %v43 = vsub.f32 %v21, %v39
  %v44 = vmul.f32 %v40, %v40
  %v45 = vmul.f32 %v41, %v41
  %v46 = vmul.f32 %v42, %v42
  %v47 = vmul.f32 %v43, %v43
  %v48 = vsel %vm22, %v44, 0.0
  %49 = vadd.xlane.f32.xlu0 %v48
  %v50 = vpop.xlane.xlu0 %49
  %v51 = vsel %vm22, %v45, 0.0
  %52 = vadd.xlane.f32.xlu0 %v51
  %v53 = vpop.xlane.xlu0 %52
  %v54 = vsel %vm22, %v46, 0.0
  %55 = vadd.xlane.f32.xlu0 %v54
  %v56 = vpop.xlane.xlu0 %55
  %v57 = vsel %vm22, %v47, 0.0
  %58 = vadd.xlane.f32.xlu0 %v57
  %v59 = vpop.xlane.xlu0 %58
  %v60 = vmul.f32 %v50, %v35
  %v61 = vmul.f32 %v53, %v35
  %v62 = vmul.f32 %v56, %v35
  %v63 = vmul.f32 %v59, %v35
  %v64 = vadd.f32 %v60, 1e-05
  %v65 = vadd.f32 %v61, 1e-05
  %v66 = vadd.f32 %v62, 1e-05
  %v67 = vadd.f32 %v63, 1e-05
  %v68 = vrsqrt.pop %v64
  %v69 = vrsqrt.pop %v65
  %v70 = vrsqrt.pop %v66
  %v71 = vrsqrt.pop %v67
  %v72 = vmul.f32 %v40, %v68
  %v73 = vmul.f32 %v41, %v69
  %v74 = vmul.f32 %v42, %v70
  %v75 = vmul.f32 %v43, %v71
  %v76 = vld [vmem:[%s1] sm:$0x1]
  %v78 = vlaneseq
  %v79 = vshrl.u32 %v78, 7
  %v80 = vsub.s32 0, %v79
  %v81 = vrot.slane %v76, %v80
  %v83 = vmul.f32 %v72, %v81
  %v84 = vmul.f32 %v73, %v81
  %v85 = vmul.f32 %v74, %v81
  %v86 = vmul.f32 %v75, %v81
  %v87 = vld [vmem:[%s2] sm:$0x1]
  %v89 = vlaneseq
  %v90 = vshrl.u32 %v89, 7
  %v91 = vsub.s32 0, %v90
  %v92 = vrot.slane %v87, %v91
  %v94 = vadd.f32 %v83, %v92
  %v95 = vadd.f32 %v84, %v92
  %v96 = vadd.f32 %v85, %v92
  %v97 = vadd.f32 %v86, %v92
  %v98 = vpack.c.bf16 %v95, %v94
  %v99 = vpack.c.bf16 %v97, %v96
  %v102 = vunpack.c.l.b16 %v98
  %v103 = vunpack.c.h.b16 %v98
  %v104 = vunpack.c.l.b16 %v99
  %v105 = vunpack.c.h.b16 %v99
  %v106 = vpack.c.b16 %v102, %v102
  %v107 = vpack.c.b16 %v103, %v103
  %v108 = vpack.c.b16 %v104, %v104
  %v109 = vpack.c.b16 %v105, %v105
  %vm114 = vcmask 519168
  %115 = vst.msk [vmem:[%s3] sm:$0xf] %vm114, %v106
  %116 = vst.msk [vmem:[%s3 + $0x4] sm:$0xf] %vm114, %v107
  %117 = vst.msk [vmem:[%s3 + $0x8] sm:$0xf] %vm114, %v108
  %118 = vst.msk [vmem:[%s3 + $0xc] sm:$0xf] %vm114, %v109
  // Predicated region
  $region14: #{vitvqgan_forward.37} parent=0 // pred_check
    _
  $region15: #{vitvqgan_forward.37} parent=0 // pred_check_branch
    %120 = sbr.rel (0) target = $region17
  $region16: #{vitvqgan_forward.37} parent=0 // pred_region
    _
  $region17: #{vitvqgan_forward.37} parent=0 // pred_fallthru
    _
  // Predicated region
  $region18: #{vitvqgan_forward.37} parent=0 // pred_check
    _
  $region19: #{vitvqgan_forward.37} parent=0 // pred_check_branch
    %122 = sbr.rel (0) target = $region21
  $region20: #{vitvqgan_forward.37} parent=0 // pred_region
    _
  $region21: #{vitvqgan_forward.37} parent=0 // pred_fallthru
    _

// kernel: vitvqgan_forward.36
$region0: #{vitvqgan_forward.36}
  #allocation0 [shape = 'u32[]', space=smem, size = 0x4, offset = 0x4, fixed_abs, tag = 'smem constant byte address 0x4 - core index']
  #allocation1 [shape = 'u32[144,128]{1,0:T(1,128)}', space=vmem, size = 0x12000, scoped, tag = 'internal scratch']
  #allocation2 [shape = 'f32[32,128]{1,0:T(8,128)}', space=vmem, size = 0x4000, scoped, tag = 'scratch operand']
  %s0 = inlined_call_operand.vmem [shape: bf16[32,128], index: 0, kind: input, shape index: {}]
  %s1 = inlined_call_operand.vmem [shape: bf16[128,128], index: 1, kind: input, shape index: {}]
  %s2 = inlined_call_operand.vmem [shape: f32[1,128], index: 2, kind: input, shape index: {}]
  %s3 = inlined_call_operand.vmem [shape: bf16[32,128], index: 3, kind: output, shape index: {}]
  %s4 = sld [smem:[#allocation0]]
  $region30: #{vitvqgan_forward.36} parent=0
    _
  %s6 = ssub.s32 1, %s4
  %s7 = scalar_select 0, %s6, %s4
  // Predicated region
  $region2: #{vitvqgan_forward.36} parent=0 // pred_check
    _
  $region3: #{vitvqgan_forward.36} parent=0 // pred_check_branch
    %9 = sbr.rel (0) target = $region5
  $region4: #{vitvqgan_forward.36} parent=0 // pred_region
    _
  $region5: #{vitvqgan_forward.36} parent=0 // pred_fallthru
    _
  // Predicated region
  $region6: #{vitvqgan_forward.36} parent=0 // pred_check
    _
  $region7: #{vitvqgan_forward.36} parent=0 // pred_check_branch
    %11 = sbr.rel (0) target = $region9
  $region8: #{vitvqgan_forward.36} parent=0 // pred_region
    _
  $region9: #{vitvqgan_forward.36} parent=0 // pred_fallthru
    _
  // Predicated region
  $region10: #{vitvqgan_forward.36} parent=0 // pred_check
    _
  $region11: #{vitvqgan_forward.36} parent=0 // pred_check_branch
    %13 = sbr.rel (0) target = $region13
  $region12: #{vitvqgan_forward.36} parent=0 // pred_region
    _
  $region13: #{vitvqgan_forward.36} parent=0 // pred_fallthru
    _
  %p15 = scmp.eq.s32.totalorder 0, 0
  // Predicated region
  $region14: #{vitvqgan_forward.36} parent=0 // pred_check
    %p16 = pneg %p15
  $region15: #{vitvqgan_forward.36} parent=0 // pred_check_branch
    %18 = sbr.rel (%p16) target = $region17
  $region16: #{vitvqgan_forward.36} parent=0 // pred_region
    %19 = vst [vmem:[#allocation2] sm:$0xff] 0.0
    %20 = vst [vmem:[#allocation2 + $0x8] sm:$0xff] 0.0
    %21 = vst [vmem:[#allocation2 + $0x10] sm:$0xff] 0.0
    %22 = vst [vmem:[#allocation2 + $0x18] sm:$0xff] 0.0
  $region17: #{vitvqgan_forward.36} parent=0 // pred_fallthru
    _
  %v23 = vld [vmem:[#allocation2] sm:$0xff]
  %v24 = vld [vmem:[#allocation2 + $0x8] sm:$0xff]
  %v25 = vld [vmem:[#allocation2 + $0x10] sm:$0xff]
  %v26 = vld [vmem:[#allocation2 + $0x18] sm:$0xff]
  %v27 = vld [vmem:[%s0] sm:$0xf]
  %v28 = vld [vmem:[%s0 + $0x4] sm:$0xf]
  %v29 = vld [vmem:[%s0 + $0x8] sm:$0xf]
  %v30 = vld [vmem:[%s0 + $0xc] sm:$0xf]
  %v31 = vld [vmem:[%s1] sm:$0xf]
  %v32 = vld [vmem:[%s1 + $0x4] sm:$0xf]
  %v33 = vld [vmem:[%s1 + $0x8] sm:$0xf]
  %v34 = vld [vmem:[%s1 + $0xc] sm:$0xf]
  %v35 = vld [vmem:[%s1 + $0x10] sm:$0xf]
  %v36 = vld [vmem:[%s1 + $0x14] sm:$0xf]
  %v37 = vld [vmem:[%s1 + $0x18] sm:$0xf]
  %v38 = vld [vmem:[%s1 + $0x1c] sm:$0xf]
  %v39 = vld [vmem:[%s1 + $0x20] sm:$0xf]
  %v40 = vld [vmem:[%s1 + $0x24] sm:$0xf]
  %v41 = vld [vmem:[%s1 + $0x28] sm:$0xf]
  %v42 = vld [vmem:[%s1 + $0x2c] sm:$0xf]
  %v43 = vld [vmem:[%s1 + $0x30] sm:$0xf]
  %v44 = vld [vmem:[%s1 + $0x34] sm:$0xf]
  %v45 = vld [vmem:[%s1 + $0x38] sm:$0xf]
  %v46 = vld [vmem:[%s1 + $0x3c] sm:$0xf]
  %v51 = vunpack.c.l.b16 %v27
  %v52 = vunpack.c.l.b16 %v28
  %v53 = vunpack.c.l.b16 %v29
  %v54 = vunpack.c.l.b16 %v30
  %v55 = vpack.c.b16 %v52, %v51
  %v56 = vpack.c.b16 %v54, %v53
  %v75 = vunpack.c.l.b16 %v31
  %v76 = vunpack.c.l.b16 %v32
  %v77 = vunpack.c.l.b16 %v33
  %v78 = vunpack.c.l.b16 %v34
  %v79 = vunpack.c.l.b16 %v35
  %v80 = vunpack.c.l.b16 %v36
  %v81 = vunpack.c.l.b16 %v37
  %v82 = vunpack.c.l.b16 %v38
  %v83 = vunpack.c.l.b16 %v39
  %v84 = vunpack.c.l.b16 %v40
  %v85 = vunpack.c.l.b16 %v41
  %v86 = vunpack.c.l.b16 %v42
  %v87 = vunpack.c.l.b16 %v43
  %v88 = vunpack.c.l.b16 %v44
  %v89 = vunpack.c.l.b16 %v45
  %v90 = vunpack.c.l.b16 %v46
  %v91 = vpack.c.b16 %v76, %v75
  %v92 = vpack.c.b16 %v78, %v77
  %v93 = vpack.c.b16 %v80, %v79
  %v94 = vpack.c.b16 %v82, %v81
  %v95 = vpack.c.b16 %v84, %v83
  %v96 = vpack.c.b16 %v86, %v85
  %v97 = vpack.c.b16 %v88, %v87
  %v98 = vpack.c.b16 %v90, %v89
  %107 = vmatprep.subr.bf16.mxu0 0
  %108 = vmatpush1.bf16.msra.mxu0 %v91
  %109 = vmatprep.subr.bf16.mxu0 0
  %110 = vmatpush1.bf16.msra.mxu0 %v92
  %111 = vmatprep.subr.bf16.mxu0 0
  %112 = vmatpush1.bf16.msra.mxu0 %v93
  %113 = vmatprep.subr.bf16.mxu0 0
  %114 = vmatpush1.bf16.msra.mxu0 %v94
  %115 = vmatprep.subr.bf16.mxu0 0
  %116 = vmatpush1.bf16.msra.mxu0 %v95
  %117 = vmatprep.subr.bf16.mxu0 0
  %118 = vmatpush1.bf16.msra.mxu0 %v96
  %119 = vmatprep.subr.bf16.mxu0 0
  %120 = vmatpush1.bf16.msra.mxu0 %v97
  %121 = vmatprep.subr.bf16.mxu0 0
  %122 = vmatpush1.bf16.msra.mxu0 %v98
  %123 = vmatprep.subr.bf16.mxu0 0
  %124 = vmatpush1.bf16.msra.mxu0 0
  %125 = vmatprep.subr.bf16.mxu0 0
  %126 = vmatpush1.bf16.msra.mxu0 0
  %127 = vmatprep.subr.bf16.mxu0 0
  %128 = vmatpush1.bf16.msra.mxu0 0
  %129 = vmatprep.subr.bf16.mxu0 0
  %130 = vmatpush1.bf16.msra.mxu0 0
  %131 = vmatprep.subr.bf16.mxu0 0
  %132 = vmatpush1.bf16.msra.mxu0 0
  %133 = vmatprep.subr.bf16.mxu0 0
  %134 = vmatpush1.bf16.msra.mxu0 0
  %135 = vmatprep.subr.bf16.mxu0 0
  %136 = vmatpush1.bf16.msra.mxu0 0
  %137 = vmatprep.subr.bf16.mxu0 0
  %138 = vmatpush1.bf16.msra.mxu0 0
  %139 = vmatprep.mubr.bf16.mxu0 0
  %140 = vmatmul.mubr.bf16.gmra.mrb[0].mxu0 %v55
  %v141 = vpop.f32.mrb[0].mxu0
  %v142 = vadd.f32 0.0, %v141
  %v143 = vpop.f32.mrb[0].mxu0
  %v144 = vpop.f32.mrb[0].mxu0
  %v145 = vadd.f32 0.0, %v144
  %v146 = vpop.f32.mrb[0].mxu0
  %147 = vmatprep.mubr.bf16.mxu0 0
  %148 = vmatmul.mubr.bf16.gmra.mrb[0].mxu0 %v56
  %v149 = vpop.f32.mrb[0].mxu0
  %v150 = vadd.f32 0.0, %v149
  %v151 = vpop.f32.mrb[0].mxu0
  %v152 = vpop.f32.mrb[0].mxu0
  %v153 = vadd.f32 0.0, %v152
  %v154 = vpop.f32.mrb[0].mxu0
  %155 = vdwg.mxu0
  %v156 = vadd.f32 %v23, %v142
  %v157 = vadd.f32 %v24, %v145
  %v158 = vadd.f32 %v25, %v150
  %v159 = vadd.f32 %v26, %v153
  %160 = vst [vmem:[#allocation2] sm:$0xff] %v156
  %161 = vst [vmem:[#allocation2 + $0x8] sm:$0xff] %v157
  %162 = vst [vmem:[#allocation2 + $0x10] sm:$0xff] %v158
  %163 = vst [vmem:[#allocation2 + $0x18] sm:$0xff] %v159
  // Predicated region
  $region18: #{vitvqgan_forward.36} parent=0 // pred_check
    %p164 = pneg %p15
  $region19: #{vitvqgan_forward.36} parent=0 // pred_check_branch
    %166 = sbr.rel (%p164) target = $region21
  $region20: #{vitvqgan_forward.36} parent=0 // pred_region
    %v167 = vld [vmem:[#allocation2] sm:$0xff]
    %v168 = vld [vmem:[#allocation2 + $0x8] sm:$0xff]
    %v169 = vld [vmem:[#allocation2 + $0x10] sm:$0xff]
    %v170 = vld [vmem:[#allocation2 + $0x18] sm:$0xff]
    %v171 = vld [vmem:[%s2] sm:$0x1]
    %v173 = vlaneseq
    %v174 = vshrl.u32 %v173, 7
    %v175 = vsub.s32 0, %v174
    %v176 = vrot.slane %v171, %v175
    %v178 = vadd.f32 %v167, %v176
    %v179 = vadd.f32 %v168, %v176
    %v180 = vadd.f32 %v169, %v176
    %v181 = vadd.f32 %v170, %v176
    %v182 = vpack.c.bf16 %v179, %v178
    %v183 = vpack.c.bf16 %v181, %v180
    %v186 = vunpack.c.l.b16 %v182
    %v187 = vunpack.c.h.b16 %v182
    %v188 = vunpack.c.l.b16 %v183
    %v189 = vunpack.c.h.b16 %v183
    %v190 = vpack.c.b16 %v186, %v186
    %v191 = vpack.c.b16 %v187, %v187
    %v192 = vpack.c.b16 %v188, %v188
    %v193 = vpack.c.b16 %v189, %v189
    %198 = vst [vmem:[%s3] sm:$0xf] %v190
    %199 = vst [vmem:[%s3 + $0x4] sm:$0xf] %v191
    %200 = vst [vmem:[%s3 + $0x8] sm:$0xf] %v192
    %201 = vst [vmem:[%s3 + $0xc] sm:$0xf] %v193
  $region21: #{vitvqgan_forward.36} parent=0 // pred_fallthru
    _
  // Predicated region
  $region22: #{vitvqgan_forward.36} parent=0 // pred_check
    _
  $region23: #{vitvqgan_forward.36} parent=0 // pred_check_branch
    %203 = sbr.rel (0) target = $region25
  $region24: #{vitvqgan_forward.36} parent=0 // pred_region
    _
  $region25: #{vitvqgan_forward.36} parent=0 // pred_fallthru
    _
  // Predicated region
  $region26: #{vitvqgan_forward.36} parent=0 // pred_check
    _
  $region27: #{vitvqgan_forward.36} parent=0 // pred_check_branch
    %205 = sbr.rel (0) target = $region29
  $region28: #{vitvqgan_forward.36} parent=0 // pred_region
    _
  $region29: #{vitvqgan_forward.36} parent=0 // pred_fallthru
    _

// kernel: vitvqgan_forward.38
$region0: #{vitvqgan_forward.38}
  #allocation0 [shape = 'u32[]', space=smem, size = 0x4, offset = 0x4, fixed_abs, tag = 'smem constant byte address 0x4 - core index']
  #allocation1 [shape = 'u32[144,128]{1,0:T(1,128)}', space=vmem, size = 0x12000, scoped, tag = 'internal scratch']
  #allocation2 [shape = 'f32[32,256]{1,0:T(8,128)}', space=vmem, size = 0x8000, scoped, tag = 'scratch operand']
  %s0 = inlined_call_operand.vmem [shape: bf16[32,128], index: 0, kind: input, shape index: {}]
  %s1 = inlined_call_operand.vmem [shape: bf16[128,256], index: 1, kind: input, shape index: {}]
  %s2 = inlined_call_operand.vmem [shape: f32[1,256], index: 2, kind: input, shape index: {}]
  %s3 = inlined_call_operand.vmem [shape: bf16[32,256], index: 3, kind: output, shape index: {}]
  %s4 = sld [smem:[#allocation0]]
  $region30: #{vitvqgan_forward.38} parent=0
    _
  %s6 = ssub.s32 1, %s4
  %s7 = scalar_select 0, %s6, %s4
  // Predicated region
  $region2: #{vitvqgan_forward.38} parent=0 // pred_check
    _
  $region3: #{vitvqgan_forward.38} parent=0 // pred_check_branch
    %9 = sbr.rel (0) target = $region5
  $region4: #{vitvqgan_forward.38} parent=0 // pred_region
    _
  $region5: #{vitvqgan_forward.38} parent=0 // pred_fallthru
    _
  // Predicated region
  $region6: #{vitvqgan_forward.38} parent=0 // pred_check
    _
  $region7: #{vitvqgan_forward.38} parent=0 // pred_check_branch
    %11 = sbr.rel (0) target = $region9
  $region8: #{vitvqgan_forward.38} parent=0 // pred_region
    _
  $region9: #{vitvqgan_forward.38} parent=0 // pred_fallthru
    _
  // Predicated region
  $region10: #{vitvqgan_forward.38} parent=0 // pred_check
    _
  $region11: #{vitvqgan_forward.38} parent=0 // pred_check_branch
    %13 = sbr.rel (0) target = $region13
  $region12: #{vitvqgan_forward.38} parent=0 // pred_region
    _
  $region13: #{vitvqgan_forward.38} parent=0 // pred_fallthru
    _
  %p15 = scmp.eq.s32.totalorder 0, 0
  // Predicated region
  $region14: #{vitvqgan_forward.38} parent=0 // pred_check
    %p16 = pneg %p15
  $region15: #{vitvqgan_forward.38} parent=0 // pred_check_branch
    %18 = sbr.rel (%p16) target = $region17
  $region16: #{vitvqgan_forward.38} parent=0 // pred_region
    %19 = vst [vmem:[#allocation2] sm:$0xff] 0.0
    %20 = vst [vmem:[#allocation2 + $0x8] sm:$0xff] 0.0
    %21 = vst [vmem:[#allocation2 + $0x10] sm:$0xff] 0.0
    %22 = vst [vmem:[#allocation2 + $0x18] sm:$0xff] 0.0
    %23 = vst [vmem:[#allocation2 + $0x20] sm:$0xff] 0.0
    %24 = vst [vmem:[#allocation2 + $0x28] sm:$0xff] 0.0
    %25 = vst [vmem:[#allocation2 + $0x30] sm:$0xff] 0.0
    %26 = vst [vmem:[#allocation2 + $0x38] sm:$0xff] 0.0
  $region17: #{vitvqgan_forward.38} parent=0 // pred_fallthru
    _
  %v27 = vld [vmem:[#allocation2] sm:$0xff]
  %v28 = vld [vmem:[#allocation2 + $0x8] sm:$0xff]
  %v29 = vld [vmem:[#allocation2 + $0x10] sm:$0xff]
  %v30 = vld [vmem:[#allocation2 + $0x18] sm:$0xff]
  %v31 = vld [vmem:[#allocation2 + $0x20] sm:$0xff]
  %v32 = vld [vmem:[#allocation2 + $0x28] sm:$0xff]
  %v33 = vld [vmem:[#allocation2 + $0x30] sm:$0xff]
  %v34 = vld [vmem:[#allocation2 + $0x38] sm:$0xff]
  %v35 = vld [vmem:[%s0] sm:$0xf]
  %v36 = vld [vmem:[%s0 + $0x4] sm:$0xf]
  %v37 = vld [vmem:[%s0 + $0x8] sm:$0xf]
  %v38 = vld [vmem:[%s0 + $0xc] sm:$0xf]
  %v39 = vld [vmem:[%s1] sm:$0xff]
  %v40 = vld [vmem:[%s1 + $0x8] sm:$0xff]
  %v41 = vld [vmem:[%s1 + $0x10] sm:$0xff]
  %v42 = vld [vmem:[%s1 + $0x18] sm:$0xff]
  %v43 = vld [vmem:[%s1 + $0x20] sm:$0xff]
  %v44 = vld [vmem:[%s1 + $0x28] sm:$0xff]
  %v45 = vld [vmem:[%s1 + $0x30] sm:$0xff]
  %v46 = vld [vmem:[%s1 + $0x38] sm:$0xff]
  %v47 = vld [vmem:[%s1 + $0x40] sm:$0xff]
  %v48 = vld [vmem:[%s1 + $0x48] sm:$0xff]
  %v49 = vld [vmem:[%s1 + $0x50] sm:$0xff]
  %v50 = vld [vmem:[%s1 + $0x58] sm:$0xff]
  %v51 = vld [vmem:[%s1 + $0x60] sm:$0xff]
  %v52 = vld [vmem:[%s1 + $0x68] sm:$0xff]
  %v53 = vld [vmem:[%s1 + $0x70] sm:$0xff]
  %v54 = vld [vmem:[%s1 + $0x78] sm:$0xff]
  %v59 = vunpack.c.l.b16 %v35
  %v60 = vunpack.c.l.b16 %v36
  %v61 = vunpack.c.l.b16 %v37
  %v62 = vunpack.c.l.b16 %v38
  %v63 = vpack.c.b16 %v60, %v59
  %v64 = vpack.c.b16 %v62, %v61
  %v83 = vunpack.c.l.b16 %v39
  %v84 = vunpack.c.h.b16 %v39
  %v85 = vunpack.c.l.b16 %v40
  %v86 = vunpack.c.h.b16 %v40
  %v87 = vunpack.c.l.b16 %v41
  %v88 = vunpack.c.h.b16 %v41
  %v89 = vunpack.c.l.b16 %v42
  %v90 = vunpack.c.h.b16 %v42
  %v91 = vunpack.c.l.b16 %v43
  %v92 = vunpack.c.h.b16 %v43
  %v93 = vunpack.c.l.b16 %v44
  %v94 = vunpack.c.h.b16 %v44
  %v95 = vunpack.c.l.b16 %v45
  %v96 = vunpack.c.h.b16 %v45
  %v97 = vunpack.c.l.b16 %v46
  %v98 = vunpack.c.h.b16 %v46
  %v99 = vunpack.c.l.b16 %v47
  %v100 = vunpack.c.h.b16 %v47
  %v101 = vunpack.c.l.b16 %v48
  %v102 = vunpack.c.h.b16 %v48
  %v103 = vunpack.c.l.b16 %v49
  %v104 = vunpack.c.h.b16 %v49
  %v105 = vunpack.c.l.b16 %v50
  %v106 = vunpack.c.h.b16 %v50
  %v107 = vunpack.c.l.b16 %v51
  %v108 = vunpack.c.h.b16 %v51
  %v109 = vunpack.c.l.b16 %v52
  %v110 = vunpack.c.h.b16 %v52
  %v111 = vunpack.c.l.b16 %v53
  %v112 = vunpack.c.h.b16 %v53
  %v113 = vunpack.c.l.b16 %v54
  %v114 = vunpack.c.h.b16 %v54
  %v115 = vpack.c.b16 %v85, %v83
  %v116 = vpack.c.b16 %v86, %v84
  %v117 = vpack.c.b16 %v89, %v87
  %v118 = vpack.c.b16 %v90, %v88
  %v119 = vpack.c.b16 %v93, %v91
  %v120 = vpack.c.b16 %v94, %v92
  %v121 = vpack.c.b16 %v97, %v95
  %v122 = vpack.c.b16 %v98, %v96
  %v123 = vpack.c.b16 %v101, %v99
  %v124 = vpack.c.b16 %v102, %v100
  %v125 = vpack.c.b16 %v105, %v103
  %v126 = vpack.c.b16 %v106, %v104
  %v127 = vpack.c.b16 %v109, %v107
  %v128 = vpack.c.b16 %v110, %v108
  %v129 = vpack.c.b16 %v113, %v111
  %v130 = vpack.c.b16 %v114, %v112
  %147 = vmatprep.subr.bf16.mxu0 %v116
  %148 = vmatpush1.bf16.msra.mxu0 %v115
  %149 = vmatprep.subr.bf16.mxu0 %v118
  %150 = vmatpush1.bf16.msra.mxu0 %v117
  %151 = vmatprep.subr.bf16.mxu0 %v120
  %152 = vmatpush1.bf16.msra.mxu0 %v119
  %153 = vmatprep.subr.bf16.mxu0 %v122
  %154 = vmatpush1.bf16.msra.mxu0 %v121
  %155 = vmatprep.subr.bf16.mxu0 %v124
  %156 = vmatpush1.bf16.msra.mxu0 %v123
  %157 = vmatprep.subr.bf16.mxu0 %v126
  %158 = vmatpush1.bf16.msra.mxu0 %v125
  %159 = vmatprep.subr.bf16.mxu0 %v128
  %160 = vmatpush1.bf16.msra.mxu0 %v127
  %161 = vmatprep.subr.bf16.mxu0 %v130
  %162 = vmatpush1.bf16.msra.mxu0 %v129
  %163 = vmatprep.subr.bf16.mxu0 0
  %164 = vmatpush1.bf16.msra.mxu0 0
  %165 = vmatprep.subr.bf16.mxu0 0
  %166 = vmatpush1.bf16.msra.mxu0 0
  %167 = vmatprep.subr.bf16.mxu0 0
  %168 = vmatpush1.bf16.msra.mxu0 0
  %169 = vmatprep.subr.bf16.mxu0 0
  %170 = vmatpush1.bf16.msra.mxu0 0
  %171 = vmatprep.subr.bf16.mxu0 0
  %172 = vmatpush1.bf16.msra.mxu0 0
  %173 = vmatprep.subr.bf16.mxu0 0
  %174 = vmatpush1.bf16.msra.mxu0 0
  %175 = vmatprep.subr.bf16.mxu0 0
  %176 = vmatpush1.bf16.msra.mxu0 0
  %177 = vmatprep.subr.bf16.mxu0 0
  %178 = vmatpush1.bf16.msra.mxu0 0
  %179 = vmatprep.mubr.bf16.mxu0 0
  %180 = vmatmul.mubr.bf16.gmra.mrb[0].mxu0 %v63
  %v181 = vpop.f32.mrb[0].mxu0
  %v182 = vadd.f32 0.0, %v181
  %v183 = vpop.f32.mrb[0].mxu0
  %v184 = vadd.f32 0.0, %v183
  %v185 = vpop.f32.mrb[0].mxu0
  %v186 = vadd.f32 0.0, %v185
  %v187 = vpop.f32.mrb[0].mxu0
  %v188 = vadd.f32 0.0, %v187
  %189 = vmatprep.mubr.bf16.mxu0 0
  %190 = vmatmul.mubr.bf16.gmra.mrb[0].mxu0 %v64
  %v191 = vpop.f32.mrb[0].mxu0
  %v192 = vadd.f32 0.0, %v191
  %v193 = vpop.f32.mrb[0].mxu0
  %v194 = vadd.f32 0.0, %v193
  %v195 = vpop.f32.mrb[0].mxu0
  %v196 = vadd.f32 0.0, %v195
  %v197 = vpop.f32.mrb[0].mxu0
  %v198 = vadd.f32 0.0, %v197
  %199 = vdwg.mxu0
  %v200 = vadd.f32 %v27, %v182
  %v201 = vadd.f32 %v28, %v184
  %v202 = vadd.f32 %v29, %v186
  %v203 = vadd.f32 %v30, %v188
  %v204 = vadd.f32 %v31, %v192
  %v205 = vadd.f32 %v32, %v194
  %v206 = vadd.f32 %v33, %v196
  %v207 = vadd.f32 %v34, %v198
  %208 = vst [vmem:[#allocation2] sm:$0xff] %v200
  %209 = vst [vmem:[#allocation2 + $0x8] sm:$0xff] %v201
  %210 = vst [vmem:[#allocation2 + $0x10] sm:$0xff] %v202
  %211 = vst [vmem:[#allocation2 + $0x18] sm:$0xff] %v203
  %212 = vst [vmem:[#allocation2 + $0x20] sm:$0xff] %v204
  %213 = vst [vmem:[#allocation2 + $0x28] sm:$0xff] %v205
  %214 = vst [vmem:[#allocation2 + $0x30] sm:$0xff] %v206
  %215 = vst [vmem:[#allocation2 + $0x38] sm:$0xff] %v207
  // Predicated region
  $region18: #{vitvqgan_forward.38} parent=0 // pred_check
    %p216 = pneg %p15
  $region19: #{vitvqgan_forward.38} parent=0 // pred_check_branch
    %218 = sbr.rel (%p216) target = $region21
  $region20: #{vitvqgan_forward.38} parent=0 // pred_region
    %v219 = vld [vmem:[#allocation2] sm:$0xff]
    %v220 = vld [vmem:[#allocation2 + $0x8] sm:$0xff]
    %v221 = vld [vmem:[#allocation2 + $0x10] sm:$0xff]
    %v222 = vld [vmem:[#allocation2 + $0x18] sm:$0xff]
    %v223 = vld [vmem:[#allocation2 + $0x20] sm:$0xff]
    %v224 = vld [vmem:[#allocation2 + $0x28] sm:$0xff]
    %v225 = vld [vmem:[#allocation2 + $0x30] sm:$0xff]
    %v226 = vld [vmem:[#allocation2 + $0x38] sm:$0xff]
    %v227 = vld [vmem:[%s2] sm:$0x3]
    %v229 = vlaneseq
    %v230 = vshrl.u32 %v229, 7
    %v231 = vsub.s32 0, %v230
    %v232 = vrot.slane %v227, %v231
    %v233 = vlaneseq
    %v234 = vshrl.u32 %v233, 7
    %v235 = vsub.s32 1, %v234
    %v236 = vrot.slane %v227, %v235
    %v239 = vadd.f32 %v219, %v232
    %v240 = vadd.f32 %v220, %v236
    %v241 = vadd.f32 %v221, %v232
    %v242 = vadd.f32 %v222, %v236
    %v243 = vadd.f32 %v223, %v232
    %v244 = vadd.f32 %v224, %v236
    %v245 = vadd.f32 %v225, %v232
    %v246 = vadd.f32 %v226, %v236
    %v247 = vpack.c.bf16 %v241, %v239
    %v248 = vpack.c.bf16 %v242, %v240
    %v249 = vpack.c.bf16 %v245, %v243
    %v250 = vpack.c.bf16 %v246, %v244
    %v255 = vunpack.c.l.b16 %v247
    %v256 = vunpack.c.l.b16 %v248
    %v257 = vunpack.c.h.b16 %v247
    %v258 = vunpack.c.h.b16 %v248
    %v259 = vunpack.c.l.b16 %v249
    %v260 = vunpack.c.l.b16 %v250
    %v261 = vunpack.c.h.b16 %v249
    %v262 = vunpack.c.h.b16 %v250
    %v263 = vpack.c.b16 %v256, %v255
    %v264 = vpack.c.b16 %v258, %v257
    %v265 = vpack.c.b16 %v260, %v259
    %v266 = vpack.c.b16 %v262, %v261
    %271 = vst [vmem:[%s3] sm:$0xff] %v263
    %272 = vst [vmem:[%s3 + $0x8] sm:$0xff] %v264
    %273 = vst [vmem:[%s3 + $0x10] sm:$0xff] %v265
    %274 = vst [vmem:[%s3 + $0x18] sm:$0xff] %v266
  $region21: #{vitvqgan_forward.38} parent=0 // pred_fallthru
    _
  // Predicated region
  $region22: #{vitvqgan_forward.38} parent=0 // pred_check
    _
  $region23: #{vitvqgan_forward.38} parent=0 // pred_check_branch
    %276 = sbr.rel (0) target = $region25
  $region24: #{vitvqgan_forward.38} parent=0 // pred_region
    _
  $region25: #{vitvqgan_forward.38} parent=0 // pred_fallthru
    _
  // Predicated region
  $region26: #{vitvqgan_forward.38} parent=0 // pred_check
    _
  $region27: #{vitvqgan_forward.38} parent=0 // pred_check_branch
    %278 = sbr.rel (0) target = $region29
  $region28: #{vitvqgan_forward.38} parent=0 // pred_region
    _
  $region29: #{vitvqgan_forward.38} parent=0 // pred_fallthru
    _

// kernel: vitvqgan_forward.40
$region0: #{vitvqgan_forward.40}
  #allocation0 [shape = 'u32[]', space=smem, size = 0x4, offset = 0x4, fixed_abs, tag = 'smem constant byte address 0x4 - core index']
  #allocation1 [shape = 'u32[144,128]{1,0:T(1,128)}', space=vmem, size = 0x12000, scoped, tag = 'internal scratch']
  #allocation2 [shape = 'f32[32,128]{1,0:T(8,128)}', space=vmem, size = 0x4000, scoped, tag = 'scratch operand']
  %s0 = inlined_call_operand.vmem [shape: bf16[32,128], index: 0, kind: input, shape index: {}]
  %s1 = inlined_call_operand.vmem [shape: bf16[128,128], index: 1, kind: input, shape index: {}]
  %s2 = inlined_call_operand.vmem [shape: f32[1,128], index: 2, kind: input, shape index: {}]
  %s3 = inlined_call_operand.vmem [shape: bf16[32,128], index: 3, kind: input, shape index: {}]
  %s4 = inlined_call_operand.vmem [shape: bf16[32,128], index: 4, kind: output, shape index: {}]
  %s5 = sld [smem:[#allocation0]]
  $region34: #{vitvqgan_forward.40} parent=0
    _
  %s7 = ssub.s32 1, %s5
  %s8 = scalar_select 0, %s7, %s5
  // Predicated region
  $region2: #{vitvqgan_forward.40} parent=0 // pred_check
    _
  $region3: #{vitvqgan_forward.40} parent=0 // pred_check_branch
    %10 = sbr.rel (0) target = $region5
  $region4: #{vitvqgan_forward.40} parent=0 // pred_region
    _
  $region5: #{vitvqgan_forward.40} parent=0 // pred_fallthru
    _
  // Predicated region
  $region6: #{vitvqgan_forward.40} parent=0 // pred_check
    _
  $region7: #{vitvqgan_forward.40} parent=0 // pred_check_branch
    %12 = sbr.rel (0) target = $region9
  $region8: #{vitvqgan_forward.40} parent=0 // pred_region
    _
  $region9: #{vitvqgan_forward.40} parent=0 // pred_fallthru
    _
  // Predicated region
  $region10: #{vitvqgan_forward.40} parent=0 // pred_check
    _
  $region11: #{vitvqgan_forward.40} parent=0 // pred_check_branch
    %14 = sbr.rel (0) target = $region13
  $region12: #{vitvqgan_forward.40} parent=0 // pred_region
    _
  $region13: #{vitvqgan_forward.40} parent=0 // pred_fallthru
    _
  // Predicated region
  $region14: #{vitvqgan_forward.40} parent=0 // pred_check
    _
  $region15: #{vitvqgan_forward.40} parent=0 // pred_check_branch
    %16 = sbr.rel (0) target = $region17
  $region16: #{vitvqgan_forward.40} parent=0 // pred_region
    _
  $region17: #{vitvqgan_forward.40} parent=0 // pred_fallthru
    _
  %p18 = scmp.eq.s32.totalorder 0, 0
  // Predicated region
  $region18: #{vitvqgan_forward.40} parent=0 // pred_check
    %p19 = pneg %p18
  $region19: #{vitvqgan_forward.40} parent=0 // pred_check_branch
    %21 = sbr.rel (%p19) target = $region21
  $region20: #{vitvqgan_forward.40} parent=0 // pred_region
    %22 = vst [vmem:[#allocation2] sm:$0xff] 0.0
    %23 = vst [vmem:[#allocation2 + $0x8] sm:$0xff] 0.0
    %24 = vst [vmem:[#allocation2 + $0x10] sm:$0xff] 0.0
    %25 = vst [vmem:[#allocation2 + $0x18] sm:$0xff] 0.0
  $region21: #{vitvqgan_forward.40} parent=0 // pred_fallthru
    _
  %v26 = vld [vmem:[#allocation2] sm:$0xff]
  %v27 = vld [vmem:[#allocation2 + $0x8] sm:$0xff]
  %v28 = vld [vmem:[#allocation2 + $0x10] sm:$0xff]
  %v29 = vld [vmem:[#allocation2 + $0x18] sm:$0xff]
  %v30 = vld [vmem:[%s0] sm:$0xf]
  %v31 = vld [vmem:[%s0 + $0x4] sm:$0xf]
  %v32 = vld [vmem:[%s0 + $0x8] sm:$0xf]
  %v33 = vld [vmem:[%s0 + $0xc] sm:$0xf]
  %v34 = vld [vmem:[%s1] sm:$0xf]
  %v35 = vld [vmem:[%s1 + $0x4] sm:$0xf]
  %v36 = vld [vmem:[%s1 + $0x8] sm:$0xf]
  %v37 = vld [vmem:[%s1 + $0xc] sm:$0xf]
  %v38 = vld [vmem:[%s1 + $0x10] sm:$0xf]
  %v39 = vld [vmem:[%s1 + $0x14] sm:$0xf]
  %v40 = vld [vmem:[%s1 + $0x18] sm:$0xf]
  %v41 = vld [vmem:[%s1 + $0x1c] sm:$0xf]
  %v42 = vld [vmem:[%s1 + $0x20] sm:$0xf]
  %v43 = vld [vmem:[%s1 + $0x24] sm:$0xf]
  %v44 = vld [vmem:[%s1 + $0x28] sm:$0xf]
  %v45 = vld [vmem:[%s1 + $0x2c] sm:$0xf]
  %v46 = vld [vmem:[%s1 + $0x30] sm:$0xf]
  %v47 = vld [vmem:[%s1 + $0x34] sm:$0xf]
  %v48 = vld [vmem:[%s1 + $0x38] sm:$0xf]
  %v49 = vld [vmem:[%s1 + $0x3c] sm:$0xf]
  %v54 = vunpack.c.l.b16 %v30
  %v55 = vunpack.c.l.b16 %v31
  %v56 = vunpack.c.l.b16 %v32
  %v57 = vunpack.c.l.b16 %v33
  %v58 = vpack.c.b16 %v55, %v54
  %v59 = vpack.c.b16 %v57, %v56
  %v78 = vunpack.c.l.b16 %v34
  %v79 = vunpack.c.l.b16 %v35
  %v80 = vunpack.c.l.b16 %v36
  %v81 = vunpack.c.l.b16 %v37
  %v82 = vunpack.c.l.b16 %v38
  %v83 = vunpack.c.l.b16 %v39
  %v84 = vunpack.c.l.b16 %v40
  %v85 = vunpack.c.l.b16 %v41
  %v86 = vunpack.c.l.b16 %v42
  %v87 = vunpack.c.l.b16 %v43
  %v88 = vunpack.c.l.b16 %v44
  %v89 = vunpack.c.l.b16 %v45
  %v90 = vunpack.c.l.b16 %v46
  %v91 = vunpack.c.l.b16 %v47
  %v92 = vunpack.c.l.b16 %v48
  %v93 = vunpack.c.l.b16 %v49
  %v94 = vpack.c.b16 %v79, %v78
  %v95 = vpack.c.b16 %v81, %v80
  %v96 = vpack.c.b16 %v83, %v82
  %v97 = vpack.c.b16 %v85, %v84
  %v98 = vpack.c.b16 %v87, %v86
  %v99 = vpack.c.b16 %v89, %v88
  %v100 = vpack.c.b16 %v91, %v90
  %v101 = vpack.c.b16 %v93, %v92
  %110 = vmatprep.subr.bf16.mxu0 0
  %111 = vmatpush1.bf16.msra.mxu0 %v94
  %112 = vmatprep.subr.bf16.mxu0 0
  %113 = vmatpush1.bf16.msra.mxu0 %v95
  %114 = vmatprep.subr.bf16.mxu0 0
  %115 = vmatpush1.bf16.msra.mxu0 %v96
  %116 = vmatprep.subr.bf16.mxu0 0
  %117 = vmatpush1.bf16.msra.mxu0 %v97
  %118 = vmatprep.subr.bf16.mxu0 0
  %119 = vmatpush1.bf16.msra.mxu0 %v98
  %120 = vmatprep.subr.bf16.mxu0 0
  %121 = vmatpush1.bf16.msra.mxu0 %v99
  %122 = vmatprep.subr.bf16.mxu0 0
  %123 = vmatpush1.bf16.msra.mxu0 %v100
  %124 = vmatprep.subr.bf16.mxu0 0
  %125 = vmatpush1.bf16.msra.mxu0 %v101
  %126 = vmatprep.subr.bf16.mxu0 0
  %127 = vmatpush1.bf16.msra.mxu0 0
  %128 = vmatprep.subr.bf16.mxu0 0
  %129 = vmatpush1.bf16.msra.mxu0 0
  %130 = vmatprep.subr.bf16.mxu0 0
  %131 = vmatpush1.bf16.msra.mxu0 0
  %132 = vmatprep.subr.bf16.mxu0 0
  %133 = vmatpush1.bf16.msra.mxu0 0
  %134 = vmatprep.subr.bf16.mxu0 0
  %135 = vmatpush1.bf16.msra.mxu0 0
  %136 = vmatprep.subr.bf16.mxu0 0
  %137 = vmatpush1.bf16.msra.mxu0 0
  %138 = vmatprep.subr.bf16.mxu0 0
  %139 = vmatpush1.bf16.msra.mxu0 0
  %140 = vmatprep.subr.bf16.mxu0 0
  %141 = vmatpush1.bf16.msra.mxu0 0
  %142 = vmatprep.mubr.bf16.mxu0 0
  %143 = vmatmul.mubr.bf16.gmra.mrb[0].mxu0 %v58
  %v144 = vpop.f32.mrb[0].mxu0
  %v145 = vadd.f32 0.0, %v144
  %v146 = vpop.f32.mrb[0].mxu0
  %v147 = vpop.f32.mrb[0].mxu0
  %v148 = vadd.f32 0.0, %v147
  %v149 = vpop.f32.mrb[0].mxu0
  %150 = vmatprep.mubr.bf16.mxu0 0
  %151 = vmatmul.mubr.bf16.gmra.mrb[0].mxu0 %v59
  %v152 = vpop.f32.mrb[0].mxu0
  %v153 = vadd.f32 0.0, %v152
  %v154 = vpop.f32.mrb[0].mxu0
  %v155 = vpop.f32.mrb[0].mxu0
  %v156 = vadd.f32 0.0, %v155
  %v157 = vpop.f32.mrb[0].mxu0
  %158 = vdwg.mxu0
  %v159 = vadd.f32 %v26, %v145
  %v160 = vadd.f32 %v27, %v148
  %v161 = vadd.f32 %v28, %v153
  %v162 = vadd.f32 %v29, %v156
  %163 = vst [vmem:[#allocation2] sm:$0xff] %v159
  %164 = vst [vmem:[#allocation2 + $0x8] sm:$0xff] %v160
  %165 = vst [vmem:[#allocation2 + $0x10] sm:$0xff] %v161
  %166 = vst [vmem:[#allocation2 + $0x18] sm:$0xff] %v162
  // Predicated region
  $region22: #{vitvqgan_forward.40} parent=0 // pred_check
    %p167 = pneg %p18
  $region23: #{vitvqgan_forward.40} parent=0 // pred_check_branch
    %169 = sbr.rel (%p167) target = $region25
  $region24: #{vitvqgan_forward.40} parent=0 // pred_region
    %v170 = vld [vmem:[#allocation2] sm:$0xff]
    %v171 = vld [vmem:[#allocation2 + $0x8] sm:$0xff]
    %v172 = vld [vmem:[#allocation2 + $0x10] sm:$0xff]
    %v173 = vld [vmem:[#allocation2 + $0x18] sm:$0xff]
    %v174 = vld [vmem:[%s2] sm:$0x1]
    %v176 = vlaneseq
    %v177 = vshrl.u32 %v176, 7
    %v178 = vsub.s32 0, %v177
    %v179 = vrot.slane %v174, %v178
    %v181 = vadd.f32 %v170, %v179
    %v182 = vadd.f32 %v171, %v179
    %v183 = vadd.f32 %v172, %v179
    %v184 = vadd.f32 %v173, %v179
    %v185 = vld [vmem:[%s3] sm:$0xf]
    %v186 = vld [vmem:[%s3 + $0x4] sm:$0xf]
    %v187 = vld [vmem:[%s3 + $0x8] sm:$0xf]
    %v188 = vld [vmem:[%s3 + $0xc] sm:$0xf]
    %v189 = vunpack.c.l.bf16 %v185
    %v190 = vunpack.c.l.bf16 %v186
    %v191 = vunpack.c.l.bf16 %v187
    %v192 = vunpack.c.l.bf16 %v188
    %v193 = vadd.f32 %v181, %v189
    %v194 = vadd.f32 %v182, %v190
    %v195 = vadd.f32 %v183, %v191
    %v196 = vadd.f32 %v184, %v192
    %v197 = vpack.c.bf16 %v194, %v193
    %v198 = vpack.c.bf16 %v196, %v195
    %v201 = vunpack.c.l.b16 %v197
    %v202 = vunpack.c.h.b16 %v197
    %v203 = vunpack.c.l.b16 %v198
    %v204 = vunpack.c.h.b16 %v198
    %v205 = vpack.c.b16 %v201, %v201
    %v206 = vpack.c.b16 %v202, %v202
    %v207 = vpack.c.b16 %v203, %v203
    %v208 = vpack.c.b16 %v204, %v204
    %213 = vst [vmem:[%s4] sm:$0xf] %v205
    %214 = vst [vmem:[%s4 + $0x4] sm:$0xf] %v206
    %215 = vst [vmem:[%s4 + $0x8] sm:$0xf] %v207
    %216 = vst [vmem:[%s4 + $0xc] sm:$0xf] %v208
  $region25: #{vitvqgan_forward.40} parent=0 // pred_fallthru
    _
  // Predicated region
  $region26: #{vitvqgan_forward.40} parent=0 // pred_check
    _
  $region27: #{vitvqgan_forward.40} parent=0 // pred_check_branch
    %218 = sbr.rel (0) target = $region29
  $region28: #{vitvqgan_forward.40} parent=0 // pred_region
    _
  $region29: #{vitvqgan_forward.40} parent=0 // pred_fallthru
    _
  // Predicated region
  $region30: #{vitvqgan_forward.40} parent=0 // pred_check
    _
  $region31: #{vitvqgan_forward.40} parent=0 // pred_check_branch
    %220 = sbr.rel (0) target = $region33
  $region32: #{vitvqgan_forward.40} parent=0 // pred_region
    _
  $region33: #{vitvqgan_forward.40} parent=0 // pred_fallthru
    _

// kernel: vitvqgan_forward.42
$region0: #{vitvqgan_forward.42}
  #allocation0 [shape = 'u32[]', space=smem, size = 0x4, offset = 0x4, fixed_abs, tag = 'smem constant byte address 0x4 - core index']
  #allocation1 [shape = 'u32[144,128]{1,0:T(1,128)}', space=vmem, size = 0x12000, scoped, tag = 'internal scratch']
  #allocation2 [shape = 'f32[32,256]{1,0:T(8,128)}', space=vmem, size = 0x8000, scoped, tag = 'scratch operand']
  %s0 = inlined_call_operand.vmem [shape: bf16[32,128], index: 0, kind: input, shape index: {}]
  %s1 = inlined_call_operand.vmem [shape: bf16[128,256], index: 1, kind: input, shape index: {}]
  %s2 = inlined_call_operand.vmem [shape: f32[1,256], index: 2, kind: input, shape index: {}]
  %s3 = inlined_call_operand.vmem [shape: bf16[32,256], index: 3, kind: output, shape index: {}]
  %s4 = sld [smem:[#allocation0]]
  $region30: #{vitvqgan_forward.42} parent=0
    _
  %s6 = ssub.s32 1, %s4
  %s7 = scalar_select 0, %s6, %s4
  // Predicated region
  $region2: #{vitvqgan_forward.42} parent=0 // pred_check
    _
  $region3: #{vitvqgan_forward.42} parent=0 // pred_check_branch
    %9 = sbr.rel (0) target = $region5
  $region4: #{vitvqgan_forward.42} parent=0 // pred_region
    _
  $region5: #{vitvqgan_forward.42} parent=0 // pred_fallthru
    _
  // Predicated region
  $region6: #{vitvqgan_forward.42} parent=0 // pred_check
    _
  $region7: #{vitvqgan_forward.42} parent=0 // pred_check_branch
    %11 = sbr.rel (0) target = $region9
  $region8: #{vitvqgan_forward.42} parent=0 // pred_region
    _
  $region9: #{vitvqgan_forward.42} parent=0 // pred_fallthru
    _
  // Predicated region
  $region10: #{vitvqgan_forward.42} parent=0 // pred_check
    _
  $region11: #{vitvqgan_forward.42} parent=0 // pred_check_branch
    %13 = sbr.rel (0) target = $region13
  $region12: #{vitvqgan_forward.42} parent=0 // pred_region
    _
  $region13: #{vitvqgan_forward.42} parent=0 // pred_fallthru
    _
  %p15 = scmp.eq.s32.totalorder 0, 0
  // Predicated region
  $region14: #{vitvqgan_forward.42} parent=0 // pred_check
    %p16 = pneg %p15
  $region15: #{vitvqgan_forward.42} parent=0 // pred_check_branch
    %18 = sbr.rel (%p16) target = $region17
  $region16: #{vitvqgan_forward.42} parent=0 // pred_region
    %19 = vst [vmem:[#allocation2] sm:$0xff] 0.0
    %20 = vst [vmem:[#allocation2 + $0x8] sm:$0xff] 0.0
    %21 = vst [vmem:[#allocation2 + $0x10] sm:$0xff] 0.0
    %22 = vst [vmem:[#allocation2 + $0x18] sm:$0xff] 0.0
    %23 = vst [vmem:[#allocation2 + $0x20] sm:$0xff] 0.0
    %24 = vst [vmem:[#allocation2 + $0x28] sm:$0xff] 0.0
    %25 = vst [vmem:[#allocation2 + $0x30] sm:$0xff] 0.0
    %26 = vst [vmem:[#allocation2 + $0x38] sm:$0xff] 0.0
  $region17: #{vitvqgan_forward.42} parent=0 // pred_fallthru
    _
  %v27 = vld [vmem:[#allocation2] sm:$0xff]
  %v28 = vld [vmem:[#allocation2 + $0x8] sm:$0xff]
  %v29 = vld [vmem:[#allocation2 + $0x10] sm:$0xff]
  %v30 = vld [vmem:[#allocation2 + $0x18] sm:$0xff]
  %v31 = vld [vmem:[#allocation2 + $0x20] sm:$0xff]
  %v32 = vld [vmem:[#allocation2 + $0x28] sm:$0xff]
  %v33 = vld [vmem:[#allocation2 + $0x30] sm:$0xff]
  %v34 = vld [vmem:[#allocation2 + $0x38] sm:$0xff]
  %v35 = vld [vmem:[%s0] sm:$0xf]
  %v36 = vld [vmem:[%s0 + $0x4] sm:$0xf]
  %v37 = vld [vmem:[%s0 + $0x8] sm:$0xf]
  %v38 = vld [vmem:[%s0 + $0xc] sm:$0xf]
  %v39 = vld [vmem:[%s1] sm:$0xff]
  %v40 = vld [vmem:[%s1 + $0x8] sm:$0xff]
  %v41 = vld [vmem:[%s1 + $0x10] sm:$0xff]
  %v42 = vld [vmem:[%s1 + $0x18] sm:$0xff]
  %v43 = vld [vmem:[%s1 + $0x20] sm:$0xff]
  %v44 = vld [vmem:[%s1 + $0x28] sm:$0xff]
  %v45 = vld [vmem:[%s1 + $0x30] sm:$0xff]
  %v46 = vld [vmem:[%s1 + $0x38] sm:$0xff]
  %v47 = vld [vmem:[%s1 + $0x40] sm:$0xff]
  %v48 = vld [vmem:[%s1 + $0x48] sm:$0xff]
  %v49 = vld [vmem:[%s1 + $0x50] sm:$0xff]
  %v50 = vld [vmem:[%s1 + $0x58] sm:$0xff]
  %v51 = vld [vmem:[%s1 + $0x60] sm:$0xff]
  %v52 = vld [vmem:[%s1 + $0x68] sm:$0xff]
  %v53 = vld [vmem:[%s1 + $0x70] sm:$0xff]
  %v54 = vld [vmem:[%s1 + $0x78] sm:$0xff]
  %v59 = vunpack.c.l.b16 %v35
  %v60 = vunpack.c.l.b16 %v36
  %v61 = vunpack.c.l.b16 %v37
  %v62 = vunpack.c.l.b16 %v38
  %v63 = vpack.c.b16 %v60, %v59
  %v64 = vpack.c.b16 %v62, %v61
  %v83 = vunpack.c.l.b16 %v39
  %v84 = vunpack.c.h.b16 %v39
  %v85 = vunpack.c.l.b16 %v40
  %v86 = vunpack.c.h.b16 %v40
  %v87 = vunpack.c.l.b16 %v41
  %v88 = vunpack.c.h.b16 %v41
  %v89 = vunpack.c.l.b16 %v42
  %v90 = vunpack.c.h.b16 %v42
  %v91 = vunpack.c.l.b16 %v43
  %v92 = vunpack.c.h.b16 %v43
  %v93 = vunpack.c.l.b16 %v44
  %v94 = vunpack.c.h.b16 %v44
  %v95 = vunpack.c.l.b16 %v45
  %v96 = vunpack.c.h.b16 %v45
  %v97 = vunpack.c.l.b16 %v46
  %v98 = vunpack.c.h.b16 %v46
  %v99 = vunpack.c.l.b16 %v47
  %v100 = vunpack.c.h.b16 %v47
  %v101 = vunpack.c.l.b16 %v48
  %v102 = vunpack.c.h.b16 %v48
  %v103 = vunpack.c.l.b16 %v49
  %v104 = vunpack.c.h.b16 %v49
  %v105 = vunpack.c.l.b16 %v50
  %v106 = vunpack.c.h.b16 %v50
  %v107 = vunpack.c.l.b16 %v51
  %v108 = vunpack.c.h.b16 %v51
  %v109 = vunpack.c.l.b16 %v52
  %v110 = vunpack.c.h.b16 %v52
  %v111 = vunpack.c.l.b16 %v53
  %v112 = vunpack.c.h.b16 %v53
  %v113 = vunpack.c.l.b16 %v54
  %v114 = vunpack.c.h.b16 %v54
  %v115 = vpack.c.b16 %v85, %v83
  %v116 = vpack.c.b16 %v86, %v84
  %v117 = vpack.c.b16 %v89, %v87
  %v118 = vpack.c.b16 %v90, %v88
  %v119 = vpack.c.b16 %v93, %v91
  %v120 = vpack.c.b16 %v94, %v92
  %v121 = vpack.c.b16 %v97, %v95
  %v122 = vpack.c.b16 %v98, %v96
  %v123 = vpack.c.b16 %v101, %v99
  %v124 = vpack.c.b16 %v102, %v100
  %v125 = vpack.c.b16 %v105, %v103
  %v126 = vpack.c.b16 %v106, %v104
  %v127 = vpack.c.b16 %v109, %v107
  %v128 = vpack.c.b16 %v110, %v108
  %v129 = vpack.c.b16 %v113, %v111
  %v130 = vpack.c.b16 %v114, %v112
  %147 = vmatprep.subr.bf16.mxu0 %v116
  %148 = vmatpush1.bf16.msra.mxu0 %v115
  %149 = vmatprep.subr.bf16.mxu0 %v118
  %150 = vmatpush1.bf16.msra.mxu0 %v117
  %151 = vmatprep.subr.bf16.mxu0 %v120
  %152 = vmatpush1.bf16.msra.mxu0 %v119
  %153 = vmatprep.subr.bf16.mxu0 %v122
  %154 = vmatpush1.bf16.msra.mxu0 %v121
  %155 = vmatprep.subr.bf16.mxu0 %v124
  %156 = vmatpush1.bf16.msra.mxu0 %v123
  %157 = vmatprep.subr.bf16.mxu0 %v126
  %158 = vmatpush1.bf16.msra.mxu0 %v125
  %159 = vmatprep.subr.bf16.mxu0 %v128
  %160 = vmatpush1.bf16.msra.mxu0 %v127
  %161 = vmatprep.subr.bf16.mxu0 %v130
  %162 = vmatpush1.bf16.msra.mxu0 %v129
  %163 = vmatprep.subr.bf16.mxu0 0
  %164 = vmatpush1.bf16.msra.mxu0 0
  %165 = vmatprep.subr.bf16.mxu0 0
  %166 = vmatpush1.bf16.msra.mxu0 0
  %167 = vmatprep.subr.bf16.mxu0 0
  %168 = vmatpush1.bf16.msra.mxu0 0
  %169 = vmatprep.subr.bf16.mxu0 0
  %170 = vmatpush1.bf16.msra.mxu0 0
  %171 = vmatprep.subr.bf16.mxu0 0
  %172 = vmatpush1.bf16.msra.mxu0 0
  %173 = vmatprep.subr.bf16.mxu0 0
  %174 = vmatpush1.bf16.msra.mxu0 0
  %175 = vmatprep.subr.bf16.mxu0 0
  %176 = vmatpush1.bf16.msra.mxu0 0
  %177 = vmatprep.subr.bf16.mxu0 0
  %178 = vmatpush1.bf16.msra.mxu0 0
  %179 = vmatprep.mubr.bf16.mxu0 0
  %180 = vmatmul.mubr.bf16.gmra.mrb[0].mxu0 %v63
  %v181 = vpop.f32.mrb[0].mxu0
  %v182 = vadd.f32 0.0, %v181
  %v183 = vpop.f32.mrb[0].mxu0
  %v184 = vadd.f32 0.0, %v183
  %v185 = vpop.f32.mrb[0].mxu0
  %v186 = vadd.f32 0.0, %v185
  %v187 = vpop.f32.mrb[0].mxu0
  %v188 = vadd.f32 0.0, %v187
  %189 = vmatprep.mubr.bf16.mxu0 0
  %190 = vmatmul.mubr.bf16.gmra.mrb[0].mxu0 %v64
  %v191 = vpop.f32.mrb[0].mxu0
  %v192 = vadd.f32 0.0, %v191
  %v193 = vpop.f32.mrb[0].mxu0
  %v194 = vadd.f32 0.0, %v193
  %v195 = vpop.f32.mrb[0].mxu0
  %v196 = vadd.f32 0.0, %v195
  %v197 = vpop.f32.mrb[0].mxu0
  %v198 = vadd.f32 0.0, %v197
  %199 = vdwg.mxu0
  %v200 = vadd.f32 %v27, %v182
  %v201 = vadd.f32 %v28, %v184
  %v202 = vadd.f32 %v29, %v186
  %v203 = vadd.f32 %v30, %v188
  %v204 = vadd.f32 %v31, %v192
  %v205 = vadd.f32 %v32, %v194
  %v206 = vadd.f32 %v33, %v196
  %v207 = vadd.f32 %v34, %v198
  %208 = vst [vmem:[#allocation2] sm:$0xff] %v200
  %209 = vst [vmem:[#allocation2 + $0x8] sm:$0xff] %v201
  %210 = vst [vmem:[#allocation2 + $0x10] sm:$0xff] %v202
  %211 = vst [vmem:[#allocation2 + $0x18] sm:$0xff] %v203
  %212 = vst [vmem:[#allocation2 + $0x20] sm:$0xff] %v204
  %213 = vst [vmem:[#allocation2 + $0x28] sm:$0xff] %v205
  %214 = vst [vmem:[#allocation2 + $0x30] sm:$0xff] %v206
  %215 = vst [vmem:[#allocation2 + $0x38] sm:$0xff] %v207
  // Predicated region
  $region18: #{vitvqgan_forward.42} parent=0 // pred_check
    %p216 = pneg %p15
  $region19: #{vitvqgan_forward.42} parent=0 // pred_check_branch
    %218 = sbr.rel (%p216) target = $region21
  $region20: #{vitvqgan_forward.42} parent=0 // pred_region
    %v219 = vld [vmem:[#allocation2] sm:$0xff]
    %v220 = vld [vmem:[#allocation2 + $0x8] sm:$0xff]
    %v221 = vld [vmem:[#allocation2 + $0x10] sm:$0xff]
    %v222 = vld [vmem:[#allocation2 + $0x18] sm:$0xff]
    %v223 = vld [vmem:[#allocation2 + $0x20] sm:$0xff]
    %v224 = vld [vmem:[#allocation2 + $0x28] sm:$0xff]
    %v225 = vld [vmem:[#allocation2 + $0x30] sm:$0xff]
    %v226 = vld [vmem:[#allocation2 + $0x38] sm:$0xff]
    %v227 = vld [vmem:[%s2] sm:$0x3]
    %v229 = vlaneseq
    %v230 = vshrl.u32 %v229, 7
    %v231 = vsub.s32 0, %v230
    %v232 = vrot.slane %v227, %v231
    %v233 = vlaneseq
    %v234 = vshrl.u32 %v233, 7
    %v235 = vsub.s32 1, %v234
    %v236 = vrot.slane %v227, %v235
    %v239 = vadd.f32 %v219, %v232
    %v240 = vadd.f32 %v220, %v236
    %v241 = vadd.f32 %v221, %v232
    %v242 = vadd.f32 %v222, %v236
    %v243 = vadd.f32 %v223, %v232
    %v244 = vadd.f32 %v224, %v236
    %v245 = vadd.f32 %v225, %v232
    %v246 = vadd.f32 %v226, %v236
    %v247 = vmul.f32 %v239, %v239
    %v248 = vmul.f32 %v240, %v240
    %v249 = vmul.f32 %v241, %v241
    %v250 = vmul.f32 %v242, %v242
    %v251 = vmul.f32 %v243, %v243
    %v252 = vmul.f32 %v244, %v244
    %v253 = vmul.f32 %v245, %v245
    %v254 = vmul.f32 %v246, %v246
    %v255 = vmul.f32 %v239, %v247
    %v256 = vmul.f32 %v240, %v248
    %v257 = vmul.f32 %v241, %v249
    %v258 = vmul.f32 %v242, %v250
    %v259 = vmul.f32 %v243, %v251
    %v260 = vmul.f32 %v244, %v252
    %v261 = vmul.f32 %v245, %v253
    %v262 = vmul.f32 %v246, %v254
    %v263 = vmul.f32 %v255, 0.044715
    %v264 = vmul.f32 %v256, 0.044715
    %v265 = vmul.f32 %v257, 0.044715
    %v266 = vmul.f32 %v258, 0.044715
    %v267 = vmul.f32 %v259, 0.044715
    %v268 = vmul.f32 %v260, 0.044715
    %v269 = vmul.f32 %v261, 0.044715
    %v270 = vmul.f32 %v262, 0.044715
    %v271 = vadd.f32 %v239, %v263
    %v272 = vadd.f32 %v240, %v264
    %v273 = vadd.f32 %v241, %v265
    %v274 = vadd.f32 %v242, %v266
    %v275 = vadd.f32 %v243, %v267
    %v276 = vadd.f32 %v244, %v268
    %v277 = vadd.f32 %v245, %v269
    %v278 = vadd.f32 %v246, %v270
    %v279 = vmul.f32 %v271, 0.7978846
    %v280 = vmul.f32 %v272, 0.7978846
    %v281 = vmul.f32 %v273, 0.7978846
    %v282 = vmul.f32 %v274, 0.7978846
    %v283 = vmul.f32 %v275, 0.7978846
    %v284 = vmul.f32 %v276, 0.7978846
    %v285 = vmul.f32 %v277, 0.7978846
    %v286 = vmul.f32 %v278, 0.7978846
    %v287 = vtanh.pop %v279
    %v288 = vtanh.pop %v280
    %v289 = vtanh.pop %v281
    %v290 = vtanh.pop %v282
    %v291 = vtanh.pop %v283
    %v292 = vtanh.pop %v284
    %v293 = vtanh.pop %v285
    %v294 = vtanh.pop %v286
    %v295 = vadd.f32 %v287, 1.0
    %v296 = vadd.f32 %v288, 1.0
    %v297 = vadd.f32 %v289, 1.0
    %v298 = vadd.f32 %v290, 1.0
    %v299 = vadd.f32 %v291, 1.0
    %v300 = vadd.f32 %v292, 1.0
    %v301 = vadd.f32 %v293, 1.0
    %v302 = vadd.f32 %v294, 1.0
    %v303 = vmul.f32 %v295, 0.5
    %v304 = vmul.f32 %v296, 0.5
    %v305 = vmul.f32 %v297, 0.5
    %v306 = vmul.f32 %v298, 0.5
    %v307 = vmul.f32 %v299, 0.5
    %v308 = vmul.f32 %v300, 0.5
    %v309 = vmul.f32 %v301, 0.5
    %v310 = vmul.f32 %v302, 0.5
    %v311 = vmul.f32 %v239, %v303
    %v312 = vmul.f32 %v240, %v304
    %v313 = vmul.f32 %v241, %v305
    %v314 = vmul.f32 %v242, %v306
    %v315 = vmul.f32 %v243, %v307
    %v316 = vmul.f32 %v244, %v308
    %v317 = vmul.f32 %v245, %v309
    %v318 = vmul.f32 %v246, %v310
    %v319 = vpack.c.bf16 %v313, %v311
    %v320 = vpack.c.bf16 %v314, %v312
    %v321 = vpack.c.bf16 %v317, %v315
    %v322 = vpack.c.bf16 %v318, %v316
    %v327 = vunpack.c.l.b16 %v319
    %v328 = vunpack.c.l.b16 %v320
    %v329 = vunpack.c.h.b16 %v319
    %v330 = vunpack.c.h.b16 %v320
    %v331 = vunpack.c.l.b16 %v321
    %v332 = vunpack.c.l.b16 %v322
    %v333 = vunpack.c.h.b16 %v321
    %v334 = vunpack.c.h.b16 %v322
    %v335 = vpack.c.b16 %v328, %v327
    %v336 = vpack.c.b16 %v330, %v329
    %v337 = vpack.c.b16 %v332, %v331
    %v338 = vpack.c.b16 %v334, %v333
    %343 = vst [vmem:[%s3] sm:$0xff] %v335
    %344 = vst [vmem:[%s3 + $0x8] sm:$0xff] %v336
    %345 = vst [vmem:[%s3 + $0x10] sm:$0xff] %v337
    %346 = vst [vmem:[%s3 + $0x18] sm:$0xff] %v338
  $region21: #{vitvqgan_forward.42} parent=0 // pred_fallthru
    _
  // Predicated region
  $region22: #{vitvqgan_forward.42} parent=0 // pred_check
    _
  $region23: #{vitvqgan_forward.42} parent=0 // pred_check_branch
    %348 = sbr.rel (0) target = $region25
  $region24: #{vitvqgan_forward.42} parent=0 // pred_region
    _
  $region25: #{vitvqgan_forward.42} parent=0 // pred_fallthru
    _
  // Predicated region
  $region26: #{vitvqgan_forward.42} parent=0 // pred_check
    _
  $region27: #{vitvqgan_forward.42} parent=0 // pred_check_branch
    %350 = sbr.rel (0) target = $region29
  $region28: #{vitvqgan_forward.42} parent=0 // pred_region
    _
  $region29: #{vitvqgan_forward.42} parent=0 // pred_fallthru
    _

// kernel: vitvqgan_forward.39
$region0: #{vitvqgan_forward.39}
  #allocation0 [shape = 'u32[]', space=smem, size = 0x4, offset = 0x4, fixed_abs, tag = 'smem constant byte address 0x4 - core index']
  #allocation1 [shape = 'u32[144,128]{1,0:T(1,128)}', space=vmem, size = 0x12000, scoped, tag = 'internal scratch']
  #allocation2 [shape = 'f32[4,16,1]{2,1,0:T(8,128)}', space=vmem, size = 0x8000, scoped, tag = 'scratch operand']
  #allocation3 [shape = 'f32[4,16,1]{2,1,0:T(8,128)}', space=vmem, size = 0x8000, scoped, tag = 'scratch operand']
  #allocation4 [shape = 'f32[4,16,128]{2,1,0:T(8,128)}', space=vmem, size = 0x8000, scoped, tag = 'scratch operand']
  %s0 = inlined_call_operand.vmem [shape: bf16[24,16,128], index: 0, kind: input, shape index: {}, may-alias: {0,1,2}]
  %s1 = inlined_call_operand.vmem [shape: bf16[24,16,128], index: 1, kind: input, shape index: {}, may-alias: {0,1,2}]
  %s2 = inlined_call_operand.vmem [shape: bf16[24,16,128], index: 2, kind: input, shape index: {}, may-alias: {0,1,2}]
  %s3 = inlined_call_operand.vmem [shape: bf16[2,4,16,128], index: 3, kind: output, shape index: {}]
  %s4 = sld [smem:[#allocation0]]
  $region53: #{vitvqgan_forward.39} parent=0
    _
  %s6 = ssub.s32 1, %s4
  %s7 = scalar_select 0, %s6, %s4
  loop: start=0, step=1, limit=4
  $region2: #{vitvqgan_forward.39} parent=0 // loop_pre_header
    _
  $region3: #{vitvqgan_forward.39} parent=0 // loop_header
    %s9 = sphi 0, %s13
    %p10 = scmp.ge.s32.totalorder %s9, 4
    %s16 = sphi 0, %s35
    %s17 = sphi 0, %s31
    %s18 = sphi 0, %s27
    %s19 = sphi 0, %s16
    %s20 = sphi 0, %s17
    %s21 = sphi 0, %s18
    %s22 = sphi 0, %s19
    %s23 = sphi 0, %s20
    %s24 = sphi 0, %s21
    %s42 = sphi 0, %s44
    %s45 = sphi 0, %s42
    %s46 = sphi 0, %s45
    %s62 = sphi 0, %s46
    %s74 = sphi 0, %s76
    %s77 = sphi 0, %s74
    %s78 = sphi 0, %s77
    %s94 = sphi 0, %s78
    %s106 = sphi 0, %s108
    %s109 = sphi 0, %s106
    %s110 = sphi 0, %s109
    %s126 = sphi 0, %s110
    %s134 = sphi 0, %s136
    %s137 = sphi 0, %s134
    %s138 = sphi 0, %s137
    %s154 = sphi 0, %s138
  $region4: #{vitvqgan_forward.39} parent=0 // loop_header_branch
    %12 = sbr.rel (%p10) target = $region8
  $region5: #{vitvqgan_forward.39} parent=0 // loop_body
    %s14 = ssub.s32 %s9, 1
    %s15 = ssub.s32 %s9, 2
    %s25 = sadd.s32 1, %s18
    %p26 = scmp.ge.s32.totalorder %s25, 1
    %s27 = scalar_select %p26, 0, %s25
    %s28 = sadd.s32 1, %s17
    %s29 = scalar_select %p26, %s28, %s17
    %p30 = scmp.ge.s32.totalorder %s29, 1
    %s31 = scalar_select %p30, 0, %s29
    %s32 = sadd.s32 1, %s16
    %s33 = scalar_select %p30, %s32, %s16
    %p34 = scmp.ge.s32.totalorder %s33, 2
    %s35 = scalar_select %p34, 0, %s33
    %s36 = smul.u32 %s16, 3
    %s37 = smul.u32 %s35, 3
    %s38 = ssub.s32 %s36, %s37
    %s39 = ssub.s32 %s17, %s31
    %s40 = sor.u32 %s38, %s39
    %p41 = scmp.eq.s32.totalorder %s40, 0
    %s43 = sadd.s32 %s42, 1
    %s44 = scalar_select %p41, %s42, %s43
    %p47 = pneg %p41
    %p48 = scmp.eq.s32.totalorder %s9, 1
    %p49 = por %p47, %p48
    %p50 = scmp.ne.s32.totalorder %s42, %s45
    %p51 = scmp.eq.s32.totalorder %s9, 0
    %p52 = por %p50, %p51
    %p53 = scmp.ne.s32.totalorder %s42, %s45
    %p54 = scmp.eq.s32.totalorder %s14, 1
    %p55 = por %p53, %p54
    %p56 = scmp.ne.s32.totalorder %s45, %s46
    %p57 = scmp.eq.s32.totalorder %s14, 0
    %p58 = por %p56, %p57
    %p59 = scmp.ne.s32.totalorder %s45, %s46
    %p60 = scmp.eq.s32.totalorder %s15, 1
    %p61 = por %p59, %p60
    %p63 = scmp.ne.s32.totalorder %s46, %s62
    %p64 = scmp.eq.s32.totalorder %s15, 0
    %p65 = por %p63, %p64
    %s66 = smul.u32 %s16, 3
    %s67 = sadd.s32 %s66, 1
    %s68 = smul.u32 %s35, 3
    %s69 = sadd.s32 %s68, 1
    %s70 = ssub.s32 %s67, %s69
    %s71 = ssub.s32 %s18, %s27
    %s72 = sor.u32 %s70, %s71
    %p73 = scmp.eq.s32.totalorder %s72, 0
    %s75 = sadd.s32 %s74, 1
    %s76 = scalar_select %p73, %s74, %s75
    %p79 = pneg %p73
    %p80 = scmp.eq.s32.totalorder %s9, 1
    %p81 = por %p79, %p80
    %p82 = scmp.ne.s32.totalorder %s74, %s77
    %p83 = scmp.eq.s32.totalorder %s9, 0
    %p84 = por %p82, %p83
    %p85 = scmp.ne.s32.totalorder %s74, %s77
    %p86 = scmp.eq.s32.totalorder %s14, 1
    %p87 = por %p85, %p86
    %p88 = scmp.ne.s32.totalorder %s77, %s78
    %p89 = scmp.eq.s32.totalorder %s14, 0
    %p90 = por %p88, %p89
    %p91 = scmp.ne.s32.totalorder %s77, %s78
    %p92 = scmp.eq.s32.totalorder %s15, 1
    %p93 = por %p91, %p92
    %p95 = scmp.ne.s32.totalorder %s78, %s94
    %p96 = scmp.eq.s32.totalorder %s15, 0
    %p97 = por %p95, %p96
    %s98 = smul.u32 %s16, 3
    %s99 = sadd.s32 %s98, 2
    %s100 = smul.u32 %s35, 3
    %s101 = sadd.s32 %s100, 2
    %s102 = ssub.s32 %s99, %s101
    %s103 = ssub.s32 %s18, %s27
    %s104 = sor.u32 %s102, %s103
    %p105 = scmp.eq.s32.totalorder %s104, 0
    %s107 = sadd.s32 %s106, 1
    %s108 = scalar_select %p105, %s106, %s107
    %p111 = pneg %p105
    %p112 = scmp.eq.s32.totalorder %s9, 1
    %p113 = por %p111, %p112
    %p114 = scmp.ne.s32.totalorder %s106, %s109
    %p115 = scmp.eq.s32.totalorder %s9, 0
    %p116 = por %p114, %p115
    %p117 = scmp.ne.s32.totalorder %s106, %s109
    %p118 = scmp.eq.s32.totalorder %s14, 1
    %p119 = por %p117, %p118
    %p120 = scmp.ne.s32.totalorder %s109, %s110
    %p121 = scmp.eq.s32.totalorder %s14, 0
    %p122 = por %p120, %p121
    %p123 = scmp.ne.s32.totalorder %s109, %s110
    %p124 = scmp.eq.s32.totalorder %s15, 1
    %p125 = por %p123, %p124
    %p127 = scmp.ne.s32.totalorder %s110, %s126
    %p128 = scmp.eq.s32.totalorder %s15, 0
    %p129 = por %p127, %p128
    %s130 = ssub.s32 %s16, %s35
    %s131 = ssub.s32 %s17, %s31
    %s132 = sor.u32 %s130, %s131
    %p133 = scmp.eq.s32.totalorder %s132, 0
    %s135 = sadd.s32 %s134, 1
    %s136 = scalar_select %p133, %s134, %s135
    %p139 = pneg %p133
    %p140 = scmp.eq.s32.totalorder %s9, 1
    %p141 = por %p139, %p140
    %p142 = scmp.ne.s32.totalorder %s134, %s137
    %p143 = scmp.eq.s32.totalorder %s9, 0
    %p144 = por %p142, %p143
    %p145 = scmp.ne.s32.totalorder %s134, %s137
    %p146 = scmp.eq.s32.totalorder %s14, 1
    %p147 = por %p145, %p146
    %p148 = scmp.ne.s32.totalorder %s137, %s138
    %p149 = scmp.eq.s32.totalorder %s14, 0
    %p150 = por %p148, %p149
    %p151 = scmp.ne.s32.totalorder %s137, %s138
    %p152 = scmp.eq.s32.totalorder %s15, 1
    %p153 = por %p151, %p152
    %p155 = scmp.ne.s32.totalorder %s138, %s154
    %p156 = scmp.eq.s32.totalorder %s15, 0
    %p157 = por %p155, %p156
    %p158 = scmp.le.s32.totalorder 1, %s9
    %p159 = scmp.lt.s32.totalorder %s9, 3
    %p160 = pnand %p158, %p159
    %p161 = pneg %p160
    // Predicated region
    $region9: #{vitvqgan_forward.39} parent=5 // pred_check
      _
    $region10: #{vitvqgan_forward.39} parent=5 // pred_check_branch
      %163 = sbr.rel (%p160) target = $region12
    $region11: #{vitvqgan_forward.39} parent=5 // pred_region
      %s164 = ssub.s32 %s9, 1
    $region12: #{vitvqgan_forward.39} parent=5 // pred_fallthru
      _
    %p165 = scmp.lt.s32.totalorder %s9, 2
    // Predicated region
    $region13: #{vitvqgan_forward.39} parent=5 // pred_check
      %p166 = pneg %p165
    $region14: #{vitvqgan_forward.39} parent=5 // pred_check_branch
      %168 = sbr.rel (%p166) target = $region16
    $region15: #{vitvqgan_forward.39} parent=5 // pred_region
      // Predicated region
      $region17: #{vitvqgan_forward.39} parent=15 // pred_check
        %p169 = pneg %p52
      $region18: #{vitvqgan_forward.39} parent=15 // pred_check_branch
        %171 = sbr.rel (%p169) target = $region20
      $region19: #{vitvqgan_forward.39} parent=15 // pred_region
        %s172 = smul.u32 %s16, 3
        %s173 = smul.u32 4, %s172
        %s174 = smul.u32 2, %s17
        %p175 = scmp.lt.s32.totalorder %s173, 23
        %s176 = scalar_select %p175, %s173, 23
        %p177 = scmp.lt.s32.totalorder %s174, 1
        %s178 = scalar_select %p177, %s174, 1
        %s179 = smul.addr %s176, 2
        %s180 = sadd.s32 %s178, %s179
        %s181 = smul.addr %s180, 4
        %s182 = scalar_lea.vmem %s0, %s181
        %s183 = smul.u32 %s16, 3
        %s184 = smul.u32 4, %s183
        %s185 = smul.u32 2, %s17
      $region20: #{vitvqgan_forward.39} parent=15 // pred_fallthru
        _
      // Predicated region
      $region21: #{vitvqgan_forward.39} parent=15 // pred_check
        %p186 = pneg %p84
      $region22: #{vitvqgan_forward.39} parent=15 // pred_check_branch
        %188 = sbr.rel (%p186) target = $region24
      $region23: #{vitvqgan_forward.39} parent=15 // pred_region
        %s189 = smul.u32 %s16, 3
        %s190 = sadd.s32 %s189, 1
        %s191 = smul.u32 4, %s190
        %s192 = smul.u32 2, %s18
        %p193 = scmp.lt.s32.totalorder %s191, 23
        %s194 = scalar_select %p193, %s191, 23
        %p195 = scmp.lt.s32.totalorder %s192, 1
        %s196 = scalar_select %p195, %s192, 1
        %s197 = smul.addr %s194, 2
        %s198 = sadd.s32 %s196, %s197
        %s199 = smul.addr %s198, 4
        %s200 = scalar_lea.vmem %s1, %s199
        %s201 = smul.u32 %s16, 3
        %s202 = sadd.s32 %s201, 1
        %s203 = smul.u32 4, %s202
        %s204 = smul.u32 2, %s18
      $region24: #{vitvqgan_forward.39} parent=15 // pred_fallthru
        _
      // Predicated region
      $region25: #{vitvqgan_forward.39} parent=15 // pred_check
        %p205 = pneg %p116
      $region26: #{vitvqgan_forward.39} parent=15 // pred_check_branch
        %207 = sbr.rel (%p205) target = $region28
      $region27: #{vitvqgan_forward.39} parent=15 // pred_region
        %s208 = smul.u32 %s16, 3
        %s209 = sadd.s32 %s208, 2
        %s210 = smul.u32 4, %s209
        %s211 = smul.u32 2, %s18
        %p212 = scmp.lt.s32.totalorder %s210, 23
        %s213 = scalar_select %p212, %s210, 23
        %p214 = scmp.lt.s32.totalorder %s211, 1
        %s215 = scalar_select %p214, %s211, 1
        %s216 = smul.addr %s213, 2
        %s217 = sadd.s32 %s215, %s216
        %s218 = smul.addr %s217, 4
        %s219 = scalar_lea.vmem %s2, %s218
        %s220 = smul.u32 %s16, 3
        %s221 = sadd.s32 %s220, 2
        %s222 = smul.u32 4, %s221
        %s223 = smul.u32 2, %s18
      $region28: #{vitvqgan_forward.39} parent=15 // pred_fallthru
        _
    $region16: #{vitvqgan_forward.39} parent=5 // pred_fallthru
      _
    %p224 = scmp.le.s32.totalorder 1, %s9
    %p225 = scmp.lt.s32.totalorder %s9, 3
    %p226 = pnand %p224, %p225
    %p227 = pneg %p226
    // Predicated region
    $region29: #{vitvqgan_forward.39} parent=5 // pred_check
      _
    $region30: #{vitvqgan_forward.39} parent=5 // pred_check_branch
      %229 = sbr.rel (%p226) target = $region32
    $region31: #{vitvqgan_forward.39} parent=5 // pred_region
      %s230 = ssub.s32 %s9, 1
      %s231 = smul.u32 %s19, 3
      %s232 = smul.u32 4, %s231
      %s233 = smul.u32 2, %s20
      %p234 = scmp.lt.s32.totalorder %s232, 23
      %s235 = scalar_select %p234, %s232, 23
      %p236 = scmp.lt.s32.totalorder %s233, 1
      %s237 = scalar_select %p236, %s233, 1
      %s238 = smul.addr %s235, 2
      %s239 = sadd.s32 %s237, %s238
      %s240 = smul.addr %s239, 4
      %s241 = scalar_lea.vmem %s0, %s240
      %p242 = pneg %p58
      %p243 = pneg %p55
      %s244 = smul.u32 %s19, 3
      %s245 = sadd.s32 %s244, 1
      %s246 = smul.u32 4, %s245
      %s247 = smul.u32 2, %s21
      %p248 = scmp.lt.s32.totalorder %s246, 23
      %s249 = scalar_select %p248, %s246, 23
      %p250 = scmp.lt.s32.totalorder %s247, 1
      %s251 = scalar_select %p250, %s247, 1
      %s252 = smul.addr %s249, 2
      %s253 = sadd.s32 %s251, %s252
      %s254 = smul.addr %s253, 4
      %s255 = scalar_lea.vmem %s1, %s254
      %p256 = pneg %p90
      %p257 = pneg %p87
      %s258 = smul.u32 %s19, 3
      %s259 = sadd.s32 %s258, 2
      %s260 = smul.u32 4, %s259
      %s261 = smul.u32 2, %s21
      %p262 = scmp.lt.s32.totalorder %s260, 23
      %s263 = scalar_select %p262, %s260, 23
      %p264 = scmp.lt.s32.totalorder %s261, 1
      %s265 = scalar_select %p264, %s261, 1
      %s266 = smul.addr %s263, 2
      %s267 = sadd.s32 %s265, %s266
      %s268 = smul.addr %s267, 4
      %s269 = scalar_lea.vmem %s2, %s268
      %p270 = pneg %p122
      %p271 = pneg %p119
      %p272 = pneg %p150
      %p273 = pneg %p147
      %s274 = smul.u32 2, %s20
      %p275 = scmp.lt.s32.totalorder %s19, 1
      %s276 = scalar_select %p275, %s19, 1
      %p277 = scmp.lt.s32.totalorder %s274, 1
      %s278 = scalar_select %p277, %s274, 1
      %s279 = smul.addr %s276, 8
      %s280 = sadd.s32 %s278, %s279
      %s281 = smul.addr %s280, 4
      %s282 = scalar_lea.vmem %s3, %s281
      %s283 = smul.u32 %s19, 3
      %s284 = smul.u32 4, %s283
      %s285 = smul.u32 2, %s20
      %p286 = scmp.lt.s32.totalorder %s284, 23
      %s287 = scalar_select %p286, %s284, 23
      %p288 = scmp.lt.s32.totalorder %s285, 1
      %s289 = scalar_select %p288, %s285, 1
      %s290 = smul.addr %s287, 2
      %s291 = sadd.s32 %s289, %s290
      %s292 = smul.addr %s291, 4
      %s293 = scalar_lea.vmem %s0, %s292
      %s294 = smul.u32 %s19, 3
      %s295 = smul.u32 4, %s294
      %s296 = smul.u32 2, %s20
      %s297 = smul.u32 %s19, 3
      %s298 = sadd.s32 %s297, 1
      %s299 = smul.u32 4, %s298
      %s300 = smul.u32 2, %s21
      %p301 = scmp.lt.s32.totalorder %s299, 23
      %s302 = scalar_select %p301, %s299, 23
      %p303 = scmp.lt.s32.totalorder %s300, 1
      %s304 = scalar_select %p303, %s300, 1
      %s305 = smul.addr %s302, 2
      %s306 = sadd.s32 %s304, %s305
      %s307 = smul.addr %s306, 4
      %s308 = scalar_lea.vmem %s1, %s307
      %s309 = smul.u32 %s19, 3
      %s310 = sadd.s32 %s309, 1
      %s311 = smul.u32 4, %s310
      %s312 = smul.u32 2, %s21
      %s313 = smul.u32 %s19, 3
      %s314 = sadd.s32 %s313, 2
      %s315 = smul.u32 4, %s314
      %s316 = smul.u32 2, %s21
      %p317 = scmp.lt.s32.totalorder %s315, 23
      %s318 = scalar_select %p317, %s315, 23
      %p319 = scmp.lt.s32.totalorder %s316, 1
      %s320 = scalar_select %p319, %s316, 1
      %s321 = smul.addr %s318, 2
      %s322 = sadd.s32 %s320, %s321
      %s323 = smul.addr %s322, 4
      %s324 = scalar_lea.vmem %s2, %s323
      %s325 = smul.u32 %s19, 3
      %s326 = sadd.s32 %s325, 2
      %s327 = smul.u32 4, %s326
      %s328 = smul.u32 2, %s21
      %s329 = smul.u32 2, %s20
      %p330 = scmp.lt.s32.totalorder %s19, 1
      %s331 = scalar_select %p330, %s19, 1
      %p332 = scmp.lt.s32.totalorder %s329, 1
      %s333 = scalar_select %p332, %s329, 1
      %s334 = smul.addr %s331, 8
      %s335 = sadd.s32 %s333, %s334
      %s336 = smul.addr %s335, 4
      %s337 = scalar_lea.vmem %s3, %s336
      %s338 = smul.u32 2, %s20
      %p340 = scmp.eq.s32.totalorder %s21, 0
      // Predicated region
      $region33: #{vitvqgan_forward.39} parent=31 // pred_check
        %p341 = pneg %p340
      $region34: #{vitvqgan_forward.39} parent=31 // pred_check_branch
        %343 = sbr.rel (%p341) target = $region36
      $region35: #{vitvqgan_forward.39} parent=31 // pred_region
        %vm344 = vcmask 7168
        %345 = vst.msk [vmem:[#allocation2] sm:$0xff] %vm344, -1e+30
        %346 = vst.msk [vmem:[#allocation2 + $0x8] sm:$0xff] %vm344, -1e+30
        %347 = vst.msk [vmem:[#allocation2 + $0x10] sm:$0xff] %vm344, -1e+30
        %348 = vst.msk [vmem:[#allocation2 + $0x18] sm:$0xff] %vm344, -1e+30
        %349 = vst.msk [vmem:[#allocation2 + $0x20] sm:$0xff] %vm344, -1e+30
        %350 = vst.msk [vmem:[#allocation2 + $0x28] sm:$0xff] %vm344, -1e+30
        %351 = vst.msk [vmem:[#allocation2 + $0x30] sm:$0xff] %vm344, -1e+30
        %352 = vst.msk [vmem:[#allocation2 + $0x38] sm:$0xff] %vm344, -1e+30
        %353 = vst.msk [vmem:[#allocation3] sm:$0xff] %vm344, 0.0
        %354 = vst.msk [vmem:[#allocation3 + $0x8] sm:$0xff] %vm344, 0.0
        %355 = vst.msk [vmem:[#allocation3 + $0x10] sm:$0xff] %vm344, 0.0
        %356 = vst.msk [vmem:[#allocation3 + $0x18] sm:$0xff] %vm344, 0.0
        %357 = vst.msk [vmem:[#allocation3 + $0x20] sm:$0xff] %vm344, 0.0
        %358 = vst.msk [vmem:[#allocation3 + $0x28] sm:$0xff] %vm344, 0.0
        %359 = vst.msk [vmem:[#allocation3 + $0x30] sm:$0xff] %vm344, 0.0
        %360 = vst.msk [vmem:[#allocation3 + $0x38] sm:$0xff] %vm344, 0.0
        %361 = vst [vmem:[#allocation4] sm:$0xff] 0.0
        %362 = vst [vmem:[#allocation4 + $0x8] sm:$0xff] 0.0
        %363 = vst [vmem:[#allocation4 + $0x10] sm:$0xff] 0.0
        %364 = vst [vmem:[#allocation4 + $0x18] sm:$0xff] 0.0
        %365 = vst [vmem:[#allocation4 + $0x20] sm:$0xff] 0.0
        %366 = vst [vmem:[#allocation4 + $0x28] sm:$0xff] 0.0
        %367 = vst [vmem:[#allocation4 + $0x30] sm:$0xff] 0.0
        %368 = vst [vmem:[#allocation4 + $0x38] sm:$0xff] 0.0
      $region36: #{vitvqgan_forward.39} parent=31 // pred_fallthru
        _
      %v369 = vld [vmem:[%s293] sm:$0xf]
      %v370 = vld [vmem:[%s293 + $0x4] sm:$0xf]
      %v371 = vld [vmem:[%s293 + $0x8] sm:$0xf]
      %v372 = vld [vmem:[%s293 + $0xc] sm:$0xf]
      %v373 = vld [vmem:[%s293 + $0x10] sm:$0xf]
      %v374 = vld [vmem:[%s293 + $0x14] sm:$0xf]
      %v375 = vld [vmem:[%s293 + $0x18] sm:$0xf]
      %v376 = vld [vmem:[%s293 + $0x1c] sm:$0xf]
      %v377 = vld [vmem:[%s308] sm:$0xf]
      %v378 = vld [vmem:[%s308 + $0x4] sm:$0xf]
      %v379 = vld [vmem:[%s308 + $0x8] sm:$0xf]
      %v380 = vld [vmem:[%s308 + $0xc] sm:$0xf]
      %v381 = vld [vmem:[%s308 + $0x10] sm:$0xf]
      %v382 = vld [vmem:[%s308 + $0x14] sm:$0xf]
      %v383 = vld [vmem:[%s308 + $0x18] sm:$0xf]
      %v384 = vld [vmem:[%s308 + $0x1c] sm:$0xf]
      %v385 = vld [vmem:[%s324] sm:$0xf]
      %v386 = vld [vmem:[%s324 + $0x4] sm:$0xf]
      %v387 = vld [vmem:[%s324 + $0x8] sm:$0xf]
      %v388 = vld [vmem:[%s324 + $0xc] sm:$0xf]
      %v389 = vld [vmem:[%s324 + $0x10] sm:$0xf]
      %v390 = vld [vmem:[%s324 + $0x14] sm:$0xf]
      %v391 = vld [vmem:[%s324 + $0x18] sm:$0xf]
      %v392 = vld [vmem:[%s324 + $0x1c] sm:$0xf]
      %v395 = vunpack.c.l.b16 %v369
      %v396 = vunpack.c.l.b16 %v370
      %v397 = vpack.c.b16 %v396, %v395
      %v401 = vunpack.c.l.b16 %v377
      %v402 = vunpack.c.l.b16 %v378
      %v403 = vpack.c.b16 %v402, %v401
      %405 = vmatprep.subr.bf16.mxu0 0
      %406 = vmatpush1.bf16.xpose.msra.mxu0 %v403
      %407 = vmatprep.subr.bf16.mxu0 0
      %408 = vmatpush1.bf16.xpose.msra.mxu0 0
      %409 = vmatprep.subr.bf16.mxu0 0
      %410 = vmatpush1.bf16.xpose.msra.mxu0 0
      %411 = vmatprep.subr.bf16.mxu0 0
      %412 = vmatpush1.bf16.xpose.msra.mxu0 0
      %413 = vmatprep.subr.bf16.mxu0 0
      %414 = vmatpush1.bf16.xpose.msra.mxu0 0
      %415 = vmatprep.subr.bf16.mxu0 0
      %416 = vmatpush1.bf16.xpose.msra.mxu0 0
      %417 = vmatprep.subr.bf16.mxu0 0
      %418 = vmatpush1.bf16.xpose.msra.mxu0 0
      %419 = vmatprep.subr.bf16.mxu0 0
      %420 = vmatpush1.bf16.xpose.msra.mxu0 0
      %421 = vmatprep.subr.bf16.mxu0 0
      %422 = vmatpush1.bf16.xpose.msra.mxu0 0
      %423 = vmatprep.subr.bf16.mxu0 0
      %424 = vmatpush1.bf16.xpose.msra.mxu0 0
      %425 = vmatprep.subr.bf16.mxu0 0
      %426 = vmatpush1.bf16.xpose.msra.mxu0 0
      %427 = vmatprep.subr.bf16.mxu0 0
      %428 = vmatpush1.bf16.xpose.msra.mxu0 0
      %429 = vmatprep.subr.bf16.mxu0 0
      %430 = vmatpush1.bf16.xpose.msra.mxu0 0
      %431 = vmatprep.subr.bf16.mxu0 0
      %432 = vmatpush1.bf16.xpose.msra.mxu0 0
      %433 = vmatprep.subr.bf16.mxu0 0
      %434 = vmatpush1.bf16.xpose.msra.mxu0 0
      %435 = vmatprep.subr.bf16.mxu0 0
      %436 = vmatpush1.bf16.xpose.msra.mxu0 0
      %437 = vmatprep.mubr.bf16.mxu0 0
      %438 = vmatmul.mubr.bf16.gmra.mrb[0].mxu0 %v397
      %v439 = vpop.f32.mrb[0].mxu0
      %v440 = vadd.f32 0.0, %v439
      %v441 = vpop.f32.mrb[0].mxu0
      %v442 = vpop.f32.mrb[0].mxu0
      %v443 = vadd.f32 0.0, %v442
      %v444 = vpop.f32.mrb[0].mxu0
      %445 = vdwg.mxu0
      %v448 = vunpack.c.l.b16 %v371
      %v449 = vunpack.c.l.b16 %v372
      %v450 = vpack.c.b16 %v449, %v448
      %v454 = vunpack.c.l.b16 %v379
      %v455 = vunpack.c.l.b16 %v380
      %v456 = vpack.c.b16 %v455, %v454
      %458 = vmatprep.subr.bf16.mxu0 0
      %459 = vmatpush1.bf16.xpose.msra.mxu0 %v456
      %460 = vmatprep.subr.bf16.mxu0 0
      %461 = vmatpush1.bf16.xpose.msra.mxu0 0
      %462 = vmatprep.subr.bf16.mxu0 0
      %463 = vmatpush1.bf16.xpose.msra.mxu0 0
      %464 = vmatprep.subr.bf16.mxu0 0
      %465 = vmatpush1.bf16.xpose.msra.mxu0 0
      %466 = vmatprep.subr.bf16.mxu0 0
      %467 = vmatpush1.bf16.xpose.msra.mxu0 0
      %468 = vmatprep.subr.bf16.mxu0 0
      %469 = vmatpush1.bf16.xpose.msra.mxu0 0
      %470 = vmatprep.subr.bf16.mxu0 0
      %471 = vmatpush1.bf16.xpose.msra.mxu0 0
      %472 = vmatprep.subr.bf16.mxu0 0
      %473 = vmatpush1.bf16.xpose.msra.mxu0 0
      %474 = vmatprep.subr.bf16.mxu0 0
      %475 = vmatpush1.bf16.xpose.msra.mxu0 0
      %476 = vmatprep.subr.bf16.mxu0 0
      %477 = vmatpush1.bf16.xpose.msra.mxu0 0
      %478 = vmatprep.subr.bf16.mxu0 0
      %479 = vmatpush1.bf16.xpose.msra.mxu0 0
      %480 = vmatprep.subr.bf16.mxu0 0
      %481 = vmatpush1.bf16.xpose.msra.mxu0 0
      %482 = vmatprep.subr.bf16.mxu0 0
      %483 = vmatpush1.bf16.xpose.msra.mxu0 0
      %484 = vmatprep.subr.bf16.mxu0 0
      %485 = vmatpush1.bf16.xpose.msra.mxu0 0
      %486 = vmatprep.subr.bf16.mxu0 0
      %487 = vmatpush1.bf16.xpose.msra.mxu0 0
      %488 = vmatprep.subr.bf16.mxu0 0
      %489 = vmatpush1.bf16.xpose.msra.mxu0 0
      %490 = vmatprep.mubr.bf16.mxu0 0
      %491 = vmatmul.mubr.bf16.gmra.mrb[0].mxu0 %v450
      %v492 = vpop.f32.mrb[0].mxu0
      %v493 = vadd.f32 0.0, %v492
      %v494 = vpop.f32.mrb[0].mxu0
      %v495 = vpop.f32.mrb[0].mxu0
      %v496 = vadd.f32 0.0, %v495
      %v497 = vpop.f32.mrb[0].mxu0
      %498 = vdwg.mxu0
      %v501 = vunpack.c.l.b16 %v373
      %v502 = vunpack.c.l.b16 %v374
      %v503 = vpack.c.b16 %v502, %v501
      %v507 = vunpack.c.l.b16 %v381
      %v508 = vunpack.c.l.b16 %v382
      %v509 = vpack.c.b16 %v508, %v507
      %511 = vmatprep.subr.bf16.mxu0 0
      %512 = vmatpush1.bf16.xpose.msra.mxu0 %v509
      %513 = vmatprep.subr.bf16.mxu0 0
      %514 = vmatpush1.bf16.xpose.msra.mxu0 0
      %515 = vmatprep.subr.bf16.mxu0 0
      %516 = vmatpush1.bf16.xpose.msra.mxu0 0
      %517 = vmatprep.subr.bf16.mxu0 0
      %518 = vmatpush1.bf16.xpose.msra.mxu0 0
      %519 = vmatprep.subr.bf16.mxu0 0
      %520 = vmatpush1.bf16.xpose.msra.mxu0 0
      %521 = vmatprep.subr.bf16.mxu0 0
      %522 = vmatpush1.bf16.xpose.msra.mxu0 0
      %523 = vmatprep.subr.bf16.mxu0 0
      %524 = vmatpush1.bf16.xpose.msra.mxu0 0
      %525 = vmatprep.subr.bf16.mxu0 0
      %526 = vmatpush1.bf16.xpose.msra.mxu0 0
      %527 = vmatprep.subr.bf16.mxu0 0
      %528 = vmatpush1.bf16.xpose.msra.mxu0 0
      %529 = vmatprep.subr.bf16.mxu0 0
      %530 = vmatpush1.bf16.xpose.msra.mxu0 0
      %531 = vmatprep.subr.bf16.mxu0 0
      %532 = vmatpush1.bf16.xpose.msra.mxu0 0
      %533 = vmatprep.subr.bf16.mxu0 0
      %534 = vmatpush1.bf16.xpose.msra.mxu0 0
      %535 = vmatprep.subr.bf16.mxu0 0
      %536 = vmatpush1.bf16.xpose.msra.mxu0 0
      %537 = vmatprep.subr.bf16.mxu0 0
      %538 = vmatpush1.bf16.xpose.msra.mxu0 0
      %539 = vmatprep.subr.bf16.mxu0 0
      %540 = vmatpush1.bf16.xpose.msra.mxu0 0
      %541 = vmatprep.subr.bf16.mxu0 0
      %542 = vmatpush1.bf16.xpose.msra.mxu0 0
      %543 = vmatprep.mubr.bf16.mxu0 0
      %544 = vmatmul.mubr.bf16.gmra.mrb[0].mxu0 %v503
      %v545 = vpop.f32.mrb[0].mxu0
      %v546 = vadd.f32 0.0, %v545
      %v547 = vpop.f32.mrb[0].mxu0
      %v548 = vpop.f32.mrb[0].mxu0
      %v549 = vadd.f32 0.0, %v548
      %v550 = vpop.f32.mrb[0].mxu0
      %551 = vdwg.mxu0
      %v554 = vunpack.c.l.b16 %v375
      %v555 = vunpack.c.l.b16 %v376
      %v556 = vpack.c.b16 %v555, %v554
      %v560 = vunpack.c.l.b16 %v383
      %v561 = vunpack.c.l.b16 %v384
      %v562 = vpack.c.b16 %v561, %v560
      %564 = vmatprep.subr.bf16.mxu0 0
      %565 = vmatpush1.bf16.xpose.msra.mxu0 %v562
      %566 = vmatprep.subr.bf16.mxu0 0
      %567 = vmatpush1.bf16.xpose.msra.mxu0 0
      %568 = vmatprep.subr.bf16.mxu0 0
      %569 = vmatpush1.bf16.xpose.msra.mxu0 0
      %570 = vmatprep.subr.bf16.mxu0 0
      %571 = vmatpush1.bf16.xpose.msra.mxu0 0
      %572 = vmatprep.subr.bf16.mxu0 0
      %573 = vmatpush1.bf16.xpose.msra.mxu0 0
      %574 = vmatprep.subr.bf16.mxu0 0
      %575 = vmatpush1.bf16.xpose.msra.mxu0 0
      %576 = vmatprep.subr.bf16.mxu0 0
      %577 = vmatpush1.bf16.xpose.msra.mxu0 0
      %578 = vmatprep.subr.bf16.mxu0 0
      %579 = vmatpush1.bf16.xpose.msra.mxu0 0
      %580 = vmatprep.subr.bf16.mxu0 0
      %581 = vmatpush1.bf16.xpose.msra.mxu0 0
      %582 = vmatprep.subr.bf16.mxu0 0
      %583 = vmatpush1.bf16.xpose.msra.mxu0 0
      %584 = vmatprep.subr.bf16.mxu0 0
      %585 = vmatpush1.bf16.xpose.msra.mxu0 0
      %586 = vmatprep.subr.bf16.mxu0 0
      %587 = vmatpush1.bf16.xpose.msra.mxu0 0
      %588 = vmatprep.subr.bf16.mxu0 0
      %589 = vmatpush1.bf16.xpose.msra.mxu0 0
      %590 = vmatprep.subr.bf16.mxu0 0
      %591 = vmatpush1.bf16.xpose.msra.mxu0 0
      %592 = vmatprep.subr.bf16.mxu0 0
      %593 = vmatpush1.bf16.xpose.msra.mxu0 0
      %594 = vmatprep.subr.bf16.mxu0 0
      %595 = vmatpush1.bf16.xpose.msra.mxu0 0
      %596 = vmatprep.mubr.bf16.mxu0 0
      %597 = vmatmul.mubr.bf16.gmra.mrb[0].mxu0 %v556
      %v598 = vpop.f32.mrb[0].mxu0
      %v599 = vadd.f32 0.0, %v598
      %v600 = vpop.f32.mrb[0].mxu0
      %v601 = vpop.f32.mrb[0].mxu0
      %v602 = vadd.f32 0.0, %v601
      %v603 = vpop.f32.mrb[0].mxu0
      %604 = vdwg.mxu0
      %v605 = vld [vmem:[#allocation2] sm:$0xff]
      %v606 = vld [vmem:[#allocation2 + $0x8] sm:$0xff]
      %v607 = vld [vmem:[#allocation2 + $0x10] sm:$0xff]
      %v608 = vld [vmem:[#allocation2 + $0x18] sm:$0xff]
      %v609 = vld [vmem:[#allocation2 + $0x20] sm:$0xff]
      %v610 = vld [vmem:[#allocation2 + $0x28] sm:$0xff]
      %v611 = vld [vmem:[#allocation2 + $0x30] sm:$0xff]
      %v612 = vld [vmem:[#allocation2 + $0x38] sm:$0xff]
      %vm613 = vcmask 130048
      %v614 = vsel %vm613, %v440, -inf
      %615 = vmax.xlane.f32.xlu0 %v614
      %v616 = vpop.xlane.xlu0 %615
      %v617 = vsel %vm613, %v443, -inf
      %618 = vmax.xlane.f32.xlu0 %v617
      %v619 = vpop.xlane.xlu0 %618
      %v620 = vsel %vm613, %v493, -inf
      %621 = vmax.xlane.f32.xlu0 %v620
      %v622 = vpop.xlane.xlu0 %621
      %v623 = vsel %vm613, %v496, -inf
      %624 = vmax.xlane.f32.xlu0 %v623
      %v625 = vpop.xlane.xlu0 %624
      %v626 = vsel %vm613, %v546, -inf
      %627 = vmax.xlane.f32.xlu0 %v626
      %v628 = vpop.xlane.xlu0 %627
      %v629 = vsel %vm613, %v549, -inf
      %630 = vmax.xlane.f32.xlu0 %v629
      %v631 = vpop.xlane.xlu0 %630
      %v632 = vsel %vm613, %v599, -inf
      %633 = vmax.xlane.f32.xlu0 %v632
      %v634 = vpop.xlane.xlu0 %633
      %v635 = vsel %vm613, %v602, -inf
      %636 = vmax.xlane.f32.xlu0 %v635
      %v637 = vpop.xlane.xlu0 %636
      %v638 = vmax.f32 %v605, %v616
      %v639 = vmax.f32 %v606, %v619
      %v640 = vmax.f32 %v607, %v622
      %v641 = vmax.f32 %v608, %v625
      %v642 = vmax.f32 %v609, %v628
      %v643 = vmax.f32 %v610, %v631
      %v644 = vmax.f32 %v611, %v634
      %v645 = vmax.f32 %v612, %v637
      %v646 = vsub.f32 %v605, %v638
      %v647 = vsub.f32 %v606, %v639
      %v648 = vsub.f32 %v607, %v640
      %v649 = vsub.f32 %v608, %v641
      %v650 = vsub.f32 %v609, %v642
      %v651 = vsub.f32 %v610, %v643
      %v652 = vsub.f32 %v611, %v644
      %v653 = vsub.f32 %v612, %v645
      %v654 = vmul.f32 %v646, 1.442695
      %v655 = vpow.pop %v654
      %v656 = vmul.f32 %v647, 1.442695
      %v657 = vpow.pop %v656
      %v658 = vmul.f32 %v648, 1.442695
      %v659 = vpow.pop %v658
      %v660 = vmul.f32 %v649, 1.442695
      %v661 = vpow.pop %v660
      %v662 = vmul.f32 %v650, 1.442695
      %v663 = vpow.pop %v662
      %v664 = vmul.f32 %v651, 1.442695
      %v665 = vpow.pop %v664
      %v666 = vmul.f32 %v652, 1.442695
      %v667 = vpow.pop %v666
      %v668 = vmul.f32 %v653, 1.442695
      %v669 = vpow.pop %v668
      %671 = vset.pattern.permute.xlu0 0
      %672 = vperm.xlu0 %671, %v638
      %v673 = vpop.permute.xlu0 %672
      %676 = vset.pattern.permute.xlu0 0
      %677 = vperm.xlu0 %676, %v639
      %v678 = vpop.permute.xlu0 %677
      %681 = vset.pattern.permute.xlu0 0
      %682 = vperm.xlu0 %681, %v640
      %v683 = vpop.permute.xlu0 %682
      %686 = vset.pattern.permute.xlu0 0
      %687 = vperm.xlu0 %686, %v641
      %v688 = vpop.permute.xlu0 %687
      %691 = vset.pattern.permute.xlu0 0
      %692 = vperm.xlu0 %691, %v642
      %v693 = vpop.permute.xlu0 %692
      %696 = vset.pattern.permute.xlu0 0
      %697 = vperm.xlu0 %696, %v643
      %v698 = vpop.permute.xlu0 %697
      %701 = vset.pattern.permute.xlu0 0
      %702 = vperm.xlu0 %701, %v644
      %v703 = vpop.permute.xlu0 %702
      %706 = vset.pattern.permute.xlu0 0
      %707 = vperm.xlu0 %706, %v645
      %v708 = vpop.permute.xlu0 %707
      %v710 = vsub.f32 %v440, %v673
      %v711 = vsub.f32 %v443, %v678
      %v712 = vsub.f32 %v493, %v683
      %v713 = vsub.f32 %v496, %v688
      %v714 = vsub.f32 %v546, %v693
      %v715 = vsub.f32 %v549, %v698
      %v716 = vsub.f32 %v599, %v703
      %v717 = vsub.f32 %v602, %v708
      %v718 = vmul.f32 %v710, 1.442695
      %v719 = vpow.pop %v718
      %v720 = vmul.f32 %v711, 1.442695
      %v721 = vpow.pop %v720
      %v722 = vmul.f32 %v712, 1.442695
      %v723 = vpow.pop %v722
      %v724 = vmul.f32 %v713, 1.442695
      %v725 = vpow.pop %v724
      %v726 = vmul.f32 %v714, 1.442695
      %v727 = vpow.pop %v726
      %v728 = vmul.f32 %v715, 1.442695
      %v729 = vpow.pop %v728
      %v730 = vmul.f32 %v716, 1.442695
      %v731 = vpow.pop %v730
      %v732 = vmul.f32 %v717, 1.442695
      %v733 = vpow.pop %v732
      %v734 = vld [vmem:[#allocation3] sm:$0xff]
      %v735 = vld [vmem:[#allocation3 + $0x8] sm:$0xff]
      %v736 = vld [vmem:[#allocation3 + $0x10] sm:$0xff]
      %v737 = vld [vmem:[#allocation3 + $0x18] sm:$0xff]
      %v738 = vld [vmem:[#allocation3 + $0x20] sm:$0xff]
      %v739 = vld [vmem:[#allocation3 + $0x28] sm:$0xff]
      %v740 = vld [vmem:[#allocation3 + $0x30] sm:$0xff]
      %v741 = vld [vmem:[#allocation3 + $0x38] sm:$0xff]
      %v742 = vmul.f32 %v655, %v734
      %v743 = vmul.f32 %v657, %v735
      %v744 = vmul.f32 %v659, %v736
      %v745 = vmul.f32 %v661, %v737
      %v746 = vmul.f32 %v663, %v738
      %v747 = vmul.f32 %v665, %v739
      %v748 = vmul.f32 %v667, %v740
      %v749 = vmul.f32 %v669, %v741
      %v750 = vsel %vm613, %v719, 0.0
      %751 = vadd.xlane.f32.xlu0 %v750
      %v752 = vpop.xlane.xlu0 %751
      %v753 = vsel %vm613, %v721, 0.0
      %754 = vadd.xlane.f32.xlu0 %v753
      %v755 = vpop.xlane.xlu0 %754
      %v756 = vsel %vm613, %v723, 0.0
      %757 = vadd.xlane.f32.xlu0 %v756
      %v758 = vpop.xlane.xlu0 %757
      %v759 = vsel %vm613, %v725, 0.0
      %760 = vadd.xlane.f32.xlu0 %v759
      %v761 = vpop.xlane.xlu0 %760
      %v762 = vsel %vm613, %v727, 0.0
      %763 = vadd.xlane.f32.xlu0 %v762
      %v764 = vpop.xlane.xlu0 %763
      %v765 = vsel %vm613, %v729, 0.0
      %766 = vadd.xlane.f32.xlu0 %v765
      %v767 = vpop.xlane.xlu0 %766
      %v768 = vsel %vm613, %v731, 0.0
      %769 = vadd.xlane.f32.xlu0 %v768
      %v770 = vpop.xlane.xlu0 %769
      %v771 = vsel %vm613, %v733, 0.0
      %772 = vadd.xlane.f32.xlu0 %v771
      %v773 = vpop.xlane.xlu0 %772
      %v774 = vadd.f32 %v742, %v752
      %v775 = vadd.f32 %v743, %v755
      %v776 = vadd.f32 %v744, %v758
      %v777 = vadd.f32 %v745, %v761
      %v778 = vadd.f32 %v746, %v764
      %v779 = vadd.f32 %v747, %v767
      %v780 = vadd.f32 %v748, %v770
      %v781 = vadd.f32 %v749, %v773
      %vm782 = vcmask 7168
      %783 = vst.msk [vmem:[#allocation3] sm:$0xff] %vm782, %v774
      %784 = vst.msk [vmem:[#allocation3 + $0x8] sm:$0xff] %vm782, %v775
      %785 = vst.msk [vmem:[#allocation3 + $0x10] sm:$0xff] %vm782, %v776
      %786 = vst.msk [vmem:[#allocation3 + $0x18] sm:$0xff] %vm782, %v777
      %787 = vst.msk [vmem:[#allocation3 + $0x20] sm:$0xff] %vm782, %v778
      %788 = vst.msk [vmem:[#allocation3 + $0x28] sm:$0xff] %vm782, %v779
      %789 = vst.msk [vmem:[#allocation3 + $0x30] sm:$0xff] %vm782, %v780
      %790 = vst.msk [vmem:[#allocation3 + $0x38] sm:$0xff] %vm782, %v781
      %v791 = vld [vmem:[#allocation4] sm:$0xff]
      %v792 = vld [vmem:[#allocation4 + $0x8] sm:$0xff]
      %v793 = vld [vmem:[#allocation4 + $0x10] sm:$0xff]
      %v794 = vld [vmem:[#allocation4 + $0x18] sm:$0xff]
      %v795 = vld [vmem:[#allocation4 + $0x20] sm:$0xff]
      %v796 = vld [vmem:[#allocation4 + $0x28] sm:$0xff]
      %v797 = vld [vmem:[#allocation4 + $0x30] sm:$0xff]
      %v798 = vld [vmem:[#allocation4 + $0x38] sm:$0xff]
      %800 = vset.pattern.permute.xlu0 0
      %801 = vperm.xlu0 %800, %v655
      %v802 = vpop.permute.xlu0 %801
      %805 = vset.pattern.permute.xlu0 0
      %806 = vperm.xlu0 %805, %v657
      %v807 = vpop.permute.xlu0 %806
      %810 = vset.pattern.permute.xlu0 0
      %811 = vperm.xlu0 %810, %v659
      %v812 = vpop.permute.xlu0 %811
      %815 = vset.pattern.permute.xlu0 0
      %816 = vperm.xlu0 %815, %v661
      %v817 = vpop.permute.xlu0 %816
      %820 = vset.pattern.permute.xlu0 0
      %821 = vperm.xlu0 %820, %v663
      %v822 = vpop.permute.xlu0 %821
      %825 = vset.pattern.permute.xlu0 0
      %826 = vperm.xlu0 %825, %v665
      %v827 = vpop.permute.xlu0 %826
      %830 = vset.pattern.permute.xlu0 0
      %831 = vperm.xlu0 %830, %v667
      %v832 = vpop.permute.xlu0 %831
      %835 = vset.pattern.permute.xlu0 0
      %836 = vperm.xlu0 %835, %v669
      %v837 = vpop.permute.xlu0 %836
      %v839 = vmul.f32 %v802, %v791
      %v840 = vmul.f32 %v807, %v792
      %v841 = vmul.f32 %v812, %v793
      %v842 = vmul.f32 %v817, %v794
      %v843 = vmul.f32 %v822, %v795
      %v844 = vmul.f32 %v827, %v796
      %v845 = vmul.f32 %v832, %v797
      %v846 = vmul.f32 %v837, %v798
      %v847 = vpack.c.bf16 %v721, %v719
      %v848 = vpack.c.bf16 %v725, %v723
      %v849 = vpack.c.bf16 %v729, %v727
      %v850 = vpack.c.bf16 %v733, %v731
      %v853 = vunpack.c.l.b16 %v385
      %v854 = vunpack.c.l.b16 %v386
      %v855 = vpack.c.b16 %v854, %v853
      %v858 = vsel %vm613, %v847, 0
      %860 = vmatprep.subr.bf16.mxu0 0
      %861 = vmatpush1.bf16.msra.mxu0 %v855
      %862 = vmatprep.subr.bf16.mxu0 0
      %863 = vmatpush1.bf16.msra.mxu0 0
      %864 = vmatprep.subr.bf16.mxu0 0
      %865 = vmatpush1.bf16.msra.mxu0 0
      %866 = vmatprep.subr.bf16.mxu0 0
      %867 = vmatpush1.bf16.msra.mxu0 0
      %868 = vmatprep.subr.bf16.mxu0 0
      %869 = vmatpush1.bf16.msra.mxu0 0
      %870 = vmatprep.subr.bf16.mxu0 0
      %871 = vmatpush1.bf16.msra.mxu0 0
      %872 = vmatprep.subr.bf16.mxu0 0
      %873 = vmatpush1.bf16.msra.mxu0 0
      %874 = vmatprep.subr.bf16.mxu0 0
      %875 = vmatpush1.bf16.msra.mxu0 0
      %876 = vmatprep.subr.bf16.mxu0 0
      %877 = vmatpush1.bf16.msra.mxu0 0
      %878 = vmatprep.subr.bf16.mxu0 0
      %879 = vmatpush1.bf16.msra.mxu0 0
      %880 = vmatprep.subr.bf16.mxu0 0
      %881 = vmatpush1.bf16.msra.mxu0 0
      %882 = vmatprep.subr.bf16.mxu0 0
      %883 = vmatpush1.bf16.msra.mxu0 0
      %884 = vmatprep.subr.bf16.mxu0 0
      %885 = vmatpush1.bf16.msra.mxu0 0
      %886 = vmatprep.subr.bf16.mxu0 0
      %887 = vmatpush1.bf16.msra.mxu0 0
      %888 = vmatprep.subr.bf16.mxu0 0
      %889 = vmatpush1.bf16.msra.mxu0 0
      %890 = vmatprep.subr.bf16.mxu0 0
      %891 = vmatpush1.bf16.msra.mxu0 0
      %892 = vmatprep.mubr.bf16.mxu0 0
      %893 = vmatmul.mubr.bf16.gmra.mrb[0].mxu0 %v858
      %v894 = vpop.f32.mrb[0].mxu0
      %v895 = vadd.f32 0.0, %v894
      %v896 = vpop.f32.mrb[0].mxu0
      %v897 = vpop.f32.mrb[0].mxu0
      %v898 = vadd.f32 0.0, %v897
      %v899 = vpop.f32.mrb[0].mxu0
      %900 = vdwg.mxu0
      %v903 = vunpack.c.l.b16 %v387
      %v904 = vunpack.c.l.b16 %v388
      %v905 = vpack.c.b16 %v904, %v903
      %v908 = vsel %vm613, %v848, 0
      %910 = vmatprep.subr.bf16.mxu0 0
      %911 = vmatpush1.bf16.msra.mxu0 %v905
      %912 = vmatprep.subr.bf16.mxu0 0
      %913 = vmatpush1.bf16.msra.mxu0 0
      %914 = vmatprep.subr.bf16.mxu0 0
      %915 = vmatpush1.bf16.msra.mxu0 0
      %916 = vmatprep.subr.bf16.mxu0 0
      %917 = vmatpush1.bf16.msra.mxu0 0
      %918 = vmatprep.subr.bf16.mxu0 0
      %919 = vmatpush1.bf16.msra.mxu0 0
      %920 = vmatprep.subr.bf16.mxu0 0
      %921 = vmatpush1.bf16.msra.mxu0 0
      %922 = vmatprep.subr.bf16.mxu0 0
      %923 = vmatpush1.bf16.msra.mxu0 0
      %924 = vmatprep.subr.bf16.mxu0 0
      %925 = vmatpush1.bf16.msra.mxu0 0
      %926 = vmatprep.subr.bf16.mxu0 0
      %927 = vmatpush1.bf16.msra.mxu0 0
      %928 = vmatprep.subr.bf16.mxu0 0
      %929 = vmatpush1.bf16.msra.mxu0 0
      %930 = vmatprep.subr.bf16.mxu0 0
      %931 = vmatpush1.bf16.msra.mxu0 0
      %932 = vmatprep.subr.bf16.mxu0 0
      %933 = vmatpush1.bf16.msra.mxu0 0
      %934 = vmatprep.subr.bf16.mxu0 0
      %935 = vmatpush1.bf16.msra.mxu0 0
      %936 = vmatprep.subr.bf16.mxu0 0
      %937 = vmatpush1.bf16.msra.mxu0 0
      %938 = vmatprep.subr.bf16.mxu0 0
      %939 = vmatpush1.bf16.msra.mxu0 0
      %940 = vmatprep.subr.bf16.mxu0 0
      %941 = vmatpush1.bf16.msra.mxu0 0
      %942 = vmatprep.mubr.bf16.mxu0 0
      %943 = vmatmul.mubr.bf16.gmra.mrb[0].mxu0 %v908
      %v944 = vpop.f32.mrb[0].mxu0
      %v945 = vadd.f32 0.0, %v944
      %v946 = vpop.f32.mrb[0].mxu0
      %v947 = vpop.f32.mrb[0].mxu0
      %v948 = vadd.f32 0.0, %v947
      %v949 = vpop.f32.mrb[0].mxu0
      %950 = vdwg.mxu0
      %v953 = vunpack.c.l.b16 %v389
      %v954 = vunpack.c.l.b16 %v390
      %v955 = vpack.c.b16 %v954, %v953
      %v958 = vsel %vm613, %v849, 0
      %960 = vmatprep.subr.bf16.mxu0 0
      %961 = vmatpush1.bf16.msra.mxu0 %v955
      %962 = vmatprep.subr.bf16.mxu0 0
      %963 = vmatpush1.bf16.msra.mxu0 0
      %964 = vmatprep.subr.bf16.mxu0 0
      %965 = vmatpush1.bf16.msra.mxu0 0
      %966 = vmatprep.subr.bf16.mxu0 0
      %967 = vmatpush1.bf16.msra.mxu0 0
      %968 = vmatprep.subr.bf16.mxu0 0
      %969 = vmatpush1.bf16.msra.mxu0 0
      %970 = vmatprep.subr.bf16.mxu0 0
      %971 = vmatpush1.bf16.msra.mxu0 0
      %972 = vmatprep.subr.bf16.mxu0 0
      %973 = vmatpush1.bf16.msra.mxu0 0
      %974 = vmatprep.subr.bf16.mxu0 0
      %975 = vmatpush1.bf16.msra.mxu0 0
      %976 = vmatprep.subr.bf16.mxu0 0
      %977 = vmatpush1.bf16.msra.mxu0 0
      %978 = vmatprep.subr.bf16.mxu0 0
      %979 = vmatpush1.bf16.msra.mxu0 0
      %980 = vmatprep.subr.bf16.mxu0 0
      %981 = vmatpush1.bf16.msra.mxu0 0
      %982 = vmatprep.subr.bf16.mxu0 0
      %983 = vmatpush1.bf16.msra.mxu0 0
      %984 = vmatprep.subr.bf16.mxu0 0
      %985 = vmatpush1.bf16.msra.mxu0 0
      %986 = vmatprep.subr.bf16.mxu0 0
      %987 = vmatpush1.bf16.msra.mxu0 0
      %988 = vmatprep.subr.bf16.mxu0 0
      %989 = vmatpush1.bf16.msra.mxu0 0
      %990 = vmatprep.subr.bf16.mxu0 0
      %991 = vmatpush1.bf16.msra.mxu0 0
      %992 = vmatprep.mubr.bf16.mxu0 0
      %993 = vmatmul.mubr.bf16.gmra.mrb[0].mxu0 %v958
      %v994 = vpop.f32.mrb[0].mxu0
      %v995 = vadd.f32 0.0, %v994
      %v996 = vpop.f32.mrb[0].mxu0
      %v997 = vpop.f32.mrb[0].mxu0
      %v998 = vadd.f32 0.0, %v997
      %v999 = vpop.f32.mrb[0].mxu0
      %1000 = vdwg.mxu0
      %v1003 = vunpack.c.l.b16 %v391
      %v1004 = vunpack.c.l.b16 %v392
      %v1005 = vpack.c.b16 %v1004, %v1003
      %v1008 = vsel %vm613, %v850, 0
      %1010 = vmatprep.subr.bf16.mxu0 0
      %1011 = vmatpush1.bf16.msra.mxu0 %v1005
      %1012 = vmatprep.subr.bf16.mxu0 0
      %1013 = vmatpush1.bf16.msra.mxu0 0
      %1014 = vmatprep.subr.bf16.mxu0 0
      %1015 = vmatpush1.bf16.msra.mxu0 0
      %1016 = vmatprep.subr.bf16.mxu0 0
      %1017 = vmatpush1.bf16.msra.mxu0 0
      %1018 = vmatprep.subr.bf16.mxu0 0
      %1019 = vmatpush1.bf16.msra.mxu0 0
      %1020 = vmatprep.subr.bf16.mxu0 0
      %1021 = vmatpush1.bf16.msra.mxu0 0
      %1022 = vmatprep.subr.bf16.mxu0 0
      %1023 = vmatpush1.bf16.msra.mxu0 0
      %1024 = vmatprep.subr.bf16.mxu0 0
      %1025 = vmatpush1.bf16.msra.mxu0 0
      %1026 = vmatprep.subr.bf16.mxu0 0
      %1027 = vmatpush1.bf16.msra.mxu0 0
      %1028 = vmatprep.subr.bf16.mxu0 0
      %1029 = vmatpush1.bf16.msra.mxu0 0
      %1030 = vmatprep.subr.bf16.mxu0 0
      %1031 = vmatpush1.bf16.msra.mxu0 0
      %1032 = vmatprep.subr.bf16.mxu0 0
      %1033 = vmatpush1.bf16.msra.mxu0 0
      %1034 = vmatprep.subr.bf16.mxu0 0
      %1035 = vmatpush1.bf16.msra.mxu0 0
      %1036 = vmatprep.subr.bf16.mxu0 0
      %1037 = vmatpush1.bf16.msra.mxu0 0
      %1038 = vmatprep.subr.bf16.mxu0 0
      %1039 = vmatpush1.bf16.msra.mxu0 0
      %1040 = vmatprep.subr.bf16.mxu0 0
      %1041 = vmatpush1.bf16.msra.mxu0 0
      %1042 = vmatprep.mubr.bf16.mxu0 0
      %1043 = vmatmul.mubr.bf16.gmra.mrb[0].mxu0 %v1008
      %v1044 = vpop.f32.mrb[0].mxu0
      %v1045 = vadd.f32 0.0, %v1044
      %v1046 = vpop.f32.mrb[0].mxu0
      %v1047 = vpop.f32.mrb[0].mxu0
      %v1048 = vadd.f32 0.0, %v1047
      %v1049 = vpop.f32.mrb[0].mxu0
      %1050 = vdwg.mxu0
      %v1051 = vadd.f32 %v839, %v895
      %v1052 = vadd.f32 %v840, %v898
      %v1053 = vadd.f32 %v841, %v945
      %v1054 = vadd.f32 %v842, %v948
      %v1055 = vadd.f32 %v843, %v995
      %v1056 = vadd.f32 %v844, %v998
      %v1057 = vadd.f32 %v845, %v1045
      %v1058 = vadd.f32 %v846, %v1048
      %1059 = vst [vmem:[#allocation4] sm:$0xff] %v1051
      %1060 = vst [vmem:[#allocation4 + $0x8] sm:$0xff] %v1052
      %1061 = vst [vmem:[#allocation4 + $0x10] sm:$0xff] %v1053
      %1062 = vst [vmem:[#allocation4 + $0x18] sm:$0xff] %v1054
      %1063 = vst [vmem:[#allocation4 + $0x20] sm:$0xff] %v1055
      %1064 = vst [vmem:[#allocation4 + $0x28] sm:$0xff] %v1056
      %1065 = vst [vmem:[#allocation4 + $0x30] sm:$0xff] %v1057
      %1066 = vst [vmem:[#allocation4 + $0x38] sm:$0xff] %v1058
      %1067 = vst.msk [vmem:[#allocation2] sm:$0xff] %vm782, %v638
      %1068 = vst.msk [vmem:[#allocation2 + $0x8] sm:$0xff] %vm782, %v639
      %1069 = vst.msk [vmem:[#allocation2 + $0x10] sm:$0xff] %vm782, %v640
      %1070 = vst.msk [vmem:[#allocation2 + $0x18] sm:$0xff] %vm782, %v641
      %1071 = vst.msk [vmem:[#allocation2 + $0x20] sm:$0xff] %vm782, %v642
      %1072 = vst.msk [vmem:[#allocation2 + $0x28] sm:$0xff] %vm782, %v643
      %1073 = vst.msk [vmem:[#allocation2 + $0x30] sm:$0xff] %vm782, %v644
      %1074 = vst.msk [vmem:[#allocation2 + $0x38] sm:$0xff] %vm782, %v645
      // Predicated region
      $region37: #{vitvqgan_forward.39} parent=31 // pred_check
        %p1075 = pneg %p340
      $region38: #{vitvqgan_forward.39} parent=31 // pred_check_branch
        %1077 = sbr.rel (%p1075) target = $region40
      $region39: #{vitvqgan_forward.39} parent=31 // pred_region
        %v1078 = vld [vmem:[#allocation4] sm:$0xff]
        %v1079 = vld [vmem:[#allocation4 + $0x8] sm:$0xff]
        %v1080 = vld [vmem:[#allocation4 + $0x10] sm:$0xff]
        %v1081 = vld [vmem:[#allocation4 + $0x18] sm:$0xff]
        %v1082 = vld [vmem:[#allocation4 + $0x20] sm:$0xff]
        %v1083 = vld [vmem:[#allocation4 + $0x28] sm:$0xff]
        %v1084 = vld [vmem:[#allocation4 + $0x30] sm:$0xff]
        %v1085 = vld [vmem:[#allocation4 + $0x38] sm:$0xff]
        %v1086 = vld [vmem:[#allocation3] sm:$0xff]
        %v1087 = vld [vmem:[#allocation3 + $0x8] sm:$0xff]
        %v1088 = vld [vmem:[#allocation3 + $0x10] sm:$0xff]
        %v1089 = vld [vmem:[#allocation3 + $0x18] sm:$0xff]
        %v1090 = vld [vmem:[#allocation3 + $0x20] sm:$0xff]
        %v1091 = vld [vmem:[#allocation3 + $0x28] sm:$0xff]
        %v1092 = vld [vmem:[#allocation3 + $0x30] sm:$0xff]
        %v1093 = vld [vmem:[#allocation3 + $0x38] sm:$0xff]
        %v1094 = vrcp.pop %v1086
        %v1095 = vrcp.pop %v1087
        %v1096 = vrcp.pop %v1088
        %v1097 = vrcp.pop %v1089
        %v1098 = vrcp.pop %v1090
        %v1099 = vrcp.pop %v1091
        %v1100 = vrcp.pop %v1092
        %v1101 = vrcp.pop %v1093
        %1103 = vset.pattern.permute.xlu0 0
        %1104 = vperm.xlu0 %1103, %v1094
        %v1105 = vpop.permute.xlu0 %1104
        %1108 = vset.pattern.permute.xlu0 0
        %1109 = vperm.xlu0 %1108, %v1095
        %v1110 = vpop.permute.xlu0 %1109
        %1113 = vset.pattern.permute.xlu0 0
        %1114 = vperm.xlu0 %1113, %v1096
        %v1115 = vpop.permute.xlu0 %1114
        %1118 = vset.pattern.permute.xlu0 0
        %1119 = vperm.xlu0 %1118, %v1097
        %v1120 = vpop.permute.xlu0 %1119
        %1123 = vset.pattern.permute.xlu0 0
        %1124 = vperm.xlu0 %1123, %v1098
        %v1125 = vpop.permute.xlu0 %1124
        %1128 = vset.pattern.permute.xlu0 0
        %1129 = vperm.xlu0 %1128, %v1099
        %v1130 = vpop.permute.xlu0 %1129
        %1133 = vset.pattern.permute.xlu0 0
        %1134 = vperm.xlu0 %1133, %v1100
        %v1135 = vpop.permute.xlu0 %1134
        %1138 = vset.pattern.permute.xlu0 0
        %1139 = vperm.xlu0 %1138, %v1101
        %v1140 = vpop.permute.xlu0 %1139
        %v1142 = vmul.f32 %v1078, %v1105
        %v1143 = vmul.f32 %v1079, %v1110
        %v1144 = vmul.f32 %v1080, %v1115
        %v1145 = vmul.f32 %v1081, %v1120
        %v1146 = vmul.f32 %v1082, %v1125
        %v1147 = vmul.f32 %v1083, %v1130
        %v1148 = vmul.f32 %v1084, %v1135
        %v1149 = vmul.f32 %v1085, %v1140
        %v1150 = vpack.c.bf16 %v1143, %v1142
        %v1151 = vpack.c.bf16 %v1145, %v1144
        %v1152 = vpack.c.bf16 %v1147, %v1146
        %v1153 = vpack.c.bf16 %v1149, %v1148
        %v1158 = vunpack.c.l.b16 %v1150
        %v1159 = vunpack.c.h.b16 %v1150
        %v1160 = vunpack.c.l.b16 %v1151
        %v1161 = vunpack.c.h.b16 %v1151
        %v1162 = vunpack.c.l.b16 %v1152
        %v1163 = vunpack.c.h.b16 %v1152
        %v1164 = vunpack.c.l.b16 %v1153
        %v1165 = vunpack.c.h.b16 %v1153
        %v1166 = vpack.c.b16 %v1158, %v1158
        %v1167 = vpack.c.b16 %v1159, %v1159
        %v1168 = vpack.c.b16 %v1160, %v1160
        %v1169 = vpack.c.b16 %v1161, %v1161
        %v1170 = vpack.c.b16 %v1162, %v1162
        %v1171 = vpack.c.b16 %v1163, %v1163
        %v1172 = vpack.c.b16 %v1164, %v1164
        %v1173 = vpack.c.b16 %v1165, %v1165
        %1182 = vst [vmem:[%s337] sm:$0xf] %v1166
        %1183 = vst [vmem:[%s337 + $0x4] sm:$0xf] %v1167
        %1184 = vst [vmem:[%s337 + $0x8] sm:$0xf] %v1168
        %1185 = vst [vmem:[%s337 + $0xc] sm:$0xf] %v1169
        %1186 = vst [vmem:[%s337 + $0x10] sm:$0xf] %v1170
        %1187 = vst [vmem:[%s337 + $0x14] sm:$0xf] %v1171
        %1188 = vst [vmem:[%s337 + $0x18] sm:$0xf] %v1172
        %1189 = vst [vmem:[%s337 + $0x1c] sm:$0xf] %v1173
      $region40: #{vitvqgan_forward.39} parent=31 // pred_fallthru
        _
      %s1190 = smul.u32 2, %s20
      %p1191 = scmp.lt.s32.totalorder %s19, 1
      %s1192 = scalar_select %p1191, %s19, 1
      %p1193 = scmp.lt.s32.totalorder %s1190, 1
      %s1194 = scalar_select %p1193, %s1190, 1
      %s1195 = smul.addr %s1192, 8
      %s1196 = sadd.s32 %s1194, %s1195
      %s1197 = smul.addr %s1196, 4
      %s1198 = scalar_lea.vmem %s3, %s1197
      // Predicated region
      $region41: #{vitvqgan_forward.39} parent=31 // pred_check
        %p1199 = pneg %p147
      $region42: #{vitvqgan_forward.39} parent=31 // pred_check_branch
        %1201 = sbr.rel (%p1199) target = $region44
      $region43: #{vitvqgan_forward.39} parent=31 // pred_region
        %s1202 = smul.u32 2, %s20
      $region44: #{vitvqgan_forward.39} parent=31 // pred_fallthru
        _
    $region32: #{vitvqgan_forward.39} parent=5 // pred_fallthru
      _
    %p1203 = scmp.le.s32.totalorder 2, %s9
    // Predicated region
    $region45: #{vitvqgan_forward.39} parent=5 // pred_check
      %p1204 = pneg %p1203
    $region46: #{vitvqgan_forward.39} parent=5 // pred_check_branch
      %1206 = sbr.rel (%p1204) target = $region48
    $region47: #{vitvqgan_forward.39} parent=5 // pred_region
      %s1207 = ssub.s32 %s9, 2
      // Predicated region
      $region49: #{vitvqgan_forward.39} parent=47 // pred_check
        %p1208 = pneg %p153
      $region50: #{vitvqgan_forward.39} parent=47 // pred_check_branch
        %1210 = sbr.rel (%p1208) target = $region52
      $region51: #{vitvqgan_forward.39} parent=47 // pred_region
        %s1211 = smul.u32 2, %s23
        %p1212 = scmp.lt.s32.totalorder %s22, 1
        %s1213 = scalar_select %p1212, %s22, 1
        %p1214 = scmp.lt.s32.totalorder %s1211, 1
        %s1215 = scalar_select %p1214, %s1211, 1
        %s1216 = smul.addr %s1213, 8
        %s1217 = sadd.s32 %s1215, %s1216
        %s1218 = smul.addr %s1217, 4
        %s1219 = scalar_lea.vmem %s3, %s1218
      $region52: #{vitvqgan_forward.39} parent=47 // pred_fallthru
        _
    $region48: #{vitvqgan_forward.39} parent=5 // pred_fallthru
      _
  $region6: #{vitvqgan_forward.39} parent=0 // loop_footer
    %s13 = sadd.s32 1, %s9
  $region7: #{vitvqgan_forward.39} parent=0 // loop_footer_branch
    %8 = sbr.rel target = $region3
  $region8: #{vitvqgan_forward.39} parent=0 // loop_exit
    _

// kernel: vitvqgan_forward.43
$region0: #{vitvqgan_forward.43}
  #allocation0 [shape = 'u32[]', space=smem, size = 0x4, offset = 0x4, fixed_abs, tag = 'smem constant byte address 0x4 - core index']
  #allocation1 [shape = 'u32[144,128]{1,0:T(1,128)}', space=vmem, size = 0x12000, scoped, tag = 'internal scratch']
  #allocation2 [shape = 'f32[32,128]{1,0:T(8,128)}', space=vmem, size = 0x4000, scoped, tag = 'scratch operand']
  %s0 = inlined_call_operand.vmem [shape: bf16[32,256], index: 0, kind: input, shape index: {}]
  %s1 = inlined_call_operand.vmem [shape: bf16[256,128], index: 1, kind: input, shape index: {}]
  %s2 = inlined_call_operand.vmem [shape: f32[1,128], index: 2, kind: input, shape index: {}]
  %s3 = inlined_call_operand.vmem [shape: bf16[32,128], index: 3, kind: input, shape index: {}]
  %s4 = inlined_call_operand.vmem [shape: bf16[32,128], index: 4, kind: output, shape index: {}]
  %s5 = sld [smem:[#allocation0]]
  $region34: #{vitvqgan_forward.43} parent=0
    _
  %s7 = ssub.s32 1, %s5
  %s8 = scalar_select 0, %s7, %s5
  // Predicated region
  $region2: #{vitvqgan_forward.43} parent=0 // pred_check
    _
  $region3: #{vitvqgan_forward.43} parent=0 // pred_check_branch
    %10 = sbr.rel (0) target = $region5
  $region4: #{vitvqgan_forward.43} parent=0 // pred_region
    _
  $region5: #{vitvqgan_forward.43} parent=0 // pred_fallthru
    _
  // Predicated region
  $region6: #{vitvqgan_forward.43} parent=0 // pred_check
    _
  $region7: #{vitvqgan_forward.43} parent=0 // pred_check_branch
    %12 = sbr.rel (0) target = $region9
  $region8: #{vitvqgan_forward.43} parent=0 // pred_region
    _
  $region9: #{vitvqgan_forward.43} parent=0 // pred_fallthru
    _
  // Predicated region
  $region10: #{vitvqgan_forward.43} parent=0 // pred_check
    _
  $region11: #{vitvqgan_forward.43} parent=0 // pred_check_branch
    %14 = sbr.rel (0) target = $region13
  $region12: #{vitvqgan_forward.43} parent=0 // pred_region
    _
  $region13: #{vitvqgan_forward.43} parent=0 // pred_fallthru
    _
  // Predicated region
  $region14: #{vitvqgan_forward.43} parent=0 // pred_check
    _
  $region15: #{vitvqgan_forward.43} parent=0 // pred_check_branch
    %16 = sbr.rel (0) target = $region17
  $region16: #{vitvqgan_forward.43} parent=0 // pred_region
    _
  $region17: #{vitvqgan_forward.43} parent=0 // pred_fallthru
    _
  %p18 = scmp.eq.s32.totalorder 0, 0
  // Predicated region
  $region18: #{vitvqgan_forward.43} parent=0 // pred_check
    %p19 = pneg %p18
  $region19: #{vitvqgan_forward.43} parent=0 // pred_check_branch
    %21 = sbr.rel (%p19) target = $region21
  $region20: #{vitvqgan_forward.43} parent=0 // pred_region
    %22 = vst [vmem:[#allocation2] sm:$0xff] 0.0
    %23 = vst [vmem:[#allocation2 + $0x8] sm:$0xff] 0.0
    %24 = vst [vmem:[#allocation2 + $0x10] sm:$0xff] 0.0
    %25 = vst [vmem:[#allocation2 + $0x18] sm:$0xff] 0.0
  $region21: #{vitvqgan_forward.43} parent=0 // pred_fallthru
    _
  %v26 = vld [vmem:[#allocation2] sm:$0xff]
  %v27 = vld [vmem:[#allocation2 + $0x8] sm:$0xff]
  %v28 = vld [vmem:[#allocation2 + $0x10] sm:$0xff]
  %v29 = vld [vmem:[#allocation2 + $0x18] sm:$0xff]
  %v30 = vld [vmem:[%s0] sm:$0xff]
  %v31 = vld [vmem:[%s0 + $0x8] sm:$0xff]
  %v32 = vld [vmem:[%s0 + $0x10] sm:$0xff]
  %v33 = vld [vmem:[%s0 + $0x18] sm:$0xff]
  %v34 = vld [vmem:[%s1] sm:$0xf]
  %v35 = vld [vmem:[%s1 + $0x4] sm:$0xf]
  %v36 = vld [vmem:[%s1 + $0x8] sm:$0xf]
  %v37 = vld [vmem:[%s1 + $0xc] sm:$0xf]
  %v38 = vld [vmem:[%s1 + $0x10] sm:$0xf]
  %v39 = vld [vmem:[%s1 + $0x14] sm:$0xf]
  %v40 = vld [vmem:[%s1 + $0x18] sm:$0xf]
  %v41 = vld [vmem:[%s1 + $0x1c] sm:$0xf]
  %v42 = vld [vmem:[%s1 + $0x20] sm:$0xf]
  %v43 = vld [vmem:[%s1 + $0x24] sm:$0xf]
  %v44 = vld [vmem:[%s1 + $0x28] sm:$0xf]
  %v45 = vld [vmem:[%s1 + $0x2c] sm:$0xf]
  %v46 = vld [vmem:[%s1 + $0x30] sm:$0xf]
  %v47 = vld [vmem:[%s1 + $0x34] sm:$0xf]
  %v48 = vld [vmem:[%s1 + $0x38] sm:$0xf]
  %v49 = vld [vmem:[%s1 + $0x3c] sm:$0xf]
  %v50 = vld [vmem:[%s1 + $0x40] sm:$0xf]
  %v51 = vld [vmem:[%s1 + $0x44] sm:$0xf]
  %v52 = vld [vmem:[%s1 + $0x48] sm:$0xf]
  %v53 = vld [vmem:[%s1 + $0x4c] sm:$0xf]
  %v54 = vld [vmem:[%s1 + $0x50] sm:$0xf]
  %v55 = vld [vmem:[%s1 + $0x54] sm:$0xf]
  %v56 = vld [vmem:[%s1 + $0x58] sm:$0xf]
  %v57 = vld [vmem:[%s1 + $0x5c] sm:$0xf]
  %v58 = vld [vmem:[%s1 + $0x60] sm:$0xf]
  %v59 = vld [vmem:[%s1 + $0x64] sm:$0xf]
  %v60 = vld [vmem:[%s1 + $0x68] sm:$0xf]
  %v61 = vld [vmem:[%s1 + $0x6c] sm:$0xf]
  %v62 = vld [vmem:[%s1 + $0x70] sm:$0xf]
  %v63 = vld [vmem:[%s1 + $0x74] sm:$0xf]
  %v64 = vld [vmem:[%s1 + $0x78] sm:$0xf]
  %v65 = vld [vmem:[%s1 + $0x7c] sm:$0xf]
  %v70 = vunpack.c.l.b16 %v30
  %v71 = vunpack.c.h.b16 %v30
  %v72 = vunpack.c.l.b16 %v31
  %v73 = vunpack.c.h.b16 %v31
  %v74 = vunpack.c.l.b16 %v32
  %v75 = vunpack.c.h.b16 %v32
  %v76 = vunpack.c.l.b16 %v33
  %v77 = vunpack.c.h.b16 %v33
  %v78 = vpack.c.b16 %v72, %v70
  %v79 = vpack.c.b16 %v73, %v71
  %v80 = vpack.c.b16 %v76, %v74
  %v81 = vpack.c.b16 %v77, %v75
  %v118 = vunpack.c.l.b16 %v34
  %v119 = vunpack.c.l.b16 %v35
  %v120 = vunpack.c.l.b16 %v36
  %v121 = vunpack.c.l.b16 %v37
  %v122 = vunpack.c.l.b16 %v38
  %v123 = vunpack.c.l.b16 %v39
  %v124 = vunpack.c.l.b16 %v40
  %v125 = vunpack.c.l.b16 %v41
  %v126 = vunpack.c.l.b16 %v42
  %v127 = vunpack.c.l.b16 %v43
  %v128 = vunpack.c.l.b16 %v44
  %v129 = vunpack.c.l.b16 %v45
  %v130 = vunpack.c.l.b16 %v46
  %v131 = vunpack.c.l.b16 %v47
  %v132 = vunpack.c.l.b16 %v48
  %v133 = vunpack.c.l.b16 %v49
  %v134 = vunpack.c.l.b16 %v50
  %v135 = vunpack.c.l.b16 %v51
  %v136 = vunpack.c.l.b16 %v52
  %v137 = vunpack.c.l.b16 %v53
  %v138 = vunpack.c.l.b16 %v54
  %v139 = vunpack.c.l.b16 %v55
  %v140 = vunpack.c.l.b16 %v56
  %v141 = vunpack.c.l.b16 %v57
  %v142 = vunpack.c.l.b16 %v58
  %v143 = vunpack.c.l.b16 %v59
  %v144 = vunpack.c.l.b16 %v60
  %v145 = vunpack.c.l.b16 %v61
  %v146 = vunpack.c.l.b16 %v62
  %v147 = vunpack.c.l.b16 %v63
  %v148 = vunpack.c.l.b16 %v64
  %v149 = vunpack.c.l.b16 %v65
  %v150 = vpack.c.b16 %v119, %v118
  %v151 = vpack.c.b16 %v121, %v120
  %v152 = vpack.c.b16 %v123, %v122
  %v153 = vpack.c.b16 %v125, %v124
  %v154 = vpack.c.b16 %v127, %v126
  %v155 = vpack.c.b16 %v129, %v128
  %v156 = vpack.c.b16 %v131, %v130
  %v157 = vpack.c.b16 %v133, %v132
  %v158 = vpack.c.b16 %v135, %v134
  %v159 = vpack.c.b16 %v137, %v136
  %v160 = vpack.c.b16 %v139, %v138
  %v161 = vpack.c.b16 %v141, %v140
  %v162 = vpack.c.b16 %v143, %v142
  %v163 = vpack.c.b16 %v145, %v144
  %v164 = vpack.c.b16 %v147, %v146
  %v165 = vpack.c.b16 %v149, %v148
  %182 = vmatprep.subr.bf16.mxu0 0
  %183 = vmatpush1.bf16.msra.mxu0 %v150
  %184 = vmatprep.subr.bf16.mxu0 0
  %185 = vmatpush1.bf16.msra.mxu0 %v151
  %186 = vmatprep.subr.bf16.mxu0 0
  %187 = vmatpush1.bf16.msra.mxu0 %v152
  %188 = vmatprep.subr.bf16.mxu0 0
  %189 = vmatpush1.bf16.msra.mxu0 %v153
  %190 = vmatprep.subr.bf16.mxu0 0
  %191 = vmatpush1.bf16.msra.mxu0 %v154
  %192 = vmatprep.subr.bf16.mxu0 0
  %193 = vmatpush1.bf16.msra.mxu0 %v155
  %194 = vmatprep.subr.bf16.mxu0 0
  %195 = vmatpush1.bf16.msra.mxu0 %v156
  %196 = vmatprep.subr.bf16.mxu0 0
  %197 = vmatpush1.bf16.msra.mxu0 %v157
  %198 = vmatprep.subr.bf16.mxu0 0
  %199 = vmatpush1.bf16.msra.mxu0 %v158
  %200 = vmatprep.subr.bf16.mxu0 0
  %201 = vmatpush1.bf16.msra.mxu0 %v159
  %202 = vmatprep.subr.bf16.mxu0 0
  %203 = vmatpush1.bf16.msra.mxu0 %v160
  %204 = vmatprep.subr.bf16.mxu0 0
  %205 = vmatpush1.bf16.msra.mxu0 %v161
  %206 = vmatprep.subr.bf16.mxu0 0
  %207 = vmatpush1.bf16.msra.mxu0 %v162
  %208 = vmatprep.subr.bf16.mxu0 0
  %209 = vmatpush1.bf16.msra.mxu0 %v163
  %210 = vmatprep.subr.bf16.mxu0 0
  %211 = vmatpush1.bf16.msra.mxu0 %v164
  %212 = vmatprep.subr.bf16.mxu0 0
  %213 = vmatpush1.bf16.msra.mxu0 %v165
  %214 = vmatprep.mubr.bf16.mxu0 %v79
  %215 = vmatmul.mubr.bf16.gmra.mrb[0].mxu0 %v78
  %v216 = vpop.f32.mrb[0].mxu0
  %v217 = vadd.f32 0.0, %v216
  %v218 = vpop.f32.mrb[0].mxu0
  %v219 = vpop.f32.mrb[0].mxu0
  %v220 = vadd.f32 0.0, %v219
  %v221 = vpop.f32.mrb[0].mxu0
  %222 = vmatprep.mubr.bf16.mxu0 %v81
  %223 = vmatmul.mubr.bf16.gmra.mrb[0].mxu0 %v80
  %v224 = vpop.f32.mrb[0].mxu0
  %v225 = vadd.f32 0.0, %v224
  %v226 = vpop.f32.mrb[0].mxu0
  %v227 = vpop.f32.mrb[0].mxu0
  %v228 = vadd.f32 0.0, %v227
  %v229 = vpop.f32.mrb[0].mxu0
  %230 = vdwg.mxu0
  %v231 = vadd.f32 %v26, %v217
  %v232 = vadd.f32 %v27, %v220
  %v233 = vadd.f32 %v28, %v225
  %v234 = vadd.f32 %v29, %v228
  %235 = vst [vmem:[#allocation2] sm:$0xff] %v231
  %236 = vst [vmem:[#allocation2 + $0x8] sm:$0xff] %v232
  %237 = vst [vmem:[#allocation2 + $0x10] sm:$0xff] %v233
  %238 = vst [vmem:[#allocation2 + $0x18] sm:$0xff] %v234
  // Predicated region
  $region22: #{vitvqgan_forward.43} parent=0 // pred_check
    %p239 = pneg %p18
  $region23: #{vitvqgan_forward.43} parent=0 // pred_check_branch
    %241 = sbr.rel (%p239) target = $region25
  $region24: #{vitvqgan_forward.43} parent=0 // pred_region
    %v242 = vld [vmem:[#allocation2] sm:$0xff]
    %v243 = vld [vmem:[#allocation2 + $0x8] sm:$0xff]
    %v244 = vld [vmem:[#allocation2 + $0x10] sm:$0xff]
    %v245 = vld [vmem:[#allocation2 + $0x18] sm:$0xff]
    %v246 = vld [vmem:[%s2] sm:$0x1]
    %v248 = vlaneseq
    %v249 = vshrl.u32 %v248, 7
    %v250 = vsub.s32 0, %v249
    %v251 = vrot.slane %v246, %v250
    %v253 = vadd.f32 %v242, %v251
    %v254 = vadd.f32 %v243, %v251
    %v255 = vadd.f32 %v244, %v251
    %v256 = vadd.f32 %v245, %v251
    %v257 = vld [vmem:[%s3] sm:$0xf]
    %v258 = vld [vmem:[%s3 + $0x4] sm:$0xf]
    %v259 = vld [vmem:[%s3 + $0x8] sm:$0xf]
    %v260 = vld [vmem:[%s3 + $0xc] sm:$0xf]
    %v261 = vunpack.c.l.bf16 %v257
    %v262 = vunpack.c.l.bf16 %v258
    %v263 = vunpack.c.l.bf16 %v259
    %v264 = vunpack.c.l.bf16 %v260
    %v265 = vadd.f32 %v253, %v261
    %v266 = vadd.f32 %v254, %v262
    %v267 = vadd.f32 %v255, %v263
    %v268 = vadd.f32 %v256, %v264
    %v269 = vpack.c.bf16 %v266, %v265
    %v270 = vpack.c.bf16 %v268, %v267
    %v273 = vunpack.c.l.b16 %v269
    %v274 = vunpack.c.h.b16 %v269
    %v275 = vunpack.c.l.b16 %v270
    %v276 = vunpack.c.h.b16 %v270
    %v277 = vpack.c.b16 %v273, %v273
    %v278 = vpack.c.b16 %v274, %v274
    %v279 = vpack.c.b16 %v275, %v275
    %v280 = vpack.c.b16 %v276, %v276
    %285 = vst [vmem:[%s4] sm:$0xf] %v277
    %286 = vst [vmem:[%s4 + $0x4] sm:$0xf] %v278
    %287 = vst [vmem:[%s4 + $0x8] sm:$0xf] %v279
    %288 = vst [vmem:[%s4 + $0xc] sm:$0xf] %v280
  $region25: #{vitvqgan_forward.43} parent=0 // pred_fallthru
    _
  // Predicated region
  $region26: #{vitvqgan_forward.43} parent=0 // pred_check
    _
  $region27: #{vitvqgan_forward.43} parent=0 // pred_check_branch
    %290 = sbr.rel (0) target = $region29
  $region28: #{vitvqgan_forward.43} parent=0 // pred_region
    _
  $region29: #{vitvqgan_forward.43} parent=0 // pred_fallthru
    _
  // Predicated region
  $region30: #{vitvqgan_forward.43} parent=0 // pred_check
    _
  $region31: #{vitvqgan_forward.43} parent=0 // pred_check_branch
    %292 = sbr.rel (0) target = $region33
  $region32: #{vitvqgan_forward.43} parent=0 // pred_region
    _
  $region33: #{vitvqgan_forward.43} parent=0 // pred_fallthru
    _

// kernel: vitvqgan_forward.52
$region0: #{vitvqgan_forward.52}
  #allocation0 [shape = 'u32[]', space=smem, size = 0x4, offset = 0x4, fixed_abs, tag = 'smem constant byte address 0x4 - core index']
  #allocation1 [shape = 'u32[144,128]{1,0:T(1,128)}', space=vmem, size = 0x12000, scoped, tag = 'internal scratch']
  #allocation2 [shape = 'f32[32,128]{1,0:T(8,128)}', space=vmem, size = 0x4000, scoped, tag = 'scratch operand']
  %s0 = inlined_call_operand.vmem [shape: bf16[32,128], index: 0, kind: input, shape index: {}]
  %s1 = inlined_call_operand.vmem [shape: bf16[128,128], index: 1, kind: input, shape index: {}]
  %s2 = inlined_call_operand.vmem [shape: f32[1,128], index: 2, kind: input, shape index: {}]
  %s3 = inlined_call_operand.vmem [shape: f32[32,128], index: 3, kind: output, shape index: {}]
  %s4 = sld [smem:[#allocation0]]
  $region30: #{vitvqgan_forward.52} parent=0
    _
  %s6 = ssub.s32 1, %s4
  %s7 = scalar_select 0, %s6, %s4
  // Predicated region
  $region2: #{vitvqgan_forward.52} parent=0 // pred_check
    _
  $region3: #{vitvqgan_forward.52} parent=0 // pred_check_branch
    %9 = sbr.rel (0) target = $region5
  $region4: #{vitvqgan_forward.52} parent=0 // pred_region
    _
  $region5: #{vitvqgan_forward.52} parent=0 // pred_fallthru
    _
  // Predicated region
  $region6: #{vitvqgan_forward.52} parent=0 // pred_check
    _
  $region7: #{vitvqgan_forward.52} parent=0 // pred_check_branch
    %11 = sbr.rel (0) target = $region9
  $region8: #{vitvqgan_forward.52} parent=0 // pred_region
    _
  $region9: #{vitvqgan_forward.52} parent=0 // pred_fallthru
    _
  // Predicated region
  $region10: #{vitvqgan_forward.52} parent=0 // pred_check
    _
  $region11: #{vitvqgan_forward.52} parent=0 // pred_check_branch
    %13 = sbr.rel (0) target = $region13
  $region12: #{vitvqgan_forward.52} parent=0 // pred_region
    _
  $region13: #{vitvqgan_forward.52} parent=0 // pred_fallthru
    _
  %p15 = scmp.eq.s32.totalorder 0, 0
  // Predicated region
  $region14: #{vitvqgan_forward.52} parent=0 // pred_check
    %p16 = pneg %p15
  $region15: #{vitvqgan_forward.52} parent=0 // pred_check_branch
    %18 = sbr.rel (%p16) target = $region17
  $region16: #{vitvqgan_forward.52} parent=0 // pred_region
    %19 = vst [vmem:[#allocation2] sm:$0xff] 0.0
    %20 = vst [vmem:[#allocation2 + $0x8] sm:$0xff] 0.0
    %21 = vst [vmem:[#allocation2 + $0x10] sm:$0xff] 0.0
    %22 = vst [vmem:[#allocation2 + $0x18] sm:$0xff] 0.0
  $region17: #{vitvqgan_forward.52} parent=0 // pred_fallthru
    _
  %v23 = vld [vmem:[#allocation2] sm:$0xff]
  %v24 = vld [vmem:[#allocation2 + $0x8] sm:$0xff]
  %v25 = vld [vmem:[#allocation2 + $0x10] sm:$0xff]
  %v26 = vld [vmem:[#allocation2 + $0x18] sm:$0xff]
  %v27 = vld [vmem:[%s0] sm:$0xf]
  %v28 = vld [vmem:[%s0 + $0x4] sm:$0xf]
  %v29 = vld [vmem:[%s0 + $0x8] sm:$0xf]
  %v30 = vld [vmem:[%s0 + $0xc] sm:$0xf]
  %v31 = vld [vmem:[%s1] sm:$0xf]
  %v32 = vld [vmem:[%s1 + $0x4] sm:$0xf]
  %v33 = vld [vmem:[%s1 + $0x8] sm:$0xf]
  %v34 = vld [vmem:[%s1 + $0xc] sm:$0xf]
  %v35 = vld [vmem:[%s1 + $0x10] sm:$0xf]
  %v36 = vld [vmem:[%s1 + $0x14] sm:$0xf]
  %v37 = vld [vmem:[%s1 + $0x18] sm:$0xf]
  %v38 = vld [vmem:[%s1 + $0x1c] sm:$0xf]
  %v39 = vld [vmem:[%s1 + $0x20] sm:$0xf]
  %v40 = vld [vmem:[%s1 + $0x24] sm:$0xf]
  %v41 = vld [vmem:[%s1 + $0x28] sm:$0xf]
  %v42 = vld [vmem:[%s1 + $0x2c] sm:$0xf]
  %v43 = vld [vmem:[%s1 + $0x30] sm:$0xf]
  %v44 = vld [vmem:[%s1 + $0x34] sm:$0xf]
  %v45 = vld [vmem:[%s1 + $0x38] sm:$0xf]
  %v46 = vld [vmem:[%s1 + $0x3c] sm:$0xf]
  %v51 = vunpack.c.l.b16 %v27
  %v52 = vunpack.c.l.b16 %v28
  %v53 = vunpack.c.l.b16 %v29
  %v54 = vunpack.c.l.b16 %v30
  %v55 = vpack.c.b16 %v52, %v51
  %v56 = vpack.c.b16 %v54, %v53
  %v75 = vunpack.c.l.b16 %v31
  %v76 = vunpack.c.l.b16 %v32
  %v77 = vunpack.c.l.b16 %v33
  %v78 = vunpack.c.l.b16 %v34
  %v79 = vunpack.c.l.b16 %v35
  %v80 = vunpack.c.l.b16 %v36
  %v81 = vunpack.c.l.b16 %v37
  %v82 = vunpack.c.l.b16 %v38
  %v83 = vunpack.c.l.b16 %v39
  %v84 = vunpack.c.l.b16 %v40
  %v85 = vunpack.c.l.b16 %v41
  %v86 = vunpack.c.l.b16 %v42
  %v87 = vunpack.c.l.b16 %v43
  %v88 = vunpack.c.l.b16 %v44
  %v89 = vunpack.c.l.b16 %v45
  %v90 = vunpack.c.l.b16 %v46
  %v91 = vpack.c.b16 %v76, %v75
  %v92 = vpack.c.b16 %v78, %v77
  %v93 = vpack.c.b16 %v80, %v79
  %v94 = vpack.c.b16 %v82, %v81
  %v95 = vpack.c.b16 %v84, %v83
  %v96 = vpack.c.b16 %v86, %v85
  %v97 = vpack.c.b16 %v88, %v87
  %v98 = vpack.c.b16 %v90, %v89
  %107 = vmatprep.subr.bf16.mxu0 0
  %108 = vmatpush1.bf16.msra.mxu0 %v91
  %109 = vmatprep.subr.bf16.mxu0 0
  %110 = vmatpush1.bf16.msra.mxu0 %v92
  %111 = vmatprep.subr.bf16.mxu0 0
  %112 = vmatpush1.bf16.msra.mxu0 %v93
  %113 = vmatprep.subr.bf16.mxu0 0
  %114 = vmatpush1.bf16.msra.mxu0 %v94
  %115 = vmatprep.subr.bf16.mxu0 0
  %116 = vmatpush1.bf16.msra.mxu0 %v95
  %117 = vmatprep.subr.bf16.mxu0 0
  %118 = vmatpush1.bf16.msra.mxu0 %v96
  %119 = vmatprep.subr.bf16.mxu0 0
  %120 = vmatpush1.bf16.msra.mxu0 %v97
  %121 = vmatprep.subr.bf16.mxu0 0
  %122 = vmatpush1.bf16.msra.mxu0 %v98
  %123 = vmatprep.subr.bf16.mxu0 0
  %124 = vmatpush1.bf16.msra.mxu0 0
  %125 = vmatprep.subr.bf16.mxu0 0
  %126 = vmatpush1.bf16.msra.mxu0 0
  %127 = vmatprep.subr.bf16.mxu0 0
  %128 = vmatpush1.bf16.msra.mxu0 0
  %129 = vmatprep.subr.bf16.mxu0 0
  %130 = vmatpush1.bf16.msra.mxu0 0
  %131 = vmatprep.subr.bf16.mxu0 0
  %132 = vmatpush1.bf16.msra.mxu0 0
  %133 = vmatprep.subr.bf16.mxu0 0
  %134 = vmatpush1.bf16.msra.mxu0 0
  %135 = vmatprep.subr.bf16.mxu0 0
  %136 = vmatpush1.bf16.msra.mxu0 0
  %137 = vmatprep.subr.bf16.mxu0 0
  %138 = vmatpush1.bf16.msra.mxu0 0
  %139 = vmatprep.mubr.bf16.mxu0 0
  %140 = vmatmul.mubr.bf16.gmra.mrb[0].mxu0 %v55
  %v141 = vpop.f32.mrb[0].mxu0
  %v142 = vadd.f32 0.0, %v141
  %v143 = vpop.f32.mrb[0].mxu0
  %v144 = vpop.f32.mrb[0].mxu0
  %v145 = vadd.f32 0.0, %v144
  %v146 = vpop.f32.mrb[0].mxu0
  %147 = vmatprep.mubr.bf16.mxu0 0
  %148 = vmatmul.mubr.bf16.gmra.mrb[0].mxu0 %v56
  %v149 = vpop.f32.mrb[0].mxu0
  %v150 = vadd.f32 0.0, %v149
  %v151 = vpop.f32.mrb[0].mxu0
  %v152 = vpop.f32.mrb[0].mxu0
  %v153 = vadd.f32 0.0, %v152
  %v154 = vpop.f32.mrb[0].mxu0
  %155 = vdwg.mxu0
  %v156 = vadd.f32 %v23, %v142
  %v157 = vadd.f32 %v24, %v145
  %v158 = vadd.f32 %v25, %v150
  %v159 = vadd.f32 %v26, %v153
  %160 = vst [vmem:[#allocation2] sm:$0xff] %v156
  %161 = vst [vmem:[#allocation2 + $0x8] sm:$0xff] %v157
  %162 = vst [vmem:[#allocation2 + $0x10] sm:$0xff] %v158
  %163 = vst [vmem:[#allocation2 + $0x18] sm:$0xff] %v159
  // Predicated region
  $region18: #{vitvqgan_forward.52} parent=0 // pred_check
    %p164 = pneg %p15
  $region19: #{vitvqgan_forward.52} parent=0 // pred_check_branch
    %166 = sbr.rel (%p164) target = $region21
  $region20: #{vitvqgan_forward.52} parent=0 // pred_region
    %v167 = vld [vmem:[#allocation2] sm:$0xff]
    %v168 = vld [vmem:[#allocation2 + $0x8] sm:$0xff]
    %v169 = vld [vmem:[#allocation2 + $0x10] sm:$0xff]
    %v170 = vld [vmem:[#allocation2 + $0x18] sm:$0xff]
    %v171 = vld [vmem:[%s2] sm:$0x1]
    %v173 = vlaneseq
    %v174 = vshrl.u32 %v173, 7
    %v175 = vsub.s32 0, %v174
    %v176 = vrot.slane %v171, %v175
    %v178 = vadd.f32 %v167, %v176
    %v179 = vadd.f32 %v168, %v176
    %v180 = vadd.f32 %v169, %v176
    %v181 = vadd.f32 %v170, %v176
    %182 = vst [vmem:[%s3] sm:$0xff] %v178
    %183 = vst [vmem:[%s3 + $0x8] sm:$0xff] %v179
    %184 = vst [vmem:[%s3 + $0x10] sm:$0xff] %v180
    %185 = vst [vmem:[%s3 + $0x18] sm:$0xff] %v181
  $region21: #{vitvqgan_forward.52} parent=0 // pred_fallthru
    _
  // Predicated region
  $region22: #{vitvqgan_forward.52} parent=0 // pred_check
    _
  $region23: #{vitvqgan_forward.52} parent=0 // pred_check_branch
    %187 = sbr.rel (0) target = $region25
  $region24: #{vitvqgan_forward.52} parent=0 // pred_region
    _
  $region25: #{vitvqgan_forward.52} parent=0 // pred_fallthru
    _
  // Predicated region
  $region26: #{vitvqgan_forward.52} parent=0 // pred_check
    _
  $region27: #{vitvqgan_forward.52} parent=0 // pred_check_branch
    %189 = sbr.rel (0) target = $region29
  $region28: #{vitvqgan_forward.52} parent=0 // pred_region
    _
  $region29: #{vitvqgan_forward.52} parent=0 // pred_fallthru
    _

// kernel: vitvqgan_forward.53
$region0: #{vitvqgan_forward.53}
  #allocation0 [shape = 'u32[]', space=smem, size = 0x4, offset = 0x4, fixed_abs, tag = 'smem constant byte address 0x4 - core index']
  #allocation1 [shape = 'u32[144,128]{1,0:T(1,128)}', space=vmem, size = 0x12000, scoped, tag = 'internal scratch']
  %s0 = inlined_call_operand.vmem [shape: f32[32,32], index: 0, kind: input, shape index: {}]
  %s1 = inlined_call_operand.vmem [shape: f32[64,32], index: 1, kind: input, shape index: {}]
  %s2 = inlined_call_operand.vmem [shape: f32[32,32], index: 2, kind: output, shape index: {0}]
  %s3 = inlined_call_operand.vmem [shape: s32[32,1], index: 3, kind: output, shape index: {1}]
  %s4 = inlined_call_operand.vmem [shape: f32[32,1], index: 4, kind: output, shape index: {2}]
  %5 = xla_tuple %s2, %s3, %s4
  %s6 = sld [smem:[#allocation0]]
  $region34: #{vitvqgan_forward.53} parent=0
    _
  %s8 = ssub.s32 1, %s6
  %s9 = scalar_select 0, %s8, %s6
  // Predicated region
  $region2: #{vitvqgan_forward.53} parent=0 // pred_check
    _
  $region3: #{vitvqgan_forward.53} parent=0 // pred_check_branch
    %11 = sbr.rel (0) target = $region5
  $region4: #{vitvqgan_forward.53} parent=0 // pred_region
    _
  $region5: #{vitvqgan_forward.53} parent=0 // pred_fallthru
    _
  // Predicated region
  $region6: #{vitvqgan_forward.53} parent=0 // pred_check
    _
  $region7: #{vitvqgan_forward.53} parent=0 // pred_check_branch
    %13 = sbr.rel (0) target = $region9
  $region8: #{vitvqgan_forward.53} parent=0 // pred_region
    _
  $region9: #{vitvqgan_forward.53} parent=0 // pred_fallthru
    _
  %v14 = vld [vmem:[%s0] sm:$0xff]
  %v15 = vld [vmem:[%s0 + $0x8] sm:$0xff]
  %v16 = vld [vmem:[%s0 + $0x10] sm:$0xff]
  %v17 = vld [vmem:[%s0 + $0x18] sm:$0xff]
  %v18 = vld [vmem:[%s1] sm:$0xff]
  %v19 = vld [vmem:[%s1 + $0x8] sm:$0xff]
  %v20 = vld [vmem:[%s1 + $0x10] sm:$0xff]
  %v21 = vld [vmem:[%s1 + $0x18] sm:$0xff]
  %v22 = vld [vmem:[%s1 + $0x20] sm:$0xff]
  %v23 = vld [vmem:[%s1 + $0x28] sm:$0xff]
  %v24 = vld [vmem:[%s1 + $0x30] sm:$0xff]
  %v25 = vld [vmem:[%s1 + $0x38] sm:$0xff]
  %v26 = vmul.f32 %v14, %v14
  %v27 = vmul.f32 %v15, %v15
  %v28 = vmul.f32 %v16, %v16
  %v29 = vmul.f32 %v17, %v17
  %vm30 = vcmask 261120
  %v31 = vsel %vm30, %v26, 0.0
  %32 = vadd.xlane.f32.xlu0 %v31
  %v33 = vpop.xlane.xlu0 %32
  %v34 = vsel %vm30, %v27, 0.0
  %35 = vadd.xlane.f32.xlu0 %v34
  %v36 = vpop.xlane.xlu0 %35
  %v37 = vsel %vm30, %v28, 0.0
  %38 = vadd.xlane.f32.xlu0 %v37
  %v39 = vpop.xlane.xlu0 %38
  %v40 = vsel %vm30, %v29, 0.0
  %41 = vadd.xlane.f32.xlu0 %v40
  %v42 = vpop.xlane.xlu0 %41
  %v43 = vrsqrt.pop %v33
  %v44 = vmul.f32 %v33, %v43
  %vm45 = vcmp.eq.f32.partialorder %v33, inf
  %v46 = vsel %vm45, %v33, %v44
  %vm47 = vcmp.eq.f32.partialorder %v33, 0.0
  %v48 = vand.u32 %v33, 2147483648
  %v49 = vsel %vm47, %v48, %v46
  %v50 = vrsqrt.pop %v36
  %v51 = vmul.f32 %v36, %v50
  %vm52 = vcmp.eq.f32.partialorder %v36, inf
  %v53 = vsel %vm52, %v36, %v51
  %vm54 = vcmp.eq.f32.partialorder %v36, 0.0
  %v55 = vand.u32 %v36, 2147483648
  %v56 = vsel %vm54, %v55, %v53
  %v57 = vrsqrt.pop %v39
  %v58 = vmul.f32 %v39, %v57
  %vm59 = vcmp.eq.f32.partialorder %v39, inf
  %v60 = vsel %vm59, %v39, %v58
  %vm61 = vcmp.eq.f32.partialorder %v39, 0.0
  %v62 = vand.u32 %v39, 2147483648
  %v63 = vsel %vm61, %v62, %v60
  %v64 = vrsqrt.pop %v42
  %v65 = vmul.f32 %v42, %v64
  %vm66 = vcmp.eq.f32.partialorder %v42, inf
  %v67 = vsel %vm66, %v42, %v65
  %vm68 = vcmp.eq.f32.partialorder %v42, 0.0
  %v69 = vand.u32 %v42, 2147483648
  %v70 = vsel %vm68, %v69, %v67
  %v71 = vmax.f32 %v49, 1e-12
  %v72 = vmax.f32 %v56, 1e-12
  %v73 = vmax.f32 %v63, 1e-12
  %v74 = vmax.f32 %v70, 1e-12
  %v75 = vrcp.pop %v71
  %v76 = vmul.f32 %v14, %v75
  %v77 = vrcp.pop %v72
  %v78 = vmul.f32 %v15, %v77
  %v79 = vrcp.pop %v73
  %v80 = vmul.f32 %v16, %v79
  %v81 = vrcp.pop %v74
  %v82 = vmul.f32 %v17, %v81
  %v83 = vmul.f32 %v18, %v18
  %v84 = vmul.f32 %v19, %v19
  %v85 = vmul.f32 %v20, %v20
  %v86 = vmul.f32 %v21, %v21
  %v87 = vmul.f32 %v22, %v22
  %v88 = vmul.f32 %v23, %v23
  %v89 = vmul.f32 %v24, %v24
  %v90 = vmul.f32 %v25, %v25
  %v91 = vsel %vm30, %v83, 0.0
  %92 = vadd.xlane.f32.xlu0 %v91
  %v93 = vpop.xlane.xlu0 %92
  %v94 = vsel %vm30, %v84, 0.0
  %95 = vadd.xlane.f32.xlu0 %v94
  %v96 = vpop.xlane.xlu0 %95
  %v97 = vsel %vm30, %v85, 0.0
  %98 = vadd.xlane.f32.xlu0 %v97
  %v99 = vpop.xlane.xlu0 %98
  %v100 = vsel %vm30, %v86, 0.0
  %101 = vadd.xlane.f32.xlu0 %v100
  %v102 = vpop.xlane.xlu0 %101
  %v103 = vsel %vm30, %v87, 0.0
  %104 = vadd.xlane.f32.xlu0 %v103
  %v105 = vpop.xlane.xlu0 %104
  %v106 = vsel %vm30, %v88, 0.0
  %107 = vadd.xlane.f32.xlu0 %v106
  %v108 = vpop.xlane.xlu0 %107
  %v109 = vsel %vm30, %v89, 0.0
  %110 = vadd.xlane.f32.xlu0 %v109
  %v111 = vpop.xlane.xlu0 %110
  %v112 = vsel %vm30, %v90, 0.0
  %113 = vadd.xlane.f32.xlu0 %v112
  %v114 = vpop.xlane.xlu0 %113
  %v115 = vrsqrt.pop %v93
  %v116 = vmul.f32 %v93, %v115
  %vm117 = vcmp.eq.f32.partialorder %v93, inf
  %v118 = vsel %vm117, %v93, %v116
  %vm119 = vcmp.eq.f32.partialorder %v93, 0.0
  %v120 = vand.u32 %v93, 2147483648
  %v121 = vsel %vm119, %v120, %v118
  %v122 = vrsqrt.pop %v96
  %v123 = vmul.f32 %v96, %v122
  %vm124 = vcmp.eq.f32.partialorder %v96, inf
  %v125 = vsel %vm124, %v96, %v123
  %vm126 = vcmp.eq.f32.partialorder %v96, 0.0
  %v127 = vand.u32 %v96, 2147483648
  %v128 = vsel %vm126, %v127, %v125
  %v129 = vrsqrt.pop %v99
  %v130 = vmul.f32 %v99, %v129
  %vm131 = vcmp.eq.f32.partialorder %v99, inf
  %v132 = vsel %vm131, %v99, %v130
  %vm133 = vcmp.eq.f32.partialorder %v99, 0.0
  %v134 = vand.u32 %v99, 2147483648
  %v135 = vsel %vm133, %v134, %v132
  %v136 = vrsqrt.pop %v102
  %v137 = vmul.f32 %v102, %v136
  %vm138 = vcmp.eq.f32.partialorder %v102, inf
  %v139 = vsel %vm138, %v102, %v137
  %vm140 = vcmp.eq.f32.partialorder %v102, 0.0
  %v141 = vand.u32 %v102, 2147483648
  %v142 = vsel %vm140, %v141, %v139
  %v143 = vrsqrt.pop %v105
  %v144 = vmul.f32 %v105, %v143
  %vm145 = vcmp.eq.f32.partialorder %v105, inf
  %v146 = vsel %vm145, %v105, %v144
  %vm147 = vcmp.eq.f32.partialorder %v105, 0.0
  %v148 = vand.u32 %v105, 2147483648
  %v149 = vsel %vm147, %v148, %v146
  %v150 = vrsqrt.pop %v108
  %v151 = vmul.f32 %v108, %v150
  %vm152 = vcmp.eq.f32.partialorder %v108, inf
  %v153 = vsel %vm152, %v108, %v151
  %vm154 = vcmp.eq.f32.partialorder %v108, 0.0
  %v155 = vand.u32 %v108, 2147483648
  %v156 = vsel %vm154, %v155, %v153
  %v157 = vrsqrt.pop %v111
  %v158 = vmul.f32 %v111, %v157
  %vm159 = vcmp.eq.f32.partialorder %v111, inf
  %v160 = vsel %vm159, %v111, %v158
  %vm161 = vcmp.eq.f32.partialorder %v111, 0.0
  %v162 = vand.u32 %v111, 2147483648
  %v163 = vsel %vm161, %v162, %v160
  %v164 = vrsqrt.pop %v114
  %v165 = vmul.f32 %v114, %v164
  %vm166 = vcmp.eq.f32.partialorder %v114, inf
  %v167 = vsel %vm166, %v114, %v165
  %vm168 = vcmp.eq.f32.partialorder %v114, 0.0
  %v169 = vand.u32 %v114, 2147483648
  %v170 = vsel %vm168, %v169, %v167
  %v171 = vmax.f32 %v121, 1e-12
  %v172 = vmax.f32 %v128, 1e-12
  %v173 = vmax.f32 %v135, 1e-12
  %v174 = vmax.f32 %v142, 1e-12
  %v175 = vmax.f32 %v149, 1e-12
  %v176 = vmax.f32 %v156, 1e-12
  %v177 = vmax.f32 %v163, 1e-12
  %v178 = vmax.f32 %v170, 1e-12
  %v179 = vrcp.pop %v171
  %v180 = vmul.f32 %v18, %v179
  %v181 = vrcp.pop %v172
  %v182 = vmul.f32 %v19, %v181
  %v183 = vrcp.pop %v173
  %v184 = vmul.f32 %v20, %v183
  %v185 = vrcp.pop %v174
  %v186 = vmul.f32 %v21, %v185
  %v187 = vrcp.pop %v175
  %v188 = vmul.f32 %v22, %v187
  %v189 = vrcp.pop %v176
  %v190 = vmul.f32 %v23, %v189
  %v191 = vrcp.pop %v177
  %v192 = vmul.f32 %v24, %v191
  %v193 = vrcp.pop %v178
  %v194 = vmul.f32 %v25, %v193
  %v196 = vsel %vm30, %v76, 0
  %v199 = vsel %vm30, %v78, 0
  %v202 = vsel %vm30, %v80, 0
  %v205 = vsel %vm30, %v82, 0
  %v208 = vsel %vm30, %v180, 0
  %v211 = vsel %vm30, %v182, 0
  %v214 = vsel %vm30, %v184, 0
  %v217 = vsel %vm30, %v186, 0
  %v220 = vsel %vm30, %v188, 0
  %v223 = vsel %vm30, %v190, 0
  %v226 = vsel %vm30, %v192, 0
  %v229 = vsel %vm30, %v194, 0
  %231 = vmatprep.subr.mxu0 0.0
  %232 = vmatpush1.xpose.msra.mxu0 %v208
  %233 = vmatprep.subr.mxu0 0.0
  %234 = vmatpush1.xpose.msra.mxu0 %v211
  %235 = vmatprep.subr.mxu0 0.0
  %236 = vmatpush1.xpose.msra.mxu0 %v214
  %237 = vmatprep.subr.mxu0 0.0
  %238 = vmatpush1.xpose.msra.mxu0 %v217
  %239 = vmatprep.subr.mxu0 0.0
  %240 = vmatpush1.xpose.msra.mxu0 %v220
  %241 = vmatprep.subr.mxu0 0.0
  %242 = vmatpush1.xpose.msra.mxu0 %v223
  %243 = vmatprep.subr.mxu0 0.0
  %244 = vmatpush1.xpose.msra.mxu0 %v226
  %245 = vmatprep.subr.mxu0 0.0
  %246 = vmatpush1.xpose.msra.mxu0 %v229
  %247 = vmatprep.subr.mxu0 0.0
  %248 = vmatpush1.xpose.msra.mxu0 0.0
  %249 = vmatprep.subr.mxu0 0.0
  %250 = vmatpush1.xpose.msra.mxu0 0.0
  %251 = vmatprep.subr.mxu0 0.0
  %252 = vmatpush1.xpose.msra.mxu0 0.0
  %253 = vmatprep.subr.mxu0 0.0
  %254 = vmatpush1.xpose.msra.mxu0 0.0
  %255 = vmatprep.subr.mxu0 0.0
  %256 = vmatpush1.xpose.msra.mxu0 0.0
  %257 = vmatprep.subr.mxu0 0.0
  %258 = vmatpush1.xpose.msra.mxu0 0.0
  %259 = vmatprep.subr.mxu0 0.0
  %260 = vmatpush1.xpose.msra.mxu0 0.0
  %261 = vmatprep.subr.mxu0 0.0
  %262 = vmatpush1.xpose.msra.mxu0 0.0
  %263 = vmatprep.subr.mxu0 0.0
  %264 = vmatpush1.xpose.msra.mxu0 0.0
  %265 = vmatprep.subr.mxu0 0.0
  %266 = vmatpush1.xpose.msra.mxu0 0.0
  %267 = vmatprep.subr.mxu0 0.0
  %268 = vmatpush1.xpose.msra.mxu0 0.0
  %269 = vmatprep.subr.mxu0 0.0
  %270 = vmatpush1.xpose.msra.mxu0 0.0
  %271 = vmatprep.subr.mxu0 0.0
  %272 = vmatpush1.xpose.msra.mxu0 0.0
  %273 = vmatprep.subr.mxu0 0.0
  %274 = vmatpush1.xpose.msra.mxu0 0.0
  %275 = vmatprep.subr.mxu0 0.0
  %276 = vmatpush1.xpose.msra.mxu0 0.0
  %277 = vmatprep.subr.mxu0 0.0
  %278 = vmatpush1.xpose.msra.mxu0 0.0
  %279 = vmatprep.subr.mxu0 0.0
  %280 = vmatpush1.xpose.msra.mxu0 0.0
  %281 = vmatprep.subr.mxu0 0.0
  %282 = vmatpush1.xpose.msra.mxu0 0.0
  %283 = vmatprep.subr.mxu0 0.0
  %284 = vmatpush1.xpose.msra.mxu0 0.0
  %285 = vmatprep.subr.mxu0 0.0
  %286 = vmatpush1.xpose.msra.mxu0 0.0
  %287 = vmatprep.subr.mxu0 0.0
  %288 = vmatpush1.xpose.msra.mxu0 0.0
  %289 = vmatprep.subr.mxu0 0.0
  %290 = vmatpush1.xpose.msra.mxu0 0.0
  %291 = vmatprep.subr.mxu0 0.0
  %292 = vmatpush1.xpose.msra.mxu0 0.0
  %293 = vmatprep.subr.mxu0 0.0
  %294 = vmatpush1.xpose.msra.mxu0 0.0
  %295 = vmatprep.mubr.f32.mxu0 0.0
  %296 = vmatmul.mubr.f32.gmra.mrb[0].mxu0 %v196
  %v297 = vpop.f32.mrb[0].mxu0
  %v298 = vadd.f32 0.0, %v297
  %v299 = vpop.f32.mrb[0].mxu0
  %300 = vmatprep.mubr.f32.mxu0 0.0
  %301 = vmatmul.mubr.f32.gmra.mrb[0].mxu0 %v199
  %v302 = vpop.f32.mrb[0].mxu0
  %v303 = vadd.f32 0.0, %v302
  %v304 = vpop.f32.mrb[0].mxu0
  %305 = vmatprep.mubr.f32.mxu0 0.0
  %306 = vmatmul.mubr.f32.gmra.mrb[0].mxu0 %v202
  %v307 = vpop.f32.mrb[0].mxu0
  %v308 = vadd.f32 0.0, %v307
  %v309 = vpop.f32.mrb[0].mxu0
  %310 = vmatprep.mubr.f32.mxu0 0.0
  %311 = vmatmul.mubr.f32.gmra.mrb[0].mxu0 %v205
  %v312 = vpop.f32.mrb[0].mxu0
  %v313 = vadd.f32 0.0, %v312
  %v314 = vpop.f32.mrb[0].mxu0
  %315 = vdwg.mxu0
  %v316 = vsub.f32 0.0, %v298
  %v317 = vsub.f32 0.0, %v303
  %v318 = vsub.f32 0.0, %v308
  %v319 = vsub.f32 0.0, %v313
  %vm320 = vcmask 523264
  %v321 = vsel %vm320, %v316, inf
  %322 = vmin.xlane.f32.xlu0 %v321
  %v323 = vpop.xlane.xlu0 %322
  %v324 = vsel %vm320, %v317, inf
  %325 = vmin.xlane.f32.xlu0 %v324
  %v326 = vpop.xlane.xlu0 %325
  %v327 = vsel %vm320, %v318, inf
  %328 = vmin.xlane.f32.xlu0 %v327
  %v329 = vpop.xlane.xlu0 %328
  %v330 = vsel %vm320, %v319, inf
  %331 = vmin.xlane.f32.xlu0 %v330
  %v332 = vpop.xlane.xlu0 %331
  %v333 = vlaneseq
  %v334 = vand.u32 %v333, 127
  %vm335 = vcmp.le.f32.partialorder %v316, %v323
  %vm336 = vcmp.le.f32.partialorder %v317, %v326
  %vm337 = vcmp.le.f32.partialorder %v318, %v329
  %vm338 = vcmp.le.f32.partialorder %v319, %v332
  %v339 = vsel %vm335, %v334, 64
  %v340 = vsel %vm336, %v334, 64
  %v341 = vsel %vm337, %v334, 64
  %v342 = vsel %vm338, %v334, 64
  %v343 = vsel %vm320, %v339, 2147483647
  %v344 = vand.u32 %v343, 65535
  %v345 = vshra.s32 %v343, 16
  %v346 = vcvt.s32.f32 %v344
  %v347 = vcvt.s32.f32 %v345
  %348 = vmin.xlane.f32.xlu0 %v347
  %v349 = vpop.xlane.xlu0 %348
  %vm350 = vcmp.eq.f32.partialorder %v347, %v349
  %v351 = vsel %vm350, %v346, inf
  %352 = vmin.xlane.f32.xlu0 %v351
  %v353 = vpop.xlane.xlu0 %352
  %v354 = vcvt.f32.s32 %v353
  %v355 = vcvt.f32.s32 %v349
  %v356 = vshll.u32 %v355, 16
  %v357 = vadd.s32 %v356, %v354
  %v358 = vsel %vm320, %v340, 2147483647
  %v359 = vand.u32 %v358, 65535
  %v360 = vshra.s32 %v358, 16
  %v361 = vcvt.s32.f32 %v359
  %v362 = vcvt.s32.f32 %v360
  %363 = vmin.xlane.f32.xlu0 %v362
  %v364 = vpop.xlane.xlu0 %363
  %vm365 = vcmp.eq.f32.partialorder %v362, %v364
  %v366 = vsel %vm365, %v361, inf
  %367 = vmin.xlane.f32.xlu0 %v366
  %v368 = vpop.xlane.xlu0 %367
  %v369 = vcvt.f32.s32 %v368
  %v370 = vcvt.f32.s32 %v364
  %v371 = vshll.u32 %v370, 16
  %v372 = vadd.s32 %v371, %v369
  %v373 = vsel %vm320, %v341, 2147483647
  %v374 = vand.u32 %v373, 65535
  %v375 = vshra.s32 %v373, 16
  %v376 = vcvt.s32.f32 %v374
  %v377 = vcvt.s32.f32 %v375
  %378 = vmin.xlane.f32.xlu0 %v377
  %v379 = vpop.xlane.xlu0 %378
  %vm380 = vcmp.eq.f32.partialorder %v377, %v379
  %v381 = vsel %vm380, %v376, inf
  %382 = vmin.xlane.f32.xlu0 %v381
  %v383 = vpop.xlane.xlu0 %382
  %v384 = vcvt.f32.s32 %v383
  %v385 = vcvt.f32.s32 %v379
  %v386 = vshll.u32 %v385, 16
  %v387 = vadd.s32 %v386, %v384
  %v388 = vsel %vm320, %v342, 2147483647
  %v389 = vand.u32 %v388, 65535
  %v390 = vshra.s32 %v388, 16
  %v391 = vcvt.s32.f32 %v389
  %v392 = vcvt.s32.f32 %v390
  %393 = vmin.xlane.f32.xlu0 %v392
  %v394 = vpop.xlane.xlu0 %393
  %vm395 = vcmp.eq.f32.partialorder %v392, %v394
  %v396 = vsel %vm395, %v391, inf
  %397 = vmin.xlane.f32.xlu0 %v396
  %v398 = vpop.xlane.xlu0 %397
  %v399 = vcvt.f32.s32 %v398
  %v400 = vcvt.f32.s32 %v394
  %v401 = vshll.u32 %v400, 16
  %v402 = vadd.s32 %v401, %v399
  %vm403 = vcmp.eq.s32.totalorder %v334, %v357
  %vm404 = vcmp.eq.s32.totalorder %v334, %v372
  %vm405 = vcmp.eq.s32.totalorder %v334, %v387
  %vm406 = vcmp.eq.s32.totalorder %v334, %v402
  %v407 = vsel %vm403, 1, 0
  %v408 = vsel %vm404, 1, 0
  %v409 = vsel %vm405, 1, 0
  %v410 = vsel %vm406, 1, 0
  %v411 = vcvt.s32.f32 %v407
  %v412 = vcvt.s32.f32 %v408
  %v413 = vcvt.s32.f32 %v409
  %v414 = vcvt.s32.f32 %v410
  %v416 = vsel %vm320, %v411, 0
  %v419 = vsel %vm320, %v412, 0
  %v422 = vsel %vm320, %v413, 0
  %v425 = vsel %vm320, %v414, 0
  %427 = vmatprep.subr.mxu0 0.0
  %428 = vmatpush1.msra.mxu0 %v18
  %429 = vmatprep.subr.mxu0 0.0
  %430 = vmatpush1.msra.mxu0 %v19
  %431 = vmatprep.subr.mxu0 0.0
  %432 = vmatpush1.msra.mxu0 %v20
  %433 = vmatprep.subr.mxu0 0.0
  %434 = vmatpush1.msra.mxu0 %v21
  %435 = vmatprep.subr.mxu0 0.0
  %436 = vmatpush1.msra.mxu0 %v22
  %437 = vmatprep.subr.mxu0 0.0
  %438 = vmatpush1.msra.mxu0 %v23
  %439 = vmatprep.subr.mxu0 0.0
  %440 = vmatpush1.msra.mxu0 %v24
  %441 = vmatprep.subr.mxu0 0.0
  %442 = vmatpush1.msra.mxu0 %v25
  %443 = vmatprep.subr.mxu0 0.0
  %444 = vmatpush1.msra.mxu0 0.0
  %445 = vmatprep.subr.mxu0 0.0
  %446 = vmatpush1.msra.mxu0 0.0
  %447 = vmatprep.subr.mxu0 0.0
  %448 = vmatpush1.msra.mxu0 0.0
  %449 = vmatprep.subr.mxu0 0.0
  %450 = vmatpush1.msra.mxu0 0.0
  %451 = vmatprep.subr.mxu0 0.0
  %452 = vmatpush1.msra.mxu0 0.0
  %453 = vmatprep.subr.mxu0 0.0
  %454 = vmatpush1.msra.mxu0 0.0
  %455 = vmatprep.subr.mxu0 0.0
  %456 = vmatpush1.msra.mxu0 0.0
  %457 = vmatprep.subr.mxu0 0.0
  %458 = vmatpush1.msra.mxu0 0.0
  %459 = vmatprep.subr.mxu0 0.0
  %460 = vmatpush1.msra.mxu0 0.0
  %461 = vmatprep.subr.mxu0 0.0
  %462 = vmatpush1.msra.mxu0 0.0
  %463 = vmatprep.subr.mxu0 0.0
  %464 = vmatpush1.msra.mxu0 0.0
  %465 = vmatprep.subr.mxu0 0.0
  %466 = vmatpush1.msra.mxu0 0.0
  %467 = vmatprep.subr.mxu0 0.0
  %468 = vmatpush1.msra.mxu0 0.0
  %469 = vmatprep.subr.mxu0 0.0
  %470 = vmatpush1.msra.mxu0 0.0
  %471 = vmatprep.subr.mxu0 0.0
  %472 = vmatpush1.msra.mxu0 0.0
  %473 = vmatprep.subr.mxu0 0.0
  %474 = vmatpush1.msra.mxu0 0.0
  %475 = vmatprep.subr.mxu0 0.0
  %476 = vmatpush1.msra.mxu0 0.0
  %477 = vmatprep.subr.mxu0 0.0
  %478 = vmatpush1.msra.mxu0 0.0
  %479 = vmatprep.subr.mxu0 0.0
  %480 = vmatpush1.msra.mxu0 0.0
  %481 = vmatprep.subr.mxu0 0.0
  %482 = vmatpush1.msra.mxu0 0.0
  %483 = vmatprep.subr.mxu0 0.0
  %484 = vmatpush1.msra.mxu0 0.0
  %485 = vmatprep.subr.mxu0 0.0
  %486 = vmatpush1.msra.mxu0 0.0
  %487 = vmatprep.subr.mxu0 0.0
  %488 = vmatpush1.msra.mxu0 0.0
  %489 = vmatprep.subr.mxu0 0.0
  %490 = vmatpush1.msra.mxu0 0.0
  %491 = vmatprep.mubr.f32.mxu0 0.0
  %492 = vmatmul.mubr.f32.gmra.mrb[0].mxu0 %v416
  %v493 = vpop.f32.mrb[0].mxu0
  %v494 = vadd.f32 0.0, %v493
  %v495 = vpop.f32.mrb[0].mxu0
  %496 = vmatprep.mubr.f32.mxu0 0.0
  %497 = vmatmul.mubr.f32.gmra.mrb[0].mxu0 %v419
  %v498 = vpop.f32.mrb[0].mxu0
  %v499 = vadd.f32 0.0, %v498
  %v500 = vpop.f32.mrb[0].mxu0
  %501 = vmatprep.mubr.f32.mxu0 0.0
  %502 = vmatmul.mubr.f32.gmra.mrb[0].mxu0 %v422
  %v503 = vpop.f32.mrb[0].mxu0
  %v504 = vadd.f32 0.0, %v503
  %v505 = vpop.f32.mrb[0].mxu0
  %506 = vmatprep.mubr.f32.mxu0 0.0
  %507 = vmatmul.mubr.f32.gmra.mrb[0].mxu0 %v425
  %v508 = vpop.f32.mrb[0].mxu0
  %v509 = vadd.f32 0.0, %v508
  %v510 = vpop.f32.mrb[0].mxu0
  %511 = vdwg.mxu0
  %v512 = vsub.f32 %v494, %v76
  %v513 = vsub.f32 %v499, %v78
  %v514 = vsub.f32 %v504, %v80
  %v515 = vsub.f32 %v509, %v82
  %v516 = vmul.f32 %v512, %v512
  %v517 = vmul.f32 %v513, %v513
  %v518 = vmul.f32 %v514, %v514
  %v519 = vmul.f32 %v515, %v515
  %v520 = vsel %vm30, %v516, 0.0
  %521 = vadd.xlane.f32.xlu0 %v520
  %v522 = vpop.xlane.xlu0 %521
  %v523 = vsel %vm30, %v517, 0.0
  %524 = vadd.xlane.f32.xlu0 %v523
  %v525 = vpop.xlane.xlu0 %524
  %v526 = vsel %vm30, %v518, 0.0
  %527 = vadd.xlane.f32.xlu0 %v526
  %v528 = vpop.xlane.xlu0 %527
  %v529 = vsel %vm30, %v519, 0.0
  %530 = vadd.xlane.f32.xlu0 %v529
  %v531 = vpop.xlane.xlu0 %530
  %532 = vst.msk [vmem:[%s2] sm:$0xff] %vm30, %v494
  %533 = vst.msk [vmem:[%s2 + $0x8] sm:$0xff] %vm30, %v499
  %534 = vst.msk [vmem:[%s2 + $0x10] sm:$0xff] %vm30, %v504
  %535 = vst.msk [vmem:[%s2 + $0x18] sm:$0xff] %vm30, %v509
  %vm536 = vcmask 7168
  %537 = vst.msk [vmem:[%s3] sm:$0xff] %vm536, %v357
  %538 = vst.msk [vmem:[%s3 + $0x8] sm:$0xff] %vm536, %v372
  %539 = vst.msk [vmem:[%s3 + $0x10] sm:$0xff] %vm536, %v387
  %540 = vst.msk [vmem:[%s3 + $0x18] sm:$0xff] %vm536, %v402
  %541 = vst.msk [vmem:[%s4] sm:$0xff] %vm536, %v522
  %542 = vst.msk [vmem:[%s4 + $0x8] sm:$0xff] %vm536, %v525
  %543 = vst.msk [vmem:[%s4 + $0x10] sm:$0xff] %vm536, %v528
  %544 = vst.msk [vmem:[%s4 + $0x18] sm:$0xff] %vm536, %v531
  // Predicated region
  $region10: #{vitvqgan_forward.53} parent=0 // pred_check
    _
  $region11: #{vitvqgan_forward.53} parent=0 // pred_check_branch
    %546 = sbr.rel (0) target = $region13
  $region12: #{vitvqgan_forward.53} parent=0 // pred_region
    _
  $region13: #{vitvqgan_forward.53} parent=0 // pred_fallthru
    _
  // Predicated region
  $region14: #{vitvqgan_forward.53} parent=0 // pred_check
    _
  $region15: #{vitvqgan_forward.53} parent=0 // pred_check_branch
    %548 = sbr.rel (0) target = $region17
  $region16: #{vitvqgan_forward.53} parent=0 // pred_region
    _
  $region17: #{vitvqgan_forward.53} parent=0 // pred_fallthru
    _
  // Predicated region
  $region18: #{vitvqgan_forward.53} parent=0 // pred_check
    _
  $region19: #{vitvqgan_forward.53} parent=0 // pred_check_branch
    %550 = sbr.rel (0) target = $region21
  $region20: #{vitvqgan_forward.53} parent=0 // pred_region
    _
  $region21: #{vitvqgan_forward.53} parent=0 // pred_fallthru
    _
  // Predicated region
  $region22: #{vitvqgan_forward.53} parent=0 // pred_check
    _
  $region23: #{vitvqgan_forward.53} parent=0 // pred_check_branch
    %552 = sbr.rel (0) target = $region25
  $region24: #{vitvqgan_forward.53} parent=0 // pred_region
    _
  $region25: #{vitvqgan_forward.53} parent=0 // pred_fallthru
    _
  // Predicated region
  $region26: #{vitvqgan_forward.53} parent=0 // pred_check
    _
  $region27: #{vitvqgan_forward.53} parent=0 // pred_check_branch
    %554 = sbr.rel (0) target = $region29
  $region28: #{vitvqgan_forward.53} parent=0 // pred_region
    _
  $region29: #{vitvqgan_forward.53} parent=0 // pred_fallthru
    _
  // Predicated region
  $region30: #{vitvqgan_forward.53} parent=0 // pred_check
    _
  $region31: #{vitvqgan_forward.53} parent=0 // pred_check_branch
    %556 = sbr.rel (0) target = $region33
  $region32: #{vitvqgan_forward.53} parent=0 // pred_region
    _
  $region33: #{vitvqgan_forward.53} parent=0 // pred_fallthru
    _

// kernel: squeeze.3
$region0: #{squeeze.3}
  %s0 = inlined_call_operand.vmem [shape: s32[32], index: 0, kind: input, shape index: {}]
  %s1 = inlined_call_operand.hbm [shape: s32[2,16], index: 1, kind: output, shape index: {}]
  $region1: #{squeeze.3} parent=0
    #allocation0 [shape = 'u8[1024]{0}', space=vmem, size = 0x400, scoped, tag = 'operand span for operand 1']
    #allocation1 [shape = 's32[1]{0}', space=sflag, size = 0x4, scoped, tag = 'scoped memory for squeeze.3']
    #allocation2 [shape = 'u8[4096]{0}', space=vmem, size = 0x1000, scoped, tag = 'scoped mem for output reshape']
    #allocation3 [shape = 'u8[4096]{0}', space=vmem, size = 0x1000, scoped, tag = 'scoped mem for input reshape']
    %2 = vsyncpa [#allocation1], 0
    %s4 = sshllo.u32 0, 1
    %v5 = vld [vmem:[%s0] sm:%s4]
    %6 = vst [vmem:[#allocation3] sm:%s4] %v5
    %v7 = vld [vmem:[#allocation3] sm:$0x1]
    %vm8 = vcmask 130048
    %9 = vst.msk [vmem:[#allocation2] sm:$0x1] %vm8, %v7
    %v10 = vld [vmem:[#allocation3] sm:$0x1]
    %11 = vrot.lane.b32.xlu0 %v10, 112
    %v12 = vpop.permute.xlu0 %11
    %vm13 = vcmask 130048
    %s14 = scalar_lea.vmem [#allocation2], 1
    %15 = vst.msk [vmem:[%s14] sm:$0x1] %vm13, %v12
    %s17 = sshllo.u32 0, 2
    %v19 = vld [vmem:[#allocation2] sm:%s17]
    %s20 = sshllo.u32 0, 2
    %21 = vst [vmem:[#allocation0] sm:%s20] %v19
    %s23 = ssub.s32 32, 32
    %24 = vsyncadd [#allocation1], %s23
    %s26 = sshll.u32 [#allocation0], 4
    %s27 = int_to_ptr.vmem [resolvable:$true] %s26
    %29 = dma.vmem_to_hbm [thread:$0]  %s27, 32, %s1, [#allocation1]
    %30 = dma.done [#allocation1], 32
    %31 = vsyncpa [#allocation1], 1

</llo_original>
